<compile_context>
chip_gen: v6e
topology: v6e:2x2x1
jax: 0.10.0
libtpu: 0.0.40
codegen_flags: <defaults>
</compile_context>

<pallas_src>
import functools

import numpy as np
import jax
import jax.numpy as jnp
from jax.experimental import pallas as pl
from jax.experimental import pallas as _pl_unused  # noqa: F401
from jax.experimental.pallas import tpu as pltpu  # noqa: F401  (not required for this grid-less kernel)

LN_EPS = 1e-5
F32 = jnp.float32
BF16 = jnp.bfloat16


# ----------------------------- in-kernel math helpers -----------------------------
def _layernorm(x, g, b):
    mu = jnp.mean(x, axis=-1, keepdims=True)
    var = jnp.mean((x - mu) ** 2, axis=-1, keepdims=True)
    return (x - mu) * jax.lax.rsqrt(var + LN_EPS) * g + b


def _gelu_exact(x):
    # matches torch.nn.GELU() (erf formulation)
    return 0.5 * x * (1.0 + jax.lax.erf(x * (1.0 / float(np.sqrt(2.0)))))


# ----------------------------- single fused forward kernel -----------------------------
def _fused_beit_kernel(B, T, D, H, L, S_pad,
                       patches_ref, maskf_ref, rowkeep_ref, base_ref, mask_tok_ref,
                       in_w_ref, in_b_ref, hmask_ref,
                       ln1_g_ref, ln1_b_ref,
                       wq_ref, bq_ref, wk_ref, bk_ref, wv_ref, bv_ref,
                       wo_ref, bo_ref,
                       ln2_g_ref, ln2_b_ref,
                       w1_ref, b1_ref, w2_ref, b2_ref,
                       mask_g_ref, mask_beta_ref, mask_w_ref, mask_b_ref,
                       rot_g_ref, rot_beta_ref, rot_w_ref, rot_b_ref,
                       mask_out_ref, rot_out_ref):
    S = T + 1

    # additive key-padding mask for the padded columns (computed once, hoisted)
    col = jax.lax.broadcasted_iota(jnp.int32, (1, S_pad), 1)
    attn_bias = jnp.where(col < S, 0.0, -1e9).astype(F32)            # (1, S_pad)

    # constant per-head 0/1 lane masks (exact in bf16)
    hmasks = [hmask_ref[h] for h in range(H)]                        # each (1, D)

    # --- BEiT token masking + patch->embedding linear on all B*S_pad rows ---
    patches = jnp.where(maskf_ref[...] > 0.5, mask_tok_ref[...], patches_ref[...])
    tok = jnp.dot(patches.astype(BF16), in_w_ref[...],
                  preferred_element_type=F32) + in_b_ref[...]        # (B*S_pad, D)
    # rot / padding rows are zeroed out; rot token + pos-embedding come in via base_ref
    x = rowkeep_ref[...] * tok + base_ref[...]                       # (B*S_pad, D) f32

    # --- transformer blocks (statically unrolled, everything stays in VMEM) ---
    for l in range(L):
        # x = x + MHA(LN1(x))
        h1 = _layernorm(x, ln1_g_ref[l], ln1_b_ref[l])
        h1b = h1.astype(BF16)
        # full-width projections; 1/sqrt(dh) is pre-folded into wq/bq
        q = jnp.dot(h1b, wq_ref[l], preferred_element_type=F32) + bq_ref[l]
        k = jnp.dot(h1b, wk_ref[l], preferred_element_type=F32) + bk_ref[l]
        v = jnp.dot(h1b, wv_ref[l], preferred_element_type=F32) + bv_ref[l]
        qb = q.astype(BF16)
        kb = k.astype(BF16)
        vb = v.astype(BF16)

        att_rows = []
        for b in range(B):                       # sublane-aligned 24-row slices
            r0 = b * S_pad
            qbb = qb[r0:r0 + S_pad, :]
            kbb = kb[r0:r0 + S_pad, :]
            vbb = vb[r0:r0 + S_pad, :]

            def head_attn(hh):
                kh = kbb * hmasks[hh]            # masked contraction dim == per-head K
                vh = vbb * hmasks[hh]            # output lands in head-hh columns
                s = jax.lax.dot_general(qbb, kh, (((1,), (1,)), ((), ())),
                                        preferred_element_type=F32)  # (S_pad, S_pad)
                s = s + attn_bias
                s = s - jnp.max(s, axis=-1, keepdims=True)
                p = jnp.exp(s)
                p = p * pl.reciprocal(jnp.sum(p, axis=-1, keepdims=True), approx=True)
                return jnp.dot(p.astype(BF16), vh, preferred_element_type=F32)

            acc = head_attn(0)
            for hh in range(1, H):
                acc = acc + head_attn(hh)        # sum over heads == concat over lanes
            att_rows.append(acc)

        att = jnp.concatenate(att_rows, axis=0)  # (B*S_pad, D), aligned concat
        x = x + jnp.dot(att.astype(BF16), wo_ref[l],
                        preferred_element_type=F32) + bo_ref[l]

        # x = x + MLP(LN2(x))
        h2 = _layernorm(x, ln2_g_ref[l], ln2_b_ref[l])
        m = jnp.dot(h2.astype(BF16), w1_ref[l], preferred_element_type=F32) + b1_ref[l]
        m = _gelu_exact(m)
        m = jnp.dot(m.astype(BF16), w2_ref[l], preferred_element_type=F32) + b2_ref[l]
        x = x + m

    # --- heads on ALL rows (no misaligned in-kernel gathers); row selection is
    #     done outside with static indices ---
    hm = _layernorm(x, mask_g_ref[...], mask_beta_ref[...])
    mask_out_ref[...] = jnp.dot(hm.astype(BF16), mask_w_ref[...],
                                preferred_element_type=F32) + mask_b_ref[...]

    hr = _layernorm(x, rot_g_ref[...], rot_beta_ref[...])
    rot_out_ref[...] = jnp.dot(hr.astype(BF16), rot_w_ref[...],
                               preferred_element_type=F32) + rot_b_ref[...]


# ----------------------------- wrapper / glue -----------------------------
def img_to_patch(x, p):
    B, C, H, W = x.shape
    x = x.reshape(B, C, H // p, p, W // p, p)
    x = x.transpose(0, 2, 4, 1, 3, 5)              # (B, H', W', C, p, p)
    return x.reshape(B, (H // p) * (W // p), C * p * p)


def preprocess_params(params, B, T, num_heads, num_layers, s_pad):
    """One-time weight re-packing (kept OUT of the per-call jit)."""
    D = params["in_w"].shape[1]
    H, L = num_heads, num_layers
    dh = D // H
    S = T + 1
    scale = 1.0 / float(np.sqrt(dh))

    blocks = params["blocks"]

    def stack(key):
        return jnp.stack([blk[key] for blk in blocks], axis=0)

    wqkv = stack("wqkv")                           # (L, D, 3D)
    bqkv = stack("bqkv")                           # (L, 3D)

    prep = dict(
        in_w=params["in_w"].astype(BF16),
        in_b=params["in_b"].reshape(1, D),
        mask_tok=params["mask_token"].reshape(1, -1),
        ln1_g=stack("ln1_g").reshape(L, 1, D),
        ln1_b=stack("ln1_b").reshape(L, 1, D),
        ln2_g=stack("ln2_g").reshape(L, 1, D),
        ln2_b=stack("ln2_b").reshape(L, 1, D),
        # fold 1/sqrt(dh) into the Q projection (weight AND bias)
        wq=(wqkv[:, :, 0:D] * scale).astype(BF16),
        bq=(bqkv[:, 0:D] * scale).reshape(L, 1, D),
        wk=wqkv[:, :, D:2 * D].astype(BF16),
        bk=bqkv[:, D:2 * D].reshape(L, 1, D),
        wv=wqkv[:, :, 2 * D:3 * D].astype(BF16),
        bv=bqkv[:, 2 * D:3 * D].reshape(L, 1, D),
        wo=stack("wo").astype(BF16),
        bo=stack("bo").reshape(L, 1, D),
        w1=stack("w1").astype(BF16),
        b1=stack("b1").reshape(L, 1, -1),
        w2=stack("w2").astype(BF16),
        b2=stack("b2").reshape(L, 1, D),
        mask_ln_g=params["mask_ln_g"].reshape(1, D),
        mask_ln_b=params["mask_ln_b"].reshape(1, D),
        mask_w=params["mask_w"].astype(BF16),
        mask_b=params["mask_b"].reshape(1, -1),
        rot_ln_g=params["rot_ln_g"].reshape(1, D),
        rot_ln_b=params["rot_ln_b"].reshape(1, D),
        rot_w=params["rot_w"].astype(BF16),
        rot_b=params["rot_b"].reshape(1, -1),
    )

    # constant 0/1 per-head lane masks (exact in bf16)
    hm = np.zeros((H, 1, D), np.float32)
    for h in range(H):
        hm[h, 0, h * dh:(h + 1) * dh] = 1.0
    prep["hmask"] = jnp.asarray(hm, BF16)

    # per-row additive term: rot rows = rot_token + pos[0]; patch rows = pos[1+p];
    # padding rows = 0.  Patch-row gate zeroes the input-linear output elsewhere.
    pos = params["pos_embedding"].reshape(-1, D)[:S]
    rot = params["rot_token"].reshape(1, D)
    per_batch = jnp.zeros((s_pad, D), F32)
    per_batch = per_batch.at[0, :].set(rot[0] + pos[0])
    per_batch = per_batch.at[1:S, :].set(pos[1:S])
    prep["base_add"] = jnp.tile(per_batch, (B, 1))                 # (B*s_pad, D)

    keep = jnp.zeros((s_pad, 1), F32).at[1:S, :].set(1.0)
    prep["row_keep"] = jnp.tile(keep, (B, 1))                      # (B*s_pad, 1)

    return jax.tree_util.tree_map(jax.device_put, prep)


@functools.partial(jax.jit, static_argnames=("patch_size",))
def model_forward(prep, x_img, mask_bool, mask_idx_b, mask_idx_p, *, patch_size):
    patches = img_to_patch(x_img, patch_size)      # (B, T, PD)
    B, T, PD = patches.shape
    D = prep["in_w"].shape[1]
    L = prep["wq"].shape[0]
    H = prep["hmask"].shape[0]
    S = T + 1
    S_pad = prep["base_add"].shape[0] // B
    NROT = prep["rot_w"].shape[1]

    # pad per-call data into the aligned (B*S_pad)-row layout (rot row + pad rows = 0)
    patches_pad = (jnp.zeros((B, S_pad, PD), F32)
                   .at[:, 1:S, :].set(patches)).reshape(B * S_pad, PD)
    maskf_pad = (jnp.zeros((B, S_pad, 1), F32)
                 .at[:, 1:S, 0].set(mask_bool.astype(F32))).reshape(B * S_pad, 1)

    kernel = functools.partial(_fused_beit_kernel, B, T, D, H, L, S_pad)
    mask_all, rot_all = pl.pallas_call(
        kernel,
        out_shape=(jax.ShapeDtypeStruct((B * S_pad, PD), F32),
                   jax.ShapeDtypeStruct((B * S_pad, NROT), F32)),
    )(
        patches_pad, maskf_pad,
        prep["row_keep"], prep["base_add"], prep["mask_tok"],
        prep["in_w"], prep["in_b"], prep["hmask"],
        prep["ln1_g"], prep["ln1_b"],
        prep["wq"], prep["bq"], prep["wk"], prep["bk"], prep["wv"], prep["bv"],
        prep["wo"], prep["bo"],
        prep["ln2_g"], prep["ln2_b"],
        prep["w1"], prep["b1"], prep["w2"], prep["b2"],
        prep["mask_ln_g"], prep["mask_ln_b"], prep["mask_w"], prep["mask_b"],
        prep["rot_ln_g"], prep["rot_ln_b"], prep["rot_w"], prep["rot_b"],
    )

    # TODO(synk): torch's boolean-mask indexing has a data-dependent output shape;
    # the mask head is computed for all rows in-kernel and this static-shape gather
    # (host-computed indices) selects the masked-patch rows outside Pallas.
    flat_idx = mask_idx_b * S_pad + 1 + mask_idx_p
    x_mask = mask_all[flat_idx]                    # (Nm, PD)
    x_rot = rot_all[jnp.arange(B) * S_pad]         # (B, NROT)
    return x_mask, (mask_idx_b, mask_idx_p), x_rot


# ----------------------------- parameter init -----------------------------
def init_params(key, embed_dim, hidden_dim, num_channels, num_heads, num_layers,
                patch_size, num_patches, num_rot):
    pd = num_channels * patch_size ** 2
    keys = iter(jax.random.split(key, 8 + 4 * num_layers))

    def nrm(shape, scale=0.02):
        return (scale * jax.random.normal(next(keys), shape)).astype(F32)

    params = dict(
        in_w=nrm((pd, embed_dim)),
        in_b=jnp.zeros((embed_dim,), F32),
        mask_token=jnp.zeros((pd,), F32),                          # torch.zeros
        pos_embedding=nrm((1, 1 + num_patches, embed_dim), 1.0),   # randn
        rot_token=nrm((1, 1, embed_dim), 1.0),                     # randn
        mask_ln_g=jnp.ones((embed_dim,), F32),
        mask_ln_b=jnp.zeros((embed_dim,), F32),
        mask_w=nrm((embed_dim, pd)),
        mask_b=jnp.zeros((pd,), F32),
        rot_ln_g=jnp.ones((embed_dim,), F32),
        rot_ln_b=jnp.zeros((embed_dim,), F32),
        rot_w=nrm((embed_dim, num_rot)),
        rot_b=jnp.zeros((num_rot,), F32),
        blocks=[],
    )
    for _ in range(num_layers):
        params["blocks"].append(dict(
            ln1_g=jnp.ones((embed_dim,), F32),
            ln1_b=jnp.zeros((embed_dim,), F32),
            wqkv=nrm((embed_dim, 3 * embed_dim)),
            bqkv=jnp.zeros((3 * embed_dim,), F32),
            wo=nrm((embed_dim, embed_dim)),
            bo=jnp.zeros((embed_dim,), F32),
            ln2_g=jnp.ones((embed_dim,), F32),
            ln2_b=jnp.zeros((embed_dim,), F32),
            w1=nrm((embed_dim, hidden_dim)),
            b1=jnp.zeros((hidden_dim,), F32),
            w2=nrm((hidden_dim, embed_dim)),
            b2=jnp.zeros((embed_dim,), F32),
        ))
    return params


if __name__ == "__main__":
    embed_dim, hidden_dim = 32, 64
    num_channels, num_heads, num_layers = 3, 4, 2
    patch_size, num_rot = 4, 4
    Himg = Wimg = 16
    B = 2
    T = (Himg // patch_size) * (Wimg // patch_size)   # 16 patches
    num_patches = T
    S_pad = ((T + 1 + 7) // 8) * 8                    # 17 -> 24 (sublane aligned)

    key = jax.random.PRNGKey(0)
    k_img, k_params, k_mask = jax.random.split(key, 3)
    x_img = jax.random.normal(k_img, (B, num_channels, Himg, Wimg), F32)

    params = init_params(k_params, embed_dim, hidden_dim, num_channels, num_heads,
                         num_layers, patch_size, num_patches, num_rot)
    # one-time weight re-packing (outside the per-call jit)
    prep = preprocess_params(params, B, T, num_heads, num_layers, S_pad)

    # torch.where(torch.rand(B,T) < 0.4) -> host-side static indices so the
    # data-dependent-shape gather becomes a static-shape gather in JAX.
    mask_np = np.asarray(jax.random.uniform(k_mask, (B, T)) < 0.4)
    if not mask_np.any():
        mask_np[0, 0] = True  # degenerate-case guard
    mask_idx_b, mask_idx_p = np.where(mask_np)
    mask_bool = jnp.asarray(mask_np)

    x_mask, (mb, mp), x_rot = model_forward(
        prep, x_img, mask_bool,
        jnp.asarray(mask_idx_b, jnp.int32), jnp.asarray(mask_idx_p, jnp.int32),
        patch_size=patch_size)

    jax.block_until_ready((x_mask, x_rot))
    assert x_mask.shape == (int(mask_idx_b.shape[0]), num_channels * patch_size ** 2)
    assert x_rot.shape == (B, num_rot)
    print("KERNEL_OK")
</pallas_src>

<mosaic_0001>
module attributes {stable_mosaic.version = 11 : i64} {
  func.func @_fused_beit_kernel(%arg0: memref<48x48xf32, #tpu.memory_space<vmem>>, %arg1: memref<48x1xf32, #tpu.memory_space<vmem>>, %arg2: memref<48x1xf32, #tpu.memory_space<vmem>>, %arg3: memref<48x32xf32, #tpu.memory_space<vmem>>, %arg4: memref<1x48xf32, #tpu.memory_space<vmem>>, %arg5: memref<48x32xbf16, #tpu.memory_space<vmem>>, %arg6: memref<1x32xf32, #tpu.memory_space<vmem>>, %arg7: memref<4x1x32xbf16, #tpu.memory_space<vmem>>, %arg8: memref<2x1x32xf32, #tpu.memory_space<vmem>>, %arg9: memref<2x1x32xf32, #tpu.memory_space<vmem>>, %arg10: memref<2x32x32xbf16, #tpu.memory_space<vmem>>, %arg11: memref<2x1x32xf32, #tpu.memory_space<vmem>>, %arg12: memref<2x32x32xbf16, #tpu.memory_space<vmem>>, %arg13: memref<2x1x32xf32, #tpu.memory_space<vmem>>, %arg14: memref<2x32x32xbf16, #tpu.memory_space<vmem>>, %arg15: memref<2x1x32xf32, #tpu.memory_space<vmem>>, %arg16: memref<2x32x32xbf16, #tpu.memory_space<vmem>>, %arg17: memref<2x1x32xf32, #tpu.memory_space<vmem>>, %arg18: memref<2x1x32xf32, #tpu.memory_space<vmem>>, %arg19: memref<2x1x32xf32, #tpu.memory_space<vmem>>, %arg20: memref<2x32x64xbf16, #tpu.memory_space<vmem>>, %arg21: memref<2x1x64xf32, #tpu.memory_space<vmem>>, %arg22: memref<2x64x32xbf16, #tpu.memory_space<vmem>>, %arg23: memref<2x1x32xf32, #tpu.memory_space<vmem>>, %arg24: memref<1x32xf32, #tpu.memory_space<vmem>>, %arg25: memref<1x32xf32, #tpu.memory_space<vmem>>, %arg26: memref<32x48xbf16, #tpu.memory_space<vmem>>, %arg27: memref<1x48xf32, #tpu.memory_space<vmem>>, %arg28: memref<1x32xf32, #tpu.memory_space<vmem>>, %arg29: memref<1x32xf32, #tpu.memory_space<vmem>>, %arg30: memref<32x4xbf16, #tpu.memory_space<vmem>>, %arg31: memref<1x4xf32, #tpu.memory_space<vmem>>, %arg32: memref<48x48xf32, #tpu.memory_space<vmem>>, %arg33: memref<48x4xf32, #tpu.memory_space<vmem>>) attributes {dimension_semantics = [], scalar_prefetch = 0 : i64, scratch_operands = 0 : i64, tpu.core_type = #tpu.core_type<tc>} {
    %0 = tpu.iota {dimensions = array<i32: 1>} : vector<1x24xi32>
    %c17_i32 = arith.constant 17 : i32
    %1 = vector.broadcast %c17_i32 : i32 to vector<1x24xi32>
    %2 = arith.cmpi slt, %0, %1 : vector<1x24xi32>
    %cst = arith.constant 0.000000e+00 : f32
    %cst_0 = arith.constant -1.000000e+09 : f32
    %3 = vector.broadcast %cst : f32 to vector<1x24xf32>
    %4 = vector.broadcast %cst_0 : f32 to vector<1x24xf32>
    %5 = arith.select %2, %3, %4 : vector<1x24xi1>, vector<1x24xf32>
    %c0 = arith.constant 0 : index
    %c0_1 = arith.constant 0 : index
    %c0_2 = arith.constant 0 : index
    %6 = vector.load %arg7[%c0, %c0_1, %c0_2] : memref<4x1x32xbf16, #tpu.memory_space<vmem>>, vector<1x1x32xbf16>
    %7 = vector.shape_cast %6 : vector<1x1x32xbf16> to vector<1x32xbf16>
    %c1 = arith.constant 1 : index
    %c0_3 = arith.constant 0 : index
    %c0_4 = arith.constant 0 : index
    %8 = vector.load %arg7[%c1, %c0_3, %c0_4] : memref<4x1x32xbf16, #tpu.memory_space<vmem>>, vector<1x1x32xbf16>
    %9 = vector.shape_cast %8 : vector<1x1x32xbf16> to vector<1x32xbf16>
    %c2 = arith.constant 2 : index
    %c0_5 = arith.constant 0 : index
    %c0_6 = arith.constant 0 : index
    %10 = vector.load %arg7[%c2, %c0_5, %c0_6] : memref<4x1x32xbf16, #tpu.memory_space<vmem>>, vector<1x1x32xbf16>
    %11 = vector.shape_cast %10 : vector<1x1x32xbf16> to vector<1x32xbf16>
    %c3 = arith.constant 3 : index
    %c0_7 = arith.constant 0 : index
    %c0_8 = arith.constant 0 : index
    %12 = vector.load %arg7[%c3, %c0_7, %c0_8] : memref<4x1x32xbf16, #tpu.memory_space<vmem>>, vector<1x1x32xbf16>
    %13 = vector.shape_cast %12 : vector<1x1x32xbf16> to vector<1x32xbf16>
    %c0_9 = arith.constant 0 : index
    %c0_10 = arith.constant 0 : index
    %14 = vector.load %arg1[%c0_9, %c0_10] : memref<48x1xf32, #tpu.memory_space<vmem>>, vector<48x1xf32>
    %cst_11 = arith.constant 5.000000e-01 : f32
    %15 = vector.broadcast %cst_11 : f32 to vector<48x1xf32>
    %16 = arith.cmpf ogt, %14, %15 : vector<48x1xf32>
    %c0_12 = arith.constant 0 : index
    %c0_13 = arith.constant 0 : index
    %17 = vector.load %arg4[%c0_12, %c0_13] : memref<1x48xf32, #tpu.memory_space<vmem>>, vector<1x48xf32>
    %c0_14 = arith.constant 0 : index
    %c0_15 = arith.constant 0 : index
    %18 = vector.load %arg0[%c0_14, %c0_15] : memref<48x48xf32, #tpu.memory_space<vmem>>, vector<48x48xf32>
    %19 = vector.shape_cast %16 : vector<48x1xi1> to vector<48x1xi1>
    %20 = vector.broadcast %19 : vector<48x1xi1> to vector<48x48xi1>
    %21 = vector.shape_cast %17 : vector<1x48xf32> to vector<1x48xf32>
    %22 = vector.broadcast %21 : vector<1x48xf32> to vector<48x48xf32>
    %23 = arith.select %20, %22, %18 : vector<48x48xi1>, vector<48x48xf32>
    %24 = arith.truncf %23 : vector<48x48xf32> to vector<48x48xbf16>
    %c0_16 = arith.constant 0 : index
    %c0_17 = arith.constant 0 : index
    %25 = vector.load %arg5[%c0_16, %c0_17] : memref<48x32xbf16, #tpu.memory_space<vmem>>, vector<48x32xbf16>
    %cst_18 = arith.constant dense<0.000000e+00> : vector<48x32xf32>
    %26 = tpu.matmul %24, %25, %cst_18 {dimension_numbers = #tpu.dot_dimension_numbers<[1], [0], [0], [1], [0, 0, 1, 1], [], []>} : vector<48x48xbf16>, vector<48x32xbf16>, vector<48x32xf32> -> vector<48x32xf32>
    %c0_19 = arith.constant 0 : index
    %c0_20 = arith.constant 0 : index
    %27 = vector.load %arg6[%c0_19, %c0_20] : memref<1x32xf32, #tpu.memory_space<vmem>>, vector<1x32xf32>
    %28 = vector.broadcast %27 : vector<1x32xf32> to vector<48x32xf32>
    %29 = arith.addf %26, %28 : vector<48x32xf32>
    %c0_21 = arith.constant 0 : index
    %c0_22 = arith.constant 0 : index
    %30 = vector.load %arg2[%c0_21, %c0_22] : memref<48x1xf32, #tpu.memory_space<vmem>>, vector<48x1xf32>
    %31 = vector.broadcast %30 : vector<48x1xf32> to vector<48x32xf32>
    %32 = arith.mulf %31, %29 : vector<48x32xf32>
    %c0_23 = arith.constant 0 : index
    %c0_24 = arith.constant 0 : index
    %33 = vector.load %arg3[%c0_23, %c0_24] : memref<48x32xf32, #tpu.memory_space<vmem>>, vector<48x32xf32>
    %34 = arith.addf %32, %33 : vector<48x32xf32>
    %c0_25 = arith.constant 0 : index
    %c0_26 = arith.constant 0 : index
    %c0_27 = arith.constant 0 : index
    %35 = vector.load %arg8[%c0_25, %c0_26, %c0_27] : memref<2x1x32xf32, #tpu.memory_space<vmem>>, vector<1x1x32xf32>
    %36 = vector.shape_cast %35 : vector<1x1x32xf32> to vector<1x32xf32>
    %c0_28 = arith.constant 0 : index
    %c0_29 = arith.constant 0 : index
    %c0_30 = arith.constant 0 : index
    %37 = vector.load %arg9[%c0_28, %c0_29, %c0_30] : memref<2x1x32xf32, #tpu.memory_space<vmem>>, vector<1x1x32xf32>
    %38 = vector.shape_cast %37 : vector<1x1x32xf32> to vector<1x32xf32>
    %cst_31 = arith.constant dense<0.000000e+00> : vector<48xf32>
    %39 = vector.multi_reduction <add>, %34, %cst_31 [1] : vector<48x32xf32> to vector<48xf32>
    %40 = vector.shape_cast %39 : vector<48xf32> to vector<48x1xf32>
    %cst_32 = arith.constant 3.200000e+01 : f32
    %41 = vector.broadcast %cst_32 : f32 to vector<48x1xf32>
    %42 = arith.divf %40, %41 : vector<48x1xf32>
    %43 = vector.broadcast %42 : vector<48x1xf32> to vector<48x32xf32>
    %44 = arith.subf %34, %43 : vector<48x32xf32>
    %45 = arith.mulf %44, %44 : vector<48x32xf32>
    %cst_33 = arith.constant dense<0.000000e+00> : vector<48xf32>
    %46 = vector.multi_reduction <add>, %45, %cst_33 [1] : vector<48x32xf32> to vector<48xf32>
    %47 = vector.shape_cast %46 : vector<48xf32> to vector<48x1xf32>
    %cst_34 = arith.constant 3.200000e+01 : f32
    %48 = vector.broadcast %cst_34 : f32 to vector<48x1xf32>
    %49 = arith.divf %47, %48 : vector<48x1xf32>
    %50 = vector.broadcast %42 : vector<48x1xf32> to vector<48x32xf32>
    %51 = arith.subf %34, %50 : vector<48x32xf32>
    %cst_35 = arith.constant 9.99999974E-6 : f32
    %52 = vector.broadcast %cst_35 : f32 to vector<48x1xf32>
    %53 = arith.addf %49, %52 : vector<48x1xf32>
    %54 = math.rsqrt %53 : vector<48x1xf32>
    %55 = vector.broadcast %54 : vector<48x1xf32> to vector<48x32xf32>
    %56 = arith.mulf %51, %55 : vector<48x32xf32>
    %57 = vector.broadcast %36 : vector<1x32xf32> to vector<48x32xf32>
    %58 = arith.mulf %56, %57 : vector<48x32xf32>
    %59 = vector.broadcast %38 : vector<1x32xf32> to vector<48x32xf32>
    %60 = arith.addf %58, %59 : vector<48x32xf32>
    %61 = arith.truncf %60 : vector<48x32xf32> to vector<48x32xbf16>
    %c0_36 = arith.constant 0 : index
    %c0_37 = arith.constant 0 : index
    %c0_38 = arith.constant 0 : index
    %62 = vector.load %arg10[%c0_36, %c0_37, %c0_38] : memref<2x32x32xbf16, #tpu.memory_space<vmem>>, vector<1x32x32xbf16>
    %63 = vector.shape_cast %62 : vector<1x32x32xbf16> to vector<32x32xbf16>
    %cst_39 = arith.constant dense<0.000000e+00> : vector<48x32xf32>
    %64 = tpu.matmul %61, %63, %cst_39 {dimension_numbers = #tpu.dot_dimension_numbers<[1], [0], [0], [1], [0, 0, 1, 1], [], []>} : vector<48x32xbf16>, vector<32x32xbf16>, vector<48x32xf32> -> vector<48x32xf32>
    %c0_40 = arith.constant 0 : index
    %c0_41 = arith.constant 0 : index
    %c0_42 = arith.constant 0 : index
    %65 = vector.load %arg11[%c0_40, %c0_41, %c0_42] : memref<2x1x32xf32, #tpu.memory_space<vmem>>, vector<1x1x32xf32>
    %66 = vector.shape_cast %65 : vector<1x1x32xf32> to vector<1x32xf32>
    %67 = vector.broadcast %66 : vector<1x32xf32> to vector<48x32xf32>
    %68 = arith.addf %64, %67 : vector<48x32xf32>
    %c0_43 = arith.constant 0 : index
    %c0_44 = arith.constant 0 : index
    %c0_45 = arith.constant 0 : index
    %69 = vector.load %arg12[%c0_43, %c0_44, %c0_45] : memref<2x32x32xbf16, #tpu.memory_space<vmem>>, vector<1x32x32xbf16>
    %70 = vector.shape_cast %69 : vector<1x32x32xbf16> to vector<32x32xbf16>
    %cst_46 = arith.constant dense<0.000000e+00> : vector<48x32xf32>
    %71 = tpu.matmul %61, %70, %cst_46 {dimension_numbers = #tpu.dot_dimension_numbers<[1], [0], [0], [1], [0, 0, 1, 1], [], []>} : vector<48x32xbf16>, vector<32x32xbf16>, vector<48x32xf32> -> vector<48x32xf32>
    %c0_47 = arith.constant 0 : index
    %c0_48 = arith.constant 0 : index
    %c0_49 = arith.constant 0 : index
    %72 = vector.load %arg13[%c0_47, %c0_48, %c0_49] : memref<2x1x32xf32, #tpu.memory_space<vmem>>, vector<1x1x32xf32>
    %73 = vector.shape_cast %72 : vector<1x1x32xf32> to vector<1x32xf32>
    %74 = vector.broadcast %73 : vector<1x32xf32> to vector<48x32xf32>
    %75 = arith.addf %71, %74 : vector<48x32xf32>
    %c0_50 = arith.constant 0 : index
    %c0_51 = arith.constant 0 : index
    %c0_52 = arith.constant 0 : index
    %76 = vector.load %arg14[%c0_50, %c0_51, %c0_52] : memref<2x32x32xbf16, #tpu.memory_space<vmem>>, vector<1x32x32xbf16>
    %77 = vector.shape_cast %76 : vector<1x32x32xbf16> to vector<32x32xbf16>
    %cst_53 = arith.constant dense<0.000000e+00> : vector<48x32xf32>
    %78 = tpu.matmul %61, %77, %cst_53 {dimension_numbers = #tpu.dot_dimension_numbers<[1], [0], [0], [1], [0, 0, 1, 1], [], []>} : vector<48x32xbf16>, vector<32x32xbf16>, vector<48x32xf32> -> vector<48x32xf32>
    %c0_54 = arith.constant 0 : index
    %c0_55 = arith.constant 0 : index
    %c0_56 = arith.constant 0 : index
    %79 = vector.load %arg15[%c0_54, %c0_55, %c0_56] : memref<2x1x32xf32, #tpu.memory_space<vmem>>, vector<1x1x32xf32>
    %80 = vector.shape_cast %79 : vector<1x1x32xf32> to vector<1x32xf32>
    %81 = vector.broadcast %80 : vector<1x32xf32> to vector<48x32xf32>
    %82 = arith.addf %78, %81 : vector<48x32xf32>
    %83 = arith.truncf %68 : vector<48x32xf32> to vector<48x32xbf16>
    %84 = arith.truncf %75 : vector<48x32xf32> to vector<48x32xbf16>
    %85 = arith.truncf %82 : vector<48x32xf32> to vector<48x32xbf16>
    %86 = vector.extract_strided_slice %83 {offsets = [0, 0], sizes = [24, 32], strides = [1, 1]} : vector<48x32xbf16> to vector<24x32xbf16>
    %87 = vector.extract_strided_slice %84 {offsets = [0, 0], sizes = [24, 32], strides = [1, 1]} : vector<48x32xbf16> to vector<24x32xbf16>
    %88 = vector.extract_strided_slice %85 {offsets = [0, 0], sizes = [24, 32], strides = [1, 1]} : vector<48x32xbf16> to vector<24x32xbf16>
    %89 = vector.broadcast %7 : vector<1x32xbf16> to vector<24x32xbf16>
    %90 = arith.mulf %87, %89 : vector<24x32xbf16>
    %91 = vector.broadcast %7 : vector<1x32xbf16> to vector<24x32xbf16>
    %92 = arith.mulf %88, %91 : vector<24x32xbf16>
    %cst_57 = arith.constant dense<0.000000e+00> : vector<24x24xf32>
    %93 = tpu.matmul %86, %90, %cst_57 {dimension_numbers = #tpu.dot_dimension_numbers<[1], [1], [0], [0], [0, 0, 1, 0], [], []>} : vector<24x32xbf16>, vector<24x32xbf16>, vector<24x24xf32> -> vector<24x24xf32>
    %94 = vector.broadcast %5 : vector<1x24xf32> to vector<24x24xf32>
    %95 = arith.addf %93, %94 : vector<24x24xf32>
    %cst_58 = arith.constant dense<0xFF800000> : vector<24xf32>
    %96 = vector.multi_reduction <maximumf>, %95, %cst_58 [1] : vector<24x24xf32> to vector<24xf32>
    %97 = vector.shape_cast %96 : vector<24xf32> to vector<24x1xf32>
    %98 = vector.broadcast %97 : vector<24x1xf32> to vector<24x24xf32>
    %99 = arith.subf %95, %98 : vector<24x24xf32>
    %100 = math.exp %99 : vector<24x24xf32>
    %cst_59 = arith.constant dense<0.000000e+00> : vector<24xf32>
    %101 = vector.multi_reduction <add>, %100, %cst_59 [1] : vector<24x24xf32> to vector<24xf32>
    %102 = vector.shape_cast %101 : vector<24xf32> to vector<24x1xf32>
    %103 = tpu.reciprocal %102 {approx = true} : vector<24x1xf32> -> vector<24x1xf32>
    %104 = vector.broadcast %103 : vector<24x1xf32> to vector<24x24xf32>
    %105 = arith.mulf %100, %104 : vector<24x24xf32>
    %106 = arith.truncf %105 : vector<24x24xf32> to vector<24x24xbf16>
    %cst_60 = arith.constant dense<0.000000e+00> : vector<24x32xf32>
    %107 = tpu.matmul %106, %92, %cst_60 {dimension_numbers = #tpu.dot_dimension_numbers<[1], [0], [0], [1], [0, 0, 1, 1], [], []>} : vector<24x24xbf16>, vector<24x32xbf16>, vector<24x32xf32> -> vector<24x32xf32>
    %108 = vector.broadcast %9 : vector<1x32xbf16> to vector<24x32xbf16>
    %109 = arith.mulf %87, %108 : vector<24x32xbf16>
    %110 = vector.broadcast %9 : vector<1x32xbf16> to vector<24x32xbf16>
    %111 = arith.mulf %88, %110 : vector<24x32xbf16>
    %cst_61 = arith.constant dense<0.000000e+00> : vector<24x24xf32>
    %112 = tpu.matmul %86, %109, %cst_61 {dimension_numbers = #tpu.dot_dimension_numbers<[1], [1], [0], [0], [0, 0, 1, 0], [], []>} : vector<24x32xbf16>, vector<24x32xbf16>, vector<24x24xf32> -> vector<24x24xf32>
    %113 = vector.broadcast %5 : vector<1x24xf32> to vector<24x24xf32>
    %114 = arith.addf %112, %113 : vector<24x24xf32>
    %cst_62 = arith.constant dense<0xFF800000> : vector<24xf32>
    %115 = vector.multi_reduction <maximumf>, %114, %cst_62 [1] : vector<24x24xf32> to vector<24xf32>
    %116 = vector.shape_cast %115 : vector<24xf32> to vector<24x1xf32>
    %117 = vector.broadcast %116 : vector<24x1xf32> to vector<24x24xf32>
    %118 = arith.subf %114, %117 : vector<24x24xf32>
    %119 = math.exp %118 : vector<24x24xf32>
    %cst_63 = arith.constant dense<0.000000e+00> : vector<24xf32>
    %120 = vector.multi_reduction <add>, %119, %cst_63 [1] : vector<24x24xf32> to vector<24xf32>
    %121 = vector.shape_cast %120 : vector<24xf32> to vector<24x1xf32>
    %122 = tpu.reciprocal %121 {approx = true} : vector<24x1xf32> -> vector<24x1xf32>
    %123 = vector.broadcast %122 : vector<24x1xf32> to vector<24x24xf32>
    %124 = arith.mulf %119, %123 : vector<24x24xf32>
    %125 = arith.truncf %124 : vector<24x24xf32> to vector<24x24xbf16>
    %cst_64 = arith.constant dense<0.000000e+00> : vector<24x32xf32>
    %126 = tpu.matmul %125, %111, %cst_64 {dimension_numbers = #tpu.dot_dimension_numbers<[1], [0], [0], [1], [0, 0, 1, 1], [], []>} : vector<24x24xbf16>, vector<24x32xbf16>, vector<24x32xf32> -> vector<24x32xf32>
    %127 = arith.addf %107, %126 : vector<24x32xf32>
    %128 = vector.broadcast %11 : vector<1x32xbf16> to vector<24x32xbf16>
    %129 = arith.mulf %87, %128 : vector<24x32xbf16>
    %130 = vector.broadcast %11 : vector<1x32xbf16> to vector<24x32xbf16>
    %131 = arith.mulf %88, %130 : vector<24x32xbf16>
    %cst_65 = arith.constant dense<0.000000e+00> : vector<24x24xf32>
    %132 = tpu.matmul %86, %129, %cst_65 {dimension_numbers = #tpu.dot_dimension_numbers<[1], [1], [0], [0], [0, 0, 1, 0], [], []>} : vector<24x32xbf16>, vector<24x32xbf16>, vector<24x24xf32> -> vector<24x24xf32>
    %133 = vector.broadcast %5 : vector<1x24xf32> to vector<24x24xf32>
    %134 = arith.addf %132, %133 : vector<24x24xf32>
    %cst_66 = arith.constant dense<0xFF800000> : vector<24xf32>
    %135 = vector.multi_reduction <maximumf>, %134, %cst_66 [1] : vector<24x24xf32> to vector<24xf32>
    %136 = vector.shape_cast %135 : vector<24xf32> to vector<24x1xf32>
    %137 = vector.broadcast %136 : vector<24x1xf32> to vector<24x24xf32>
    %138 = arith.subf %134, %137 : vector<24x24xf32>
    %139 = math.exp %138 : vector<24x24xf32>
    %cst_67 = arith.constant dense<0.000000e+00> : vector<24xf32>
    %140 = vector.multi_reduction <add>, %139, %cst_67 [1] : vector<24x24xf32> to vector<24xf32>
    %141 = vector.shape_cast %140 : vector<24xf32> to vector<24x1xf32>
    %142 = tpu.reciprocal %141 {approx = true} : vector<24x1xf32> -> vector<24x1xf32>
    %143 = vector.broadcast %142 : vector<24x1xf32> to vector<24x24xf32>
    %144 = arith.mulf %139, %143 : vector<24x24xf32>
    %145 = arith.truncf %144 : vector<24x24xf32> to vector<24x24xbf16>
    %cst_68 = arith.constant dense<0.000000e+00> : vector<24x32xf32>
    %146 = tpu.matmul %145, %131, %cst_68 {dimension_numbers = #tpu.dot_dimension_numbers<[1], [0], [0], [1], [0, 0, 1, 1], [], []>} : vector<24x24xbf16>, vector<24x32xbf16>, vector<24x32xf32> -> vector<24x32xf32>
    %147 = arith.addf %127, %146 : vector<24x32xf32>
    %148 = vector.broadcast %13 : vector<1x32xbf16> to vector<24x32xbf16>
    %149 = arith.mulf %87, %148 : vector<24x32xbf16>
    %150 = vector.broadcast %13 : vector<1x32xbf16> to vector<24x32xbf16>
    %151 = arith.mulf %88, %150 : vector<24x32xbf16>
    %cst_69 = arith.constant dense<0.000000e+00> : vector<24x24xf32>
    %152 = tpu.matmul %86, %149, %cst_69 {dimension_numbers = #tpu.dot_dimension_numbers<[1], [1], [0], [0], [0, 0, 1, 0], [], []>} : vector<24x32xbf16>, vector<24x32xbf16>, vector<24x24xf32> -> vector<24x24xf32>
    %153 = vector.broadcast %5 : vector<1x24xf32> to vector<24x24xf32>
    %154 = arith.addf %152, %153 : vector<24x24xf32>
    %cst_70 = arith.constant dense<0xFF800000> : vector<24xf32>
    %155 = vector.multi_reduction <maximumf>, %154, %cst_70 [1] : vector<24x24xf32> to vector<24xf32>
    %156 = vector.shape_cast %155 : vector<24xf32> to vector<24x1xf32>
    %157 = vector.broadcast %156 : vector<24x1xf32> to vector<24x24xf32>
    %158 = arith.subf %154, %157 : vector<24x24xf32>
    %159 = math.exp %158 : vector<24x24xf32>
    %cst_71 = arith.constant dense<0.000000e+00> : vector<24xf32>
    %160 = vector.multi_reduction <add>, %159, %cst_71 [1] : vector<24x24xf32> to vector<24xf32>
    %161 = vector.shape_cast %160 : vector<24xf32> to vector<24x1xf32>
    %162 = tpu.reciprocal %161 {approx = true} : vector<24x1xf32> -> vector<24x1xf32>
    %163 = vector.broadcast %162 : vector<24x1xf32> to vector<24x24xf32>
    %164 = arith.mulf %159, %163 : vector<24x24xf32>
    %165 = arith.truncf %164 : vector<24x24xf32> to vector<24x24xbf16>
    %cst_72 = arith.constant dense<0.000000e+00> : vector<24x32xf32>
    %166 = tpu.matmul %165, %151, %cst_72 {dimension_numbers = #tpu.dot_dimension_numbers<[1], [0], [0], [1], [0, 0, 1, 1], [], []>} : vector<24x24xbf16>, vector<24x32xbf16>, vector<24x32xf32> -> vector<24x32xf32>
    %167 = arith.addf %147, %166 : vector<24x32xf32>
    %168 = vector.extract_strided_slice %83 {offsets = [24, 0], sizes = [24, 32], strides = [1, 1]} : vector<48x32xbf16> to vector<24x32xbf16>
    %169 = vector.extract_strided_slice %84 {offsets = [24, 0], sizes = [24, 32], strides = [1, 1]} : vector<48x32xbf16> to vector<24x32xbf16>
    %170 = vector.extract_strided_slice %85 {offsets = [24, 0], sizes = [24, 32], strides = [1, 1]} : vector<48x32xbf16> to vector<24x32xbf16>
    %171 = vector.broadcast %7 : vector<1x32xbf16> to vector<24x32xbf16>
    %172 = arith.mulf %169, %171 : vector<24x32xbf16>
    %173 = vector.broadcast %7 : vector<1x32xbf16> to vector<24x32xbf16>
    %174 = arith.mulf %170, %173 : vector<24x32xbf16>
    %cst_73 = arith.constant dense<0.000000e+00> : vector<24x24xf32>
    %175 = tpu.matmul %168, %172, %cst_73 {dimension_numbers = #tpu.dot_dimension_numbers<[1], [1], [0], [0], [0, 0, 1, 0], [], []>} : vector<24x32xbf16>, vector<24x32xbf16>, vector<24x24xf32> -> vector<24x24xf32>
    %176 = vector.broadcast %5 : vector<1x24xf32> to vector<24x24xf32>
    %177 = arith.addf %175, %176 : vector<24x24xf32>
    %cst_74 = arith.constant dense<0xFF800000> : vector<24xf32>
    %178 = vector.multi_reduction <maximumf>, %177, %cst_74 [1] : vector<24x24xf32> to vector<24xf32>
    %179 = vector.shape_cast %178 : vector<24xf32> to vector<24x1xf32>
    %180 = vector.broadcast %179 : vector<24x1xf32> to vector<24x24xf32>
    %181 = arith.subf %177, %180 : vector<24x24xf32>
    %182 = math.exp %181 : vector<24x24xf32>
    %cst_75 = arith.constant dense<0.000000e+00> : vector<24xf32>
    %183 = vector.multi_reduction <add>, %182, %cst_75 [1] : vector<24x24xf32> to vector<24xf32>
    %184 = vector.shape_cast %183 : vector<24xf32> to vector<24x1xf32>
    %185 = tpu.reciprocal %184 {approx = true} : vector<24x1xf32> -> vector<24x1xf32>
    %186 = vector.broadcast %185 : vector<24x1xf32> to vector<24x24xf32>
    %187 = arith.mulf %182, %186 : vector<24x24xf32>
    %188 = arith.truncf %187 : vector<24x24xf32> to vector<24x24xbf16>
    %cst_76 = arith.constant dense<0.000000e+00> : vector<24x32xf32>
    %189 = tpu.matmul %188, %174, %cst_76 {dimension_numbers = #tpu.dot_dimension_numbers<[1], [0], [0], [1], [0, 0, 1, 1], [], []>} : vector<24x24xbf16>, vector<24x32xbf16>, vector<24x32xf32> -> vector<24x32xf32>
    %190 = vector.broadcast %9 : vector<1x32xbf16> to vector<24x32xbf16>
    %191 = arith.mulf %169, %190 : vector<24x32xbf16>
    %192 = vector.broadcast %9 : vector<1x32xbf16> to vector<24x32xbf16>
    %193 = arith.mulf %170, %192 : vector<24x32xbf16>
    %cst_77 = arith.constant dense<0.000000e+00> : vector<24x24xf32>
    %194 = tpu.matmul %168, %191, %cst_77 {dimension_numbers = #tpu.dot_dimension_numbers<[1], [1], [0], [0], [0, 0, 1, 0], [], []>} : vector<24x32xbf16>, vector<24x32xbf16>, vector<24x24xf32> -> vector<24x24xf32>
    %195 = vector.broadcast %5 : vector<1x24xf32> to vector<24x24xf32>
    %196 = arith.addf %194, %195 : vector<24x24xf32>
    %cst_78 = arith.constant dense<0xFF800000> : vector<24xf32>
    %197 = vector.multi_reduction <maximumf>, %196, %cst_78 [1] : vector<24x24xf32> to vector<24xf32>
    %198 = vector.shape_cast %197 : vector<24xf32> to vector<24x1xf32>
    %199 = vector.broadcast %198 : vector<24x1xf32> to vector<24x24xf32>
    %200 = arith.subf %196, %199 : vector<24x24xf32>
    %201 = math.exp %200 : vector<24x24xf32>
    %cst_79 = arith.constant dense<0.000000e+00> : vector<24xf32>
    %202 = vector.multi_reduction <add>, %201, %cst_79 [1] : vector<24x24xf32> to vector<24xf32>
    %203 = vector.shape_cast %202 : vector<24xf32> to vector<24x1xf32>
    %204 = tpu.reciprocal %203 {approx = true} : vector<24x1xf32> -> vector<24x1xf32>
    %205 = vector.broadcast %204 : vector<24x1xf32> to vector<24x24xf32>
    %206 = arith.mulf %201, %205 : vector<24x24xf32>
    %207 = arith.truncf %206 : vector<24x24xf32> to vector<24x24xbf16>
    %cst_80 = arith.constant dense<0.000000e+00> : vector<24x32xf32>
    %208 = tpu.matmul %207, %193, %cst_80 {dimension_numbers = #tpu.dot_dimension_numbers<[1], [0], [0], [1], [0, 0, 1, 1], [], []>} : vector<24x24xbf16>, vector<24x32xbf16>, vector<24x32xf32> -> vector<24x32xf32>
    %209 = arith.addf %189, %208 : vector<24x32xf32>
    %210 = vector.broadcast %11 : vector<1x32xbf16> to vector<24x32xbf16>
    %211 = arith.mulf %169, %210 : vector<24x32xbf16>
    %212 = vector.broadcast %11 : vector<1x32xbf16> to vector<24x32xbf16>
    %213 = arith.mulf %170, %212 : vector<24x32xbf16>
    %cst_81 = arith.constant dense<0.000000e+00> : vector<24x24xf32>
    %214 = tpu.matmul %168, %211, %cst_81 {dimension_numbers = #tpu.dot_dimension_numbers<[1], [1], [0], [0], [0, 0, 1, 0], [], []>} : vector<24x32xbf16>, vector<24x32xbf16>, vector<24x24xf32> -> vector<24x24xf32>
    %215 = vector.broadcast %5 : vector<1x24xf32> to vector<24x24xf32>
    %216 = arith.addf %214, %215 : vector<24x24xf32>
    %cst_82 = arith.constant dense<0xFF800000> : vector<24xf32>
    %217 = vector.multi_reduction <maximumf>, %216, %cst_82 [1] : vector<24x24xf32> to vector<24xf32>
    %218 = vector.shape_cast %217 : vector<24xf32> to vector<24x1xf32>
    %219 = vector.broadcast %218 : vector<24x1xf32> to vector<24x24xf32>
    %220 = arith.subf %216, %219 : vector<24x24xf32>
    %221 = math.exp %220 : vector<24x24xf32>
    %cst_83 = arith.constant dense<0.000000e+00> : vector<24xf32>
    %222 = vector.multi_reduction <add>, %221, %cst_83 [1] : vector<24x24xf32> to vector<24xf32>
    %223 = vector.shape_cast %222 : vector<24xf32> to vector<24x1xf32>
    %224 = tpu.reciprocal %223 {approx = true} : vector<24x1xf32> -> vector<24x1xf32>
    %225 = vector.broadcast %224 : vector<24x1xf32> to vector<24x24xf32>
    %226 = arith.mulf %221, %225 : vector<24x24xf32>
    %227 = arith.truncf %226 : vector<24x24xf32> to vector<24x24xbf16>
    %cst_84 = arith.constant dense<0.000000e+00> : vector<24x32xf32>
    %228 = tpu.matmul %227, %213, %cst_84 {dimension_numbers = #tpu.dot_dimension_numbers<[1], [0], [0], [1], [0, 0, 1, 1], [], []>} : vector<24x24xbf16>, vector<24x32xbf16>, vector<24x32xf32> -> vector<24x32xf32>
    %229 = arith.addf %209, %228 : vector<24x32xf32>
    %230 = vector.broadcast %13 : vector<1x32xbf16> to vector<24x32xbf16>
    %231 = arith.mulf %169, %230 : vector<24x32xbf16>
    %232 = vector.broadcast %13 : vector<1x32xbf16> to vector<24x32xbf16>
    %233 = arith.mulf %170, %232 : vector<24x32xbf16>
    %cst_85 = arith.constant dense<0.000000e+00> : vector<24x24xf32>
    %234 = tpu.matmul %168, %231, %cst_85 {dimension_numbers = #tpu.dot_dimension_numbers<[1], [1], [0], [0], [0, 0, 1, 0], [], []>} : vector<24x32xbf16>, vector<24x32xbf16>, vector<24x24xf32> -> vector<24x24xf32>
    %235 = vector.broadcast %5 : vector<1x24xf32> to vector<24x24xf32>
    %236 = arith.addf %234, %235 : vector<24x24xf32>
    %cst_86 = arith.constant dense<0xFF800000> : vector<24xf32>
    %237 = vector.multi_reduction <maximumf>, %236, %cst_86 [1] : vector<24x24xf32> to vector<24xf32>
    %238 = vector.shape_cast %237 : vector<24xf32> to vector<24x1xf32>
    %239 = vector.broadcast %238 : vector<24x1xf32> to vector<24x24xf32>
    %240 = arith.subf %236, %239 : vector<24x24xf32>
    %241 = math.exp %240 : vector<24x24xf32>
    %cst_87 = arith.constant dense<0.000000e+00> : vector<24xf32>
    %242 = vector.multi_reduction <add>, %241, %cst_87 [1] : vector<24x24xf32> to vector<24xf32>
    %243 = vector.shape_cast %242 : vector<24xf32> to vector<24x1xf32>
    %244 = tpu.reciprocal %243 {approx = true} : vector<24x1xf32> -> vector<24x1xf32>
    %245 = vector.broadcast %244 : vector<24x1xf32> to vector<24x24xf32>
    %246 = arith.mulf %241, %245 : vector<24x24xf32>
    %247 = arith.truncf %246 : vector<24x24xf32> to vector<24x24xbf16>
    %cst_88 = arith.constant dense<0.000000e+00> : vector<24x32xf32>
    %248 = tpu.matmul %247, %233, %cst_88 {dimension_numbers = #tpu.dot_dimension_numbers<[1], [0], [0], [1], [0, 0, 1, 1], [], []>} : vector<24x24xbf16>, vector<24x32xbf16>, vector<24x32xf32> -> vector<24x32xf32>
    %249 = arith.addf %229, %248 : vector<24x32xf32>
    %250 = tpu.concatenate %167, %249 in 0 : vector<24x32xf32>, vector<24x32xf32> -> vector<48x32xf32>
    %251 = arith.truncf %250 : vector<48x32xf32> to vector<48x32xbf16>
    %c0_89 = arith.constant 0 : index
    %c0_90 = arith.constant 0 : index
    %c0_91 = arith.constant 0 : index
    %252 = vector.load %arg16[%c0_89, %c0_90, %c0_91] : memref<2x32x32xbf16, #tpu.memory_space<vmem>>, vector<1x32x32xbf16>
    %253 = vector.shape_cast %252 : vector<1x32x32xbf16> to vector<32x32xbf16>
    %cst_92 = arith.constant dense<0.000000e+00> : vector<48x32xf32>
    %254 = tpu.matmul %251, %253, %cst_92 {dimension_numbers = #tpu.dot_dimension_numbers<[1], [0], [0], [1], [0, 0, 1, 1], [], []>} : vector<48x32xbf16>, vector<32x32xbf16>, vector<48x32xf32> -> vector<48x32xf32>
    %255 = arith.addf %34, %254 : vector<48x32xf32>
    %c0_93 = arith.constant 0 : index
    %c0_94 = arith.constant 0 : index
    %c0_95 = arith.constant 0 : index
    %256 = vector.load %arg17[%c0_93, %c0_94, %c0_95] : memref<2x1x32xf32, #tpu.memory_space<vmem>>, vector<1x1x32xf32>
    %257 = vector.shape_cast %256 : vector<1x1x32xf32> to vector<1x32xf32>
    %258 = vector.broadcast %257 : vector<1x32xf32> to vector<48x32xf32>
    %259 = arith.addf %255, %258 : vector<48x32xf32>
    %c0_96 = arith.constant 0 : index
    %c0_97 = arith.constant 0 : index
    %c0_98 = arith.constant 0 : index
    %260 = vector.load %arg18[%c0_96, %c0_97, %c0_98] : memref<2x1x32xf32, #tpu.memory_space<vmem>>, vector<1x1x32xf32>
    %261 = vector.shape_cast %260 : vector<1x1x32xf32> to vector<1x32xf32>
    %c0_99 = arith.constant 0 : index
    %c0_100 = arith.constant 0 : index
    %c0_101 = arith.constant 0 : index
    %262 = vector.load %arg19[%c0_99, %c0_100, %c0_101] : memref<2x1x32xf32, #tpu.memory_space<vmem>>, vector<1x1x32xf32>
    %263 = vector.shape_cast %262 : vector<1x1x32xf32> to vector<1x32xf32>
    %cst_102 = arith.constant dense<0.000000e+00> : vector<48xf32>
    %264 = vector.multi_reduction <add>, %259, %cst_102 [1] : vector<48x32xf32> to vector<48xf32>
    %265 = vector.shape_cast %264 : vector<48xf32> to vector<48x1xf32>
    %cst_103 = arith.constant 3.200000e+01 : f32
    %266 = vector.broadcast %cst_103 : f32 to vector<48x1xf32>
    %267 = arith.divf %265, %266 : vector<48x1xf32>
    %268 = vector.broadcast %267 : vector<48x1xf32> to vector<48x32xf32>
    %269 = arith.subf %259, %268 : vector<48x32xf32>
    %270 = arith.mulf %269, %269 : vector<48x32xf32>
    %cst_104 = arith.constant dense<0.000000e+00> : vector<48xf32>
    %271 = vector.multi_reduction <add>, %270, %cst_104 [1] : vector<48x32xf32> to vector<48xf32>
    %272 = vector.shape_cast %271 : vector<48xf32> to vector<48x1xf32>
    %cst_105 = arith.constant 3.200000e+01 : f32
    %273 = vector.broadcast %cst_105 : f32 to vector<48x1xf32>
    %274 = arith.divf %272, %273 : vector<48x1xf32>
    %275 = vector.broadcast %267 : vector<48x1xf32> to vector<48x32xf32>
    %276 = arith.subf %259, %275 : vector<48x32xf32>
    %cst_106 = arith.constant 9.99999974E-6 : f32
    %277 = vector.broadcast %cst_106 : f32 to vector<48x1xf32>
    %278 = arith.addf %274, %277 : vector<48x1xf32>
    %279 = math.rsqrt %278 : vector<48x1xf32>
    %280 = vector.broadcast %279 : vector<48x1xf32> to vector<48x32xf32>
    %281 = arith.mulf %276, %280 : vector<48x32xf32>
    %282 = vector.broadcast %261 : vector<1x32xf32> to vector<48x32xf32>
    %283 = arith.mulf %281, %282 : vector<48x32xf32>
    %284 = vector.broadcast %263 : vector<1x32xf32> to vector<48x32xf32>
    %285 = arith.addf %283, %284 : vector<48x32xf32>
    %286 = arith.truncf %285 : vector<48x32xf32> to vector<48x32xbf16>
    %c0_107 = arith.constant 0 : index
    %c0_108 = arith.constant 0 : index
    %c0_109 = arith.constant 0 : index
    %287 = vector.load %arg20[%c0_107, %c0_108, %c0_109] : memref<2x32x64xbf16, #tpu.memory_space<vmem>>, vector<1x32x64xbf16>
    %288 = vector.shape_cast %287 : vector<1x32x64xbf16> to vector<32x64xbf16>
    %cst_110 = arith.constant dense<0.000000e+00> : vector<48x64xf32>
    %289 = tpu.matmul %286, %288, %cst_110 {dimension_numbers = #tpu.dot_dimension_numbers<[1], [0], [0], [1], [0, 0, 1, 1], [], []>} : vector<48x32xbf16>, vector<32x64xbf16>, vector<48x64xf32> -> vector<48x64xf32>
    %c0_111 = arith.constant 0 : index
    %c0_112 = arith.constant 0 : index
    %c0_113 = arith.constant 0 : index
    %290 = vector.load %arg21[%c0_111, %c0_112, %c0_113] : memref<2x1x64xf32, #tpu.memory_space<vmem>>, vector<1x1x64xf32>
    %291 = vector.shape_cast %290 : vector<1x1x64xf32> to vector<1x64xf32>
    %292 = vector.broadcast %291 : vector<1x64xf32> to vector<48x64xf32>
    %293 = arith.addf %289, %292 : vector<48x64xf32>
    %cst_114 = arith.constant 5.000000e-01 : f32
    %294 = vector.broadcast %cst_114 : f32 to vector<48x64xf32>
    %295 = arith.mulf %294, %293 : vector<48x64xf32>
    %cst_115 = arith.constant 0.707106769 : f32
    %296 = vector.broadcast %cst_115 : f32 to vector<48x64xf32>
    %297 = arith.mulf %293, %296 : vector<48x64xf32>
    %298 = math.erf %297 : vector<48x64xf32>
    %cst_116 = arith.constant 1.000000e+00 : f32
    %299 = vector.broadcast %cst_116 : f32 to vector<48x64xf32>
    %300 = arith.addf %299, %298 : vector<48x64xf32>
    %301 = arith.mulf %295, %300 : vector<48x64xf32>
    %302 = arith.truncf %301 : vector<48x64xf32> to vector<48x64xbf16>
    %c0_117 = arith.constant 0 : index
    %c0_118 = arith.constant 0 : index
    %c0_119 = arith.constant 0 : index
    %303 = vector.load %arg22[%c0_117, %c0_118, %c0_119] : memref<2x64x32xbf16, #tpu.memory_space<vmem>>, vector<1x64x32xbf16>
    %304 = vector.shape_cast %303 : vector<1x64x32xbf16> to vector<64x32xbf16>
    %cst_120 = arith.constant dense<0.000000e+00> : vector<48x32xf32>
    %305 = tpu.matmul %302, %304, %cst_120 {dimension_numbers = #tpu.dot_dimension_numbers<[1], [0], [0], [1], [0, 0, 1, 1], [], []>} : vector<48x64xbf16>, vector<64x32xbf16>, vector<48x32xf32> -> vector<48x32xf32>
    %c0_121 = arith.constant 0 : index
    %c0_122 = arith.constant 0 : index
    %c0_123 = arith.constant 0 : index
    %306 = vector.load %arg23[%c0_121, %c0_122, %c0_123] : memref<2x1x32xf32, #tpu.memory_space<vmem>>, vector<1x1x32xf32>
    %307 = vector.shape_cast %306 : vector<1x1x32xf32> to vector<1x32xf32>
    %308 = vector.broadcast %307 : vector<1x32xf32> to vector<48x32xf32>
    %309 = arith.addf %305, %308 : vector<48x32xf32>
    %310 = arith.addf %259, %309 : vector<48x32xf32>
    %c1_124 = arith.constant 1 : index
    %c0_125 = arith.constant 0 : index
    %c0_126 = arith.constant 0 : index
    %311 = vector.load %arg8[%c1_124, %c0_125, %c0_126] : memref<2x1x32xf32, #tpu.memory_space<vmem>>, vector<1x1x32xf32>
    %312 = vector.shape_cast %311 : vector<1x1x32xf32> to vector<1x32xf32>
    %c1_127 = arith.constant 1 : index
    %c0_128 = arith.constant 0 : index
    %c0_129 = arith.constant 0 : index
    %313 = vector.load %arg9[%c1_127, %c0_128, %c0_129] : memref<2x1x32xf32, #tpu.memory_space<vmem>>, vector<1x1x32xf32>
    %314 = vector.shape_cast %313 : vector<1x1x32xf32> to vector<1x32xf32>
    %cst_130 = arith.constant dense<0.000000e+00> : vector<48xf32>
    %315 = vector.multi_reduction <add>, %310, %cst_130 [1] : vector<48x32xf32> to vector<48xf32>
    %316 = vector.shape_cast %315 : vector<48xf32> to vector<48x1xf32>
    %cst_131 = arith.constant 3.200000e+01 : f32
    %317 = vector.broadcast %cst_131 : f32 to vector<48x1xf32>
    %318 = arith.divf %316, %317 : vector<48x1xf32>
    %319 = vector.broadcast %318 : vector<48x1xf32> to vector<48x32xf32>
    %320 = arith.subf %310, %319 : vector<48x32xf32>
    %321 = arith.mulf %320, %320 : vector<48x32xf32>
    %cst_132 = arith.constant dense<0.000000e+00> : vector<48xf32>
    %322 = vector.multi_reduction <add>, %321, %cst_132 [1] : vector<48x32xf32> to vector<48xf32>
    %323 = vector.shape_cast %322 : vector<48xf32> to vector<48x1xf32>
    %cst_133 = arith.constant 3.200000e+01 : f32
    %324 = vector.broadcast %cst_133 : f32 to vector<48x1xf32>
    %325 = arith.divf %323, %324 : vector<48x1xf32>
    %326 = vector.broadcast %318 : vector<48x1xf32> to vector<48x32xf32>
    %327 = arith.subf %310, %326 : vector<48x32xf32>
    %cst_134 = arith.constant 9.99999974E-6 : f32
    %328 = vector.broadcast %cst_134 : f32 to vector<48x1xf32>
    %329 = arith.addf %325, %328 : vector<48x1xf32>
    %330 = math.rsqrt %329 : vector<48x1xf32>
    %331 = vector.broadcast %330 : vector<48x1xf32> to vector<48x32xf32>
    %332 = arith.mulf %327, %331 : vector<48x32xf32>
    %333 = vector.broadcast %312 : vector<1x32xf32> to vector<48x32xf32>
    %334 = arith.mulf %332, %333 : vector<48x32xf32>
    %335 = vector.broadcast %314 : vector<1x32xf32> to vector<48x32xf32>
    %336 = arith.addf %334, %335 : vector<48x32xf32>
    %337 = arith.truncf %336 : vector<48x32xf32> to vector<48x32xbf16>
    %c1_135 = arith.constant 1 : index
    %c0_136 = arith.constant 0 : index
    %c0_137 = arith.constant 0 : index
    %338 = vector.load %arg10[%c1_135, %c0_136, %c0_137] : memref<2x32x32xbf16, #tpu.memory_space<vmem>>, vector<1x32x32xbf16>
    %339 = vector.shape_cast %338 : vector<1x32x32xbf16> to vector<32x32xbf16>
    %cst_138 = arith.constant dense<0.000000e+00> : vector<48x32xf32>
    %340 = tpu.matmul %337, %339, %cst_138 {dimension_numbers = #tpu.dot_dimension_numbers<[1], [0], [0], [1], [0, 0, 1, 1], [], []>} : vector<48x32xbf16>, vector<32x32xbf16>, vector<48x32xf32> -> vector<48x32xf32>
    %c1_139 = arith.constant 1 : index
    %c0_140 = arith.constant 0 : index
    %c0_141 = arith.constant 0 : index
    %341 = vector.load %arg11[%c1_139, %c0_140, %c0_141] : memref<2x1x32xf32, #tpu.memory_space<vmem>>, vector<1x1x32xf32>
    %342 = vector.shape_cast %341 : vector<1x1x32xf32> to vector<1x32xf32>
    %343 = vector.broadcast %342 : vector<1x32xf32> to vector<48x32xf32>
    %344 = arith.addf %340, %343 : vector<48x32xf32>
    %c1_142 = arith.constant 1 : index
    %c0_143 = arith.constant 0 : index
    %c0_144 = arith.constant 0 : index
    %345 = vector.load %arg12[%c1_142, %c0_143, %c0_144] : memref<2x32x32xbf16, #tpu.memory_space<vmem>>, vector<1x32x32xbf16>
    %346 = vector.shape_cast %345 : vector<1x32x32xbf16> to vector<32x32xbf16>
    %cst_145 = arith.constant dense<0.000000e+00> : vector<48x32xf32>
    %347 = tpu.matmul %337, %346, %cst_145 {dimension_numbers = #tpu.dot_dimension_numbers<[1], [0], [0], [1], [0, 0, 1, 1], [], []>} : vector<48x32xbf16>, vector<32x32xbf16>, vector<48x32xf32> -> vector<48x32xf32>
    %c1_146 = arith.constant 1 : index
    %c0_147 = arith.constant 0 : index
    %c0_148 = arith.constant 0 : index
    %348 = vector.load %arg13[%c1_146, %c0_147, %c0_148] : memref<2x1x32xf32, #tpu.memory_space<vmem>>, vector<1x1x32xf32>
    %349 = vector.shape_cast %348 : vector<1x1x32xf32> to vector<1x32xf32>
    %350 = vector.broadcast %349 : vector<1x32xf32> to vector<48x32xf32>
    %351 = arith.addf %347, %350 : vector<48x32xf32>
    %c1_149 = arith.constant 1 : index
    %c0_150 = arith.constant 0 : index
    %c0_151 = arith.constant 0 : index
    %352 = vector.load %arg14[%c1_149, %c0_150, %c0_151] : memref<2x32x32xbf16, #tpu.memory_space<vmem>>, vector<1x32x32xbf16>
    %353 = vector.shape_cast %352 : vector<1x32x32xbf16> to vector<32x32xbf16>
    %cst_152 = arith.constant dense<0.000000e+00> : vector<48x32xf32>
    %354 = tpu.matmul %337, %353, %cst_152 {dimension_numbers = #tpu.dot_dimension_numbers<[1], [0], [0], [1], [0, 0, 1, 1], [], []>} : vector<48x32xbf16>, vector<32x32xbf16>, vector<48x32xf32> -> vector<48x32xf32>
    %c1_153 = arith.constant 1 : index
    %c0_154 = arith.constant 0 : index
    %c0_155 = arith.constant 0 : index
    %355 = vector.load %arg15[%c1_153, %c0_154, %c0_155] : memref<2x1x32xf32, #tpu.memory_space<vmem>>, vector<1x1x32xf32>
    %356 = vector.shape_cast %355 : vector<1x1x32xf32> to vector<1x32xf32>
    %357 = vector.broadcast %356 : vector<1x32xf32> to vector<48x32xf32>
    %358 = arith.addf %354, %357 : vector<48x32xf32>
    %359 = arith.truncf %344 : vector<48x32xf32> to vector<48x32xbf16>
    %360 = arith.truncf %351 : vector<48x32xf32> to vector<48x32xbf16>
    %361 = arith.truncf %358 : vector<48x32xf32> to vector<48x32xbf16>
    %362 = vector.extract_strided_slice %359 {offsets = [0, 0], sizes = [24, 32], strides = [1, 1]} : vector<48x32xbf16> to vector<24x32xbf16>
    %363 = vector.extract_strided_slice %360 {offsets = [0, 0], sizes = [24, 32], strides = [1, 1]} : vector<48x32xbf16> to vector<24x32xbf16>
    %364 = vector.extract_strided_slice %361 {offsets = [0, 0], sizes = [24, 32], strides = [1, 1]} : vector<48x32xbf16> to vector<24x32xbf16>
    %365 = vector.broadcast %7 : vector<1x32xbf16> to vector<24x32xbf16>
    %366 = arith.mulf %363, %365 : vector<24x32xbf16>
    %367 = vector.broadcast %7 : vector<1x32xbf16> to vector<24x32xbf16>
    %368 = arith.mulf %364, %367 : vector<24x32xbf16>
    %cst_156 = arith.constant dense<0.000000e+00> : vector<24x24xf32>
    %369 = tpu.matmul %362, %366, %cst_156 {dimension_numbers = #tpu.dot_dimension_numbers<[1], [1], [0], [0], [0, 0, 1, 0], [], []>} : vector<24x32xbf16>, vector<24x32xbf16>, vector<24x24xf32> -> vector<24x24xf32>
    %370 = vector.broadcast %5 : vector<1x24xf32> to vector<24x24xf32>
    %371 = arith.addf %369, %370 : vector<24x24xf32>
    %cst_157 = arith.constant dense<0xFF800000> : vector<24xf32>
    %372 = vector.multi_reduction <maximumf>, %371, %cst_157 [1] : vector<24x24xf32> to vector<24xf32>
    %373 = vector.shape_cast %372 : vector<24xf32> to vector<24x1xf32>
    %374 = vector.broadcast %373 : vector<24x1xf32> to vector<24x24xf32>
    %375 = arith.subf %371, %374 : vector<24x24xf32>
    %376 = math.exp %375 : vector<24x24xf32>
    %cst_158 = arith.constant dense<0.000000e+00> : vector<24xf32>
    %377 = vector.multi_reduction <add>, %376, %cst_158 [1] : vector<24x24xf32> to vector<24xf32>
    %378 = vector.shape_cast %377 : vector<24xf32> to vector<24x1xf32>
    %379 = tpu.reciprocal %378 {approx = true} : vector<24x1xf32> -> vector<24x1xf32>
    %380 = vector.broadcast %379 : vector<24x1xf32> to vector<24x24xf32>
    %381 = arith.mulf %376, %380 : vector<24x24xf32>
    %382 = arith.truncf %381 : vector<24x24xf32> to vector<24x24xbf16>
    %cst_159 = arith.constant dense<0.000000e+00> : vector<24x32xf32>
    %383 = tpu.matmul %382, %368, %cst_159 {dimension_numbers = #tpu.dot_dimension_numbers<[1], [0], [0], [1], [0, 0, 1, 1], [], []>} : vector<24x24xbf16>, vector<24x32xbf16>, vector<24x32xf32> -> vector<24x32xf32>
    %384 = vector.broadcast %9 : vector<1x32xbf16> to vector<24x32xbf16>
    %385 = arith.mulf %363, %384 : vector<24x32xbf16>
    %386 = vector.broadcast %9 : vector<1x32xbf16> to vector<24x32xbf16>
    %387 = arith.mulf %364, %386 : vector<24x32xbf16>
    %cst_160 = arith.constant dense<0.000000e+00> : vector<24x24xf32>
    %388 = tpu.matmul %362, %385, %cst_160 {dimension_numbers = #tpu.dot_dimension_numbers<[1], [1], [0], [0], [0, 0, 1, 0], [], []>} : vector<24x32xbf16>, vector<24x32xbf16>, vector<24x24xf32> -> vector<24x24xf32>
    %389 = vector.broadcast %5 : vector<1x24xf32> to vector<24x24xf32>
    %390 = arith.addf %388, %389 : vector<24x24xf32>
    %cst_161 = arith.constant dense<0xFF800000> : vector<24xf32>
    %391 = vector.multi_reduction <maximumf>, %390, %cst_161 [1] : vector<24x24xf32> to vector<24xf32>
    %392 = vector.shape_cast %391 : vector<24xf32> to vector<24x1xf32>
    %393 = vector.broadcast %392 : vector<24x1xf32> to vector<24x24xf32>
    %394 = arith.subf %390, %393 : vector<24x24xf32>
    %395 = math.exp %394 : vector<24x24xf32>
    %cst_162 = arith.constant dense<0.000000e+00> : vector<24xf32>
    %396 = vector.multi_reduction <add>, %395, %cst_162 [1] : vector<24x24xf32> to vector<24xf32>
    %397 = vector.shape_cast %396 : vector<24xf32> to vector<24x1xf32>
    %398 = tpu.reciprocal %397 {approx = true} : vector<24x1xf32> -> vector<24x1xf32>
    %399 = vector.broadcast %398 : vector<24x1xf32> to vector<24x24xf32>
    %400 = arith.mulf %395, %399 : vector<24x24xf32>
    %401 = arith.truncf %400 : vector<24x24xf32> to vector<24x24xbf16>
    %cst_163 = arith.constant dense<0.000000e+00> : vector<24x32xf32>
    %402 = tpu.matmul %401, %387, %cst_163 {dimension_numbers = #tpu.dot_dimension_numbers<[1], [0], [0], [1], [0, 0, 1, 1], [], []>} : vector<24x24xbf16>, vector<24x32xbf16>, vector<24x32xf32> -> vector<24x32xf32>
    %403 = arith.addf %383, %402 : vector<24x32xf32>
    %404 = vector.broadcast %11 : vector<1x32xbf16> to vector<24x32xbf16>
    %405 = arith.mulf %363, %404 : vector<24x32xbf16>
    %406 = vector.broadcast %11 : vector<1x32xbf16> to vector<24x32xbf16>
    %407 = arith.mulf %364, %406 : vector<24x32xbf16>
    %cst_164 = arith.constant dense<0.000000e+00> : vector<24x24xf32>
    %408 = tpu.matmul %362, %405, %cst_164 {dimension_numbers = #tpu.dot_dimension_numbers<[1], [1], [0], [0], [0, 0, 1, 0], [], []>} : vector<24x32xbf16>, vector<24x32xbf16>, vector<24x24xf32> -> vector<24x24xf32>
    %409 = vector.broadcast %5 : vector<1x24xf32> to vector<24x24xf32>
    %410 = arith.addf %408, %409 : vector<24x24xf32>
    %cst_165 = arith.constant dense<0xFF800000> : vector<24xf32>
    %411 = vector.multi_reduction <maximumf>, %410, %cst_165 [1] : vector<24x24xf32> to vector<24xf32>
    %412 = vector.shape_cast %411 : vector<24xf32> to vector<24x1xf32>
    %413 = vector.broadcast %412 : vector<24x1xf32> to vector<24x24xf32>
    %414 = arith.subf %410, %413 : vector<24x24xf32>
    %415 = math.exp %414 : vector<24x24xf32>
    %cst_166 = arith.constant dense<0.000000e+00> : vector<24xf32>
    %416 = vector.multi_reduction <add>, %415, %cst_166 [1] : vector<24x24xf32> to vector<24xf32>
    %417 = vector.shape_cast %416 : vector<24xf32> to vector<24x1xf32>
    %418 = tpu.reciprocal %417 {approx = true} : vector<24x1xf32> -> vector<24x1xf32>
    %419 = vector.broadcast %418 : vector<24x1xf32> to vector<24x24xf32>
    %420 = arith.mulf %415, %419 : vector<24x24xf32>
    %421 = arith.truncf %420 : vector<24x24xf32> to vector<24x24xbf16>
    %cst_167 = arith.constant dense<0.000000e+00> : vector<24x32xf32>
    %422 = tpu.matmul %421, %407, %cst_167 {dimension_numbers = #tpu.dot_dimension_numbers<[1], [0], [0], [1], [0, 0, 1, 1], [], []>} : vector<24x24xbf16>, vector<24x32xbf16>, vector<24x32xf32> -> vector<24x32xf32>
    %423 = arith.addf %403, %422 : vector<24x32xf32>
    %424 = vector.broadcast %13 : vector<1x32xbf16> to vector<24x32xbf16>
    %425 = arith.mulf %363, %424 : vector<24x32xbf16>
    %426 = vector.broadcast %13 : vector<1x32xbf16> to vector<24x32xbf16>
    %427 = arith.mulf %364, %426 : vector<24x32xbf16>
    %cst_168 = arith.constant dense<0.000000e+00> : vector<24x24xf32>
    %428 = tpu.matmul %362, %425, %cst_168 {dimension_numbers = #tpu.dot_dimension_numbers<[1], [1], [0], [0], [0, 0, 1, 0], [], []>} : vector<24x32xbf16>, vector<24x32xbf16>, vector<24x24xf32> -> vector<24x24xf32>
    %429 = vector.broadcast %5 : vector<1x24xf32> to vector<24x24xf32>
    %430 = arith.addf %428, %429 : vector<24x24xf32>
    %cst_169 = arith.constant dense<0xFF800000> : vector<24xf32>
    %431 = vector.multi_reduction <maximumf>, %430, %cst_169 [1] : vector<24x24xf32> to vector<24xf32>
    %432 = vector.shape_cast %431 : vector<24xf32> to vector<24x1xf32>
    %433 = vector.broadcast %432 : vector<24x1xf32> to vector<24x24xf32>
    %434 = arith.subf %430, %433 : vector<24x24xf32>
    %435 = math.exp %434 : vector<24x24xf32>
    %cst_170 = arith.constant dense<0.000000e+00> : vector<24xf32>
    %436 = vector.multi_reduction <add>, %435, %cst_170 [1] : vector<24x24xf32> to vector<24xf32>
    %437 = vector.shape_cast %436 : vector<24xf32> to vector<24x1xf32>
    %438 = tpu.reciprocal %437 {approx = true} : vector<24x1xf32> -> vector<24x1xf32>
    %439 = vector.broadcast %438 : vector<24x1xf32> to vector<24x24xf32>
    %440 = arith.mulf %435, %439 : vector<24x24xf32>
    %441 = arith.truncf %440 : vector<24x24xf32> to vector<24x24xbf16>
    %cst_171 = arith.constant dense<0.000000e+00> : vector<24x32xf32>
    %442 = tpu.matmul %441, %427, %cst_171 {dimension_numbers = #tpu.dot_dimension_numbers<[1], [0], [0], [1], [0, 0, 1, 1], [], []>} : vector<24x24xbf16>, vector<24x32xbf16>, vector<24x32xf32> -> vector<24x32xf32>
    %443 = arith.addf %423, %442 : vector<24x32xf32>
    %444 = vector.extract_strided_slice %359 {offsets = [24, 0], sizes = [24, 32], strides = [1, 1]} : vector<48x32xbf16> to vector<24x32xbf16>
    %445 = vector.extract_strided_slice %360 {offsets = [24, 0], sizes = [24, 32], strides = [1, 1]} : vector<48x32xbf16> to vector<24x32xbf16>
    %446 = vector.extract_strided_slice %361 {offsets = [24, 0], sizes = [24, 32], strides = [1, 1]} : vector<48x32xbf16> to vector<24x32xbf16>
    %447 = vector.broadcast %7 : vector<1x32xbf16> to vector<24x32xbf16>
    %448 = arith.mulf %445, %447 : vector<24x32xbf16>
    %449 = vector.broadcast %7 : vector<1x32xbf16> to vector<24x32xbf16>
    %450 = arith.mulf %446, %449 : vector<24x32xbf16>
    %cst_172 = arith.constant dense<0.000000e+00> : vector<24x24xf32>
    %451 = tpu.matmul %444, %448, %cst_172 {dimension_numbers = #tpu.dot_dimension_numbers<[1], [1], [0], [0], [0, 0, 1, 0], [], []>} : vector<24x32xbf16>, vector<24x32xbf16>, vector<24x24xf32> -> vector<24x24xf32>
    %452 = vector.broadcast %5 : vector<1x24xf32> to vector<24x24xf32>
    %453 = arith.addf %451, %452 : vector<24x24xf32>
    %cst_173 = arith.constant dense<0xFF800000> : vector<24xf32>
    %454 = vector.multi_reduction <maximumf>, %453, %cst_173 [1] : vector<24x24xf32> to vector<24xf32>
    %455 = vector.shape_cast %454 : vector<24xf32> to vector<24x1xf32>
    %456 = vector.broadcast %455 : vector<24x1xf32> to vector<24x24xf32>
    %457 = arith.subf %453, %456 : vector<24x24xf32>
    %458 = math.exp %457 : vector<24x24xf32>
    %cst_174 = arith.constant dense<0.000000e+00> : vector<24xf32>
    %459 = vector.multi_reduction <add>, %458, %cst_174 [1] : vector<24x24xf32> to vector<24xf32>
    %460 = vector.shape_cast %459 : vector<24xf32> to vector<24x1xf32>
    %461 = tpu.reciprocal %460 {approx = true} : vector<24x1xf32> -> vector<24x1xf32>
    %462 = vector.broadcast %461 : vector<24x1xf32> to vector<24x24xf32>
    %463 = arith.mulf %458, %462 : vector<24x24xf32>
    %464 = arith.truncf %463 : vector<24x24xf32> to vector<24x24xbf16>
    %cst_175 = arith.constant dense<0.000000e+00> : vector<24x32xf32>
    %465 = tpu.matmul %464, %450, %cst_175 {dimension_numbers = #tpu.dot_dimension_numbers<[1], [0], [0], [1], [0, 0, 1, 1], [], []>} : vector<24x24xbf16>, vector<24x32xbf16>, vector<24x32xf32> -> vector<24x32xf32>
    %466 = vector.broadcast %9 : vector<1x32xbf16> to vector<24x32xbf16>
    %467 = arith.mulf %445, %466 : vector<24x32xbf16>
    %468 = vector.broadcast %9 : vector<1x32xbf16> to vector<24x32xbf16>
    %469 = arith.mulf %446, %468 : vector<24x32xbf16>
    %cst_176 = arith.constant dense<0.000000e+00> : vector<24x24xf32>
    %470 = tpu.matmul %444, %467, %cst_176 {dimension_numbers = #tpu.dot_dimension_numbers<[1], [1], [0], [0], [0, 0, 1, 0], [], []>} : vector<24x32xbf16>, vector<24x32xbf16>, vector<24x24xf32> -> vector<24x24xf32>
    %471 = vector.broadcast %5 : vector<1x24xf32> to vector<24x24xf32>
    %472 = arith.addf %470, %471 : vector<24x24xf32>
    %cst_177 = arith.constant dense<0xFF800000> : vector<24xf32>
    %473 = vector.multi_reduction <maximumf>, %472, %cst_177 [1] : vector<24x24xf32> to vector<24xf32>
    %474 = vector.shape_cast %473 : vector<24xf32> to vector<24x1xf32>
    %475 = vector.broadcast %474 : vector<24x1xf32> to vector<24x24xf32>
    %476 = arith.subf %472, %475 : vector<24x24xf32>
    %477 = math.exp %476 : vector<24x24xf32>
    %cst_178 = arith.constant dense<0.000000e+00> : vector<24xf32>
    %478 = vector.multi_reduction <add>, %477, %cst_178 [1] : vector<24x24xf32> to vector<24xf32>
    %479 = vector.shape_cast %478 : vector<24xf32> to vector<24x1xf32>
    %480 = tpu.reciprocal %479 {approx = true} : vector<24x1xf32> -> vector<24x1xf32>
    %481 = vector.broadcast %480 : vector<24x1xf32> to vector<24x24xf32>
    %482 = arith.mulf %477, %481 : vector<24x24xf32>
    %483 = arith.truncf %482 : vector<24x24xf32> to vector<24x24xbf16>
    %cst_179 = arith.constant dense<0.000000e+00> : vector<24x32xf32>
    %484 = tpu.matmul %483, %469, %cst_179 {dimension_numbers = #tpu.dot_dimension_numbers<[1], [0], [0], [1], [0, 0, 1, 1], [], []>} : vector<24x24xbf16>, vector<24x32xbf16>, vector<24x32xf32> -> vector<24x32xf32>
    %485 = arith.addf %465, %484 : vector<24x32xf32>
    %486 = vector.broadcast %11 : vector<1x32xbf16> to vector<24x32xbf16>
    %487 = arith.mulf %445, %486 : vector<24x32xbf16>
    %488 = vector.broadcast %11 : vector<1x32xbf16> to vector<24x32xbf16>
    %489 = arith.mulf %446, %488 : vector<24x32xbf16>
    %cst_180 = arith.constant dense<0.000000e+00> : vector<24x24xf32>
    %490 = tpu.matmul %444, %487, %cst_180 {dimension_numbers = #tpu.dot_dimension_numbers<[1], [1], [0], [0], [0, 0, 1, 0], [], []>} : vector<24x32xbf16>, vector<24x32xbf16>, vector<24x24xf32> -> vector<24x24xf32>
    %491 = vector.broadcast %5 : vector<1x24xf32> to vector<24x24xf32>
    %492 = arith.addf %490, %491 : vector<24x24xf32>
    %cst_181 = arith.constant dense<0xFF800000> : vector<24xf32>
    %493 = vector.multi_reduction <maximumf>, %492, %cst_181 [1] : vector<24x24xf32> to vector<24xf32>
    %494 = vector.shape_cast %493 : vector<24xf32> to vector<24x1xf32>
    %495 = vector.broadcast %494 : vector<24x1xf32> to vector<24x24xf32>
    %496 = arith.subf %492, %495 : vector<24x24xf32>
    %497 = math.exp %496 : vector<24x24xf32>
    %cst_182 = arith.constant dense<0.000000e+00> : vector<24xf32>
    %498 = vector.multi_reduction <add>, %497, %cst_182 [1] : vector<24x24xf32> to vector<24xf32>
    %499 = vector.shape_cast %498 : vector<24xf32> to vector<24x1xf32>
    %500 = tpu.reciprocal %499 {approx = true} : vector<24x1xf32> -> vector<24x1xf32>
    %501 = vector.broadcast %500 : vector<24x1xf32> to vector<24x24xf32>
    %502 = arith.mulf %497, %501 : vector<24x24xf32>
    %503 = arith.truncf %502 : vector<24x24xf32> to vector<24x24xbf16>
    %cst_183 = arith.constant dense<0.000000e+00> : vector<24x32xf32>
    %504 = tpu.matmul %503, %489, %cst_183 {dimension_numbers = #tpu.dot_dimension_numbers<[1], [0], [0], [1], [0, 0, 1, 1], [], []>} : vector<24x24xbf16>, vector<24x32xbf16>, vector<24x32xf32> -> vector<24x32xf32>
    %505 = arith.addf %485, %504 : vector<24x32xf32>
    %506 = vector.broadcast %13 : vector<1x32xbf16> to vector<24x32xbf16>
    %507 = arith.mulf %445, %506 : vector<24x32xbf16>
    %508 = vector.broadcast %13 : vector<1x32xbf16> to vector<24x32xbf16>
    %509 = arith.mulf %446, %508 : vector<24x32xbf16>
    %cst_184 = arith.constant dense<0.000000e+00> : vector<24x24xf32>
    %510 = tpu.matmul %444, %507, %cst_184 {dimension_numbers = #tpu.dot_dimension_numbers<[1], [1], [0], [0], [0, 0, 1, 0], [], []>} : vector<24x32xbf16>, vector<24x32xbf16>, vector<24x24xf32> -> vector<24x24xf32>
    %511 = vector.broadcast %5 : vector<1x24xf32> to vector<24x24xf32>
    %512 = arith.addf %510, %511 : vector<24x24xf32>
    %cst_185 = arith.constant dense<0xFF800000> : vector<24xf32>
    %513 = vector.multi_reduction <maximumf>, %512, %cst_185 [1] : vector<24x24xf32> to vector<24xf32>
    %514 = vector.shape_cast %513 : vector<24xf32> to vector<24x1xf32>
    %515 = vector.broadcast %514 : vector<24x1xf32> to vector<24x24xf32>
    %516 = arith.subf %512, %515 : vector<24x24xf32>
    %517 = math.exp %516 : vector<24x24xf32>
    %cst_186 = arith.constant dense<0.000000e+00> : vector<24xf32>
    %518 = vector.multi_reduction <add>, %517, %cst_186 [1] : vector<24x24xf32> to vector<24xf32>
    %519 = vector.shape_cast %518 : vector<24xf32> to vector<24x1xf32>
    %520 = tpu.reciprocal %519 {approx = true} : vector<24x1xf32> -> vector<24x1xf32>
    %521 = vector.broadcast %520 : vector<24x1xf32> to vector<24x24xf32>
    %522 = arith.mulf %517, %521 : vector<24x24xf32>
    %523 = arith.truncf %522 : vector<24x24xf32> to vector<24x24xbf16>
    %cst_187 = arith.constant dense<0.000000e+00> : vector<24x32xf32>
    %524 = tpu.matmul %523, %509, %cst_187 {dimension_numbers = #tpu.dot_dimension_numbers<[1], [0], [0], [1], [0, 0, 1, 1], [], []>} : vector<24x24xbf16>, vector<24x32xbf16>, vector<24x32xf32> -> vector<24x32xf32>
    %525 = arith.addf %505, %524 : vector<24x32xf32>
    %526 = tpu.concatenate %443, %525 in 0 : vector<24x32xf32>, vector<24x32xf32> -> vector<48x32xf32>
    %527 = arith.truncf %526 : vector<48x32xf32> to vector<48x32xbf16>
    %c1_188 = arith.constant 1 : index
    %c0_189 = arith.constant 0 : index
    %c0_190 = arith.constant 0 : index
    %528 = vector.load %arg16[%c1_188, %c0_189, %c0_190] : memref<2x32x32xbf16, #tpu.memory_space<vmem>>, vector<1x32x32xbf16>
    %529 = vector.shape_cast %528 : vector<1x32x32xbf16> to vector<32x32xbf16>
    %cst_191 = arith.constant dense<0.000000e+00> : vector<48x32xf32>
    %530 = tpu.matmul %527, %529, %cst_191 {dimension_numbers = #tpu.dot_dimension_numbers<[1], [0], [0], [1], [0, 0, 1, 1], [], []>} : vector<48x32xbf16>, vector<32x32xbf16>, vector<48x32xf32> -> vector<48x32xf32>
    %531 = arith.addf %310, %530 : vector<48x32xf32>
    %c1_192 = arith.constant 1 : index
    %c0_193 = arith.constant 0 : index
    %c0_194 = arith.constant 0 : index
    %532 = vector.load %arg17[%c1_192, %c0_193, %c0_194] : memref<2x1x32xf32, #tpu.memory_space<vmem>>, vector<1x1x32xf32>
    %533 = vector.shape_cast %532 : vector<1x1x32xf32> to vector<1x32xf32>
    %534 = vector.broadcast %533 : vector<1x32xf32> to vector<48x32xf32>
    %535 = arith.addf %531, %534 : vector<48x32xf32>
    %c1_195 = arith.constant 1 : index
    %c0_196 = arith.constant 0 : index
    %c0_197 = arith.constant 0 : index
    %536 = vector.load %arg18[%c1_195, %c0_196, %c0_197] : memref<2x1x32xf32, #tpu.memory_space<vmem>>, vector<1x1x32xf32>
    %537 = vector.shape_cast %536 : vector<1x1x32xf32> to vector<1x32xf32>
    %c1_198 = arith.constant 1 : index
    %c0_199 = arith.constant 0 : index
    %c0_200 = arith.constant 0 : index
    %538 = vector.load %arg19[%c1_198, %c0_199, %c0_200] : memref<2x1x32xf32, #tpu.memory_space<vmem>>, vector<1x1x32xf32>
    %539 = vector.shape_cast %538 : vector<1x1x32xf32> to vector<1x32xf32>
    %cst_201 = arith.constant dense<0.000000e+00> : vector<48xf32>
    %540 = vector.multi_reduction <add>, %535, %cst_201 [1] : vector<48x32xf32> to vector<48xf32>
    %541 = vector.shape_cast %540 : vector<48xf32> to vector<48x1xf32>
    %cst_202 = arith.constant 3.200000e+01 : f32
    %542 = vector.broadcast %cst_202 : f32 to vector<48x1xf32>
    %543 = arith.divf %541, %542 : vector<48x1xf32>
    %544 = vector.broadcast %543 : vector<48x1xf32> to vector<48x32xf32>
    %545 = arith.subf %535, %544 : vector<48x32xf32>
    %546 = arith.mulf %545, %545 : vector<48x32xf32>
    %cst_203 = arith.constant dense<0.000000e+00> : vector<48xf32>
    %547 = vector.multi_reduction <add>, %546, %cst_203 [1] : vector<48x32xf32> to vector<48xf32>
    %548 = vector.shape_cast %547 : vector<48xf32> to vector<48x1xf32>
    %cst_204 = arith.constant 3.200000e+01 : f32
    %549 = vector.broadcast %cst_204 : f32 to vector<48x1xf32>
    %550 = arith.divf %548, %549 : vector<48x1xf32>
    %551 = vector.broadcast %543 : vector<48x1xf32> to vector<48x32xf32>
    %552 = arith.subf %535, %551 : vector<48x32xf32>
    %cst_205 = arith.constant 9.99999974E-6 : f32
    %553 = vector.broadcast %cst_205 : f32 to vector<48x1xf32>
    %554 = arith.addf %550, %553 : vector<48x1xf32>
    %555 = math.rsqrt %554 : vector<48x1xf32>
    %556 = vector.broadcast %555 : vector<48x1xf32> to vector<48x32xf32>
    %557 = arith.mulf %552, %556 : vector<48x32xf32>
    %558 = vector.broadcast %537 : vector<1x32xf32> to vector<48x32xf32>
    %559 = arith.mulf %557, %558 : vector<48x32xf32>
    %560 = vector.broadcast %539 : vector<1x32xf32> to vector<48x32xf32>
    %561 = arith.addf %559, %560 : vector<48x32xf32>
    %562 = arith.truncf %561 : vector<48x32xf32> to vector<48x32xbf16>
    %c1_206 = arith.constant 1 : index
    %c0_207 = arith.constant 0 : index
    %c0_208 = arith.constant 0 : index
    %563 = vector.load %arg20[%c1_206, %c0_207, %c0_208] : memref<2x32x64xbf16, #tpu.memory_space<vmem>>, vector<1x32x64xbf16>
    %564 = vector.shape_cast %563 : vector<1x32x64xbf16> to vector<32x64xbf16>
    %cst_209 = arith.constant dense<0.000000e+00> : vector<48x64xf32>
    %565 = tpu.matmul %562, %564, %cst_209 {dimension_numbers = #tpu.dot_dimension_numbers<[1], [0], [0], [1], [0, 0, 1, 1], [], []>} : vector<48x32xbf16>, vector<32x64xbf16>, vector<48x64xf32> -> vector<48x64xf32>
    %c1_210 = arith.constant 1 : index
    %c0_211 = arith.constant 0 : index
    %c0_212 = arith.constant 0 : index
    %566 = vector.load %arg21[%c1_210, %c0_211, %c0_212] : memref<2x1x64xf32, #tpu.memory_space<vmem>>, vector<1x1x64xf32>
    %567 = vector.shape_cast %566 : vector<1x1x64xf32> to vector<1x64xf32>
    %568 = vector.broadcast %567 : vector<1x64xf32> to vector<48x64xf32>
    %569 = arith.addf %565, %568 : vector<48x64xf32>
    %cst_213 = arith.constant 5.000000e-01 : f32
    %570 = vector.broadcast %cst_213 : f32 to vector<48x64xf32>
    %571 = arith.mulf %570, %569 : vector<48x64xf32>
    %cst_214 = arith.constant 0.707106769 : f32
    %572 = vector.broadcast %cst_214 : f32 to vector<48x64xf32>
    %573 = arith.mulf %569, %572 : vector<48x64xf32>
    %574 = math.erf %573 : vector<48x64xf32>
    %cst_215 = arith.constant 1.000000e+00 : f32
    %575 = vector.broadcast %cst_215 : f32 to vector<48x64xf32>
    %576 = arith.addf %575, %574 : vector<48x64xf32>
    %577 = arith.mulf %571, %576 : vector<48x64xf32>
    %578 = arith.truncf %577 : vector<48x64xf32> to vector<48x64xbf16>
    %c1_216 = arith.constant 1 : index
    %c0_217 = arith.constant 0 : index
    %c0_218 = arith.constant 0 : index
    %579 = vector.load %arg22[%c1_216, %c0_217, %c0_218] : memref<2x64x32xbf16, #tpu.memory_space<vmem>>, vector<1x64x32xbf16>
    %580 = vector.shape_cast %579 : vector<1x64x32xbf16> to vector<64x32xbf16>
    %cst_219 = arith.constant dense<0.000000e+00> : vector<48x32xf32>
    %581 = tpu.matmul %578, %580, %cst_219 {dimension_numbers = #tpu.dot_dimension_numbers<[1], [0], [0], [1], [0, 0, 1, 1], [], []>} : vector<48x64xbf16>, vector<64x32xbf16>, vector<48x32xf32> -> vector<48x32xf32>
    %c1_220 = arith.constant 1 : index
    %c0_221 = arith.constant 0 : index
    %c0_222 = arith.constant 0 : index
    %582 = vector.load %arg23[%c1_220, %c0_221, %c0_222] : memref<2x1x32xf32, #tpu.memory_space<vmem>>, vector<1x1x32xf32>
    %583 = vector.shape_cast %582 : vector<1x1x32xf32> to vector<1x32xf32>
    %584 = vector.broadcast %583 : vector<1x32xf32> to vector<48x32xf32>
    %585 = arith.addf %581, %584 : vector<48x32xf32>
    %586 = arith.addf %535, %585 : vector<48x32xf32>
    %c0_223 = arith.constant 0 : index
    %c0_224 = arith.constant 0 : index
    %587 = vector.load %arg24[%c0_223, %c0_224] : memref<1x32xf32, #tpu.memory_space<vmem>>, vector<1x32xf32>
    %c0_225 = arith.constant 0 : index
    %c0_226 = arith.constant 0 : index
    %588 = vector.load %arg25[%c0_225, %c0_226] : memref<1x32xf32, #tpu.memory_space<vmem>>, vector<1x32xf32>
    %cst_227 = arith.constant dense<0.000000e+00> : vector<48xf32>
    %589 = vector.multi_reduction <add>, %586, %cst_227 [1] : vector<48x32xf32> to vector<48xf32>
    %590 = vector.shape_cast %589 : vector<48xf32> to vector<48x1xf32>
    %cst_228 = arith.constant 3.200000e+01 : f32
    %591 = vector.broadcast %cst_228 : f32 to vector<48x1xf32>
    %592 = arith.divf %590, %591 : vector<48x1xf32>
    %593 = vector.broadcast %592 : vector<48x1xf32> to vector<48x32xf32>
    %594 = arith.subf %586, %593 : vector<48x32xf32>
    %595 = arith.mulf %594, %594 : vector<48x32xf32>
    %cst_229 = arith.constant dense<0.000000e+00> : vector<48xf32>
    %596 = vector.multi_reduction <add>, %595, %cst_229 [1] : vector<48x32xf32> to vector<48xf32>
    %597 = vector.shape_cast %596 : vector<48xf32> to vector<48x1xf32>
    %cst_230 = arith.constant 3.200000e+01 : f32
    %598 = vector.broadcast %cst_230 : f32 to vector<48x1xf32>
    %599 = arith.divf %597, %598 : vector<48x1xf32>
    %600 = vector.broadcast %592 : vector<48x1xf32> to vector<48x32xf32>
    %601 = arith.subf %586, %600 : vector<48x32xf32>
    %cst_231 = arith.constant 9.99999974E-6 : f32
    %602 = vector.broadcast %cst_231 : f32 to vector<48x1xf32>
    %603 = arith.addf %599, %602 : vector<48x1xf32>
    %604 = math.rsqrt %603 : vector<48x1xf32>
    %605 = vector.broadcast %604 : vector<48x1xf32> to vector<48x32xf32>
    %606 = arith.mulf %601, %605 : vector<48x32xf32>
    %607 = vector.broadcast %587 : vector<1x32xf32> to vector<48x32xf32>
    %608 = arith.mulf %606, %607 : vector<48x32xf32>
    %609 = vector.broadcast %588 : vector<1x32xf32> to vector<48x32xf32>
    %610 = arith.addf %608, %609 : vector<48x32xf32>
    %611 = arith.truncf %610 : vector<48x32xf32> to vector<48x32xbf16>
    %c0_232 = arith.constant 0 : index
    %c0_233 = arith.constant 0 : index
    %612 = vector.load %arg26[%c0_232, %c0_233] : memref<32x48xbf16, #tpu.memory_space<vmem>>, vector<32x48xbf16>
    %cst_234 = arith.constant dense<0.000000e+00> : vector<48x48xf32>
    %613 = tpu.matmul %611, %612, %cst_234 {dimension_numbers = #tpu.dot_dimension_numbers<[1], [0], [0], [1], [0, 0, 1, 1], [], []>} : vector<48x32xbf16>, vector<32x48xbf16>, vector<48x48xf32> -> vector<48x48xf32>
    %c0_235 = arith.constant 0 : index
    %c0_236 = arith.constant 0 : index
    %614 = vector.load %arg27[%c0_235, %c0_236] : memref<1x48xf32, #tpu.memory_space<vmem>>, vector<1x48xf32>
    %615 = vector.broadcast %614 : vector<1x48xf32> to vector<48x48xf32>
    %616 = arith.addf %613, %615 : vector<48x48xf32>
    %c0_237 = arith.constant 0 : index
    %c0_238 = arith.constant 0 : index
    %617 = vector.load %arg32[%c0_237, %c0_238] : memref<48x48xf32, #tpu.memory_space<vmem>>, vector<48x48xf32>
    tpu.vector_store %arg32[%c0_237, %c0_238], %616 {strides = array<i32>} : memref<48x48xf32, #tpu.memory_space<vmem>>, vector<48x48xf32>,
    %c0_239 = arith.constant 0 : index
    %c0_240 = arith.constant 0 : index
    %618 = vector.load %arg28[%c0_239, %c0_240] : memref<1x32xf32, #tpu.memory_space<vmem>>, vector<1x32xf32>
    %c0_241 = arith.constant 0 : index
    %c0_242 = arith.constant 0 : index
    %619 = vector.load %arg29[%c0_241, %c0_242] : memref<1x32xf32, #tpu.memory_space<vmem>>, vector<1x32xf32>
    %cst_243 = arith.constant dense<0.000000e+00> : vector<48xf32>
    %620 = vector.multi_reduction <add>, %586, %cst_243 [1] : vector<48x32xf32> to vector<48xf32>
    %621 = vector.shape_cast %620 : vector<48xf32> to vector<48x1xf32>
    %cst_244 = arith.constant 3.200000e+01 : f32
    %622 = vector.broadcast %cst_244 : f32 to vector<48x1xf32>
    %623 = arith.divf %621, %622 : vector<48x1xf32>
    %624 = vector.broadcast %623 : vector<48x1xf32> to vector<48x32xf32>
    %625 = arith.subf %586, %624 : vector<48x32xf32>
    %626 = arith.mulf %625, %625 : vector<48x32xf32>
    %cst_245 = arith.constant dense<0.000000e+00> : vector<48xf32>
    %627 = vector.multi_reduction <add>, %626, %cst_245 [1] : vector<48x32xf32> to vector<48xf32>
    %628 = vector.shape_cast %627 : vector<48xf32> to vector<48x1xf32>
    %cst_246 = arith.constant 3.200000e+01 : f32
    %629 = vector.broadcast %cst_246 : f32 to vector<48x1xf32>
    %630 = arith.divf %628, %629 : vector<48x1xf32>
    %631 = vector.broadcast %623 : vector<48x1xf32> to vector<48x32xf32>
    %632 = arith.subf %586, %631 : vector<48x32xf32>
    %cst_247 = arith.constant 9.99999974E-6 : f32
    %633 = vector.broadcast %cst_247 : f32 to vector<48x1xf32>
    %634 = arith.addf %630, %633 : vector<48x1xf32>
    %635 = math.rsqrt %634 : vector<48x1xf32>
    %636 = vector.broadcast %635 : vector<48x1xf32> to vector<48x32xf32>
    %637 = arith.mulf %632, %636 : vector<48x32xf32>
    %638 = vector.broadcast %618 : vector<1x32xf32> to vector<48x32xf32>
    %639 = arith.mulf %637, %638 : vector<48x32xf32>
    %640 = vector.broadcast %619 : vector<1x32xf32> to vector<48x32xf32>
    %641 = arith.addf %639, %640 : vector<48x32xf32>
    %642 = arith.truncf %641 : vector<48x32xf32> to vector<48x32xbf16>
    %c0_248 = arith.constant 0 : index
    %c0_249 = arith.constant 0 : index
    %643 = vector.load %arg30[%c0_248, %c0_249] : memref<32x4xbf16, #tpu.memory_space<vmem>>, vector<32x4xbf16>
    %cst_250 = arith.constant dense<0.000000e+00> : vector<48x4xf32>
    %644 = tpu.matmul %642, %643, %cst_250 {dimension_numbers = #tpu.dot_dimension_numbers<[1], [0], [0], [1], [0, 0, 1, 1], [], []>} : vector<48x32xbf16>, vector<32x4xbf16>, vector<48x4xf32> -> vector<48x4xf32>
    %c0_251 = arith.constant 0 : index
    %c0_252 = arith.constant 0 : index
    %645 = vector.load %arg31[%c0_251, %c0_252] : memref<1x4xf32, #tpu.memory_space<vmem>>, vector<1x4xf32>
    %646 = vector.broadcast %645 : vector<1x4xf32> to vector<48x4xf32>
    %647 = arith.addf %644, %646 : vector<48x4xf32>
    %c0_253 = arith.constant 0 : index
    %c0_254 = arith.constant 0 : index
    %648 = vector.load %arg33[%c0_253, %c0_254] : memref<48x4xf32, #tpu.memory_space<vmem>>, vector<48x4xf32>
    tpu.vector_store %arg33[%c0_253, %c0_254], %647 {strides = array<i32>} : memref<48x4xf32, #tpu.memory_space<vmem>>, vector<48x4xf32>,
    return
  }
}

</mosaic_0001>

<llo_original>
// kernel: model_forward.1
$region0: #{model_forward.1}
  #allocation0 [shape = 'u32[]', space=smem, size = 0x4, offset = 0x4, fixed_abs, tag = 'smem constant byte address 0x4 - core index']
  #allocation1 [shape = 'u32[144,128]{1,0:T(1,128)}', space=vmem, size = 0x12000, scoped, tag = 'internal scratch']
  %s0 = inlined_call_operand.smem [shape: u32[34], index: -1, kind: input, shape index: {}]
  %s1 = sld [smem:[%s0]]
  %s2 = scalar_lea.smem %s0, 1
  %s3 = sld [smem:[%s2]]
  %s4 = scalar_lea.smem %s0, 2
  %s5 = sld [smem:[%s4]]
  %s6 = scalar_lea.smem %s0, 3
  %s7 = sld [smem:[%s6]]
  %s8 = scalar_lea.smem %s0, 4
  %s9 = sld [smem:[%s8]]
  %s10 = scalar_lea.smem %s0, 5
  %s11 = sld [smem:[%s10]]
  %s12 = scalar_lea.smem %s0, 6
  %s13 = sld [smem:[%s12]]
  %s14 = scalar_lea.smem %s0, 7
  %s15 = sld [smem:[%s14]]
  %s16 = scalar_lea.smem %s0, 8
  %s17 = sld [smem:[%s16]]
  %s18 = scalar_lea.smem %s0, 9
  %s19 = sld [smem:[%s18]]
  %s20 = scalar_lea.smem %s0, 10
  %s21 = sld [smem:[%s20]]
  %s22 = scalar_lea.smem %s0, 11
  %s23 = sld [smem:[%s22]]
  %s24 = scalar_lea.smem %s0, 12
  %s25 = sld [smem:[%s24]]
  %s26 = scalar_lea.smem %s0, 13
  %s27 = sld [smem:[%s26]]
  %s28 = scalar_lea.smem %s0, 14
  %s29 = sld [smem:[%s28]]
  %s30 = scalar_lea.smem %s0, 15
  %s31 = sld [smem:[%s30]]
  %s32 = scalar_lea.smem %s0, 16
  %s33 = sld [smem:[%s32]]
  %s34 = scalar_lea.smem %s0, 17
  %s35 = sld [smem:[%s34]]
  %s36 = scalar_lea.smem %s0, 18
  %s37 = sld [smem:[%s36]]
  %s38 = scalar_lea.smem %s0, 19
  %s39 = sld [smem:[%s38]]
  %s40 = scalar_lea.smem %s0, 20
  %s41 = sld [smem:[%s40]]
  %s42 = scalar_lea.smem %s0, 21
  %s43 = sld [smem:[%s42]]
  %s44 = scalar_lea.smem %s0, 22
  %s45 = sld [smem:[%s44]]
  %s46 = scalar_lea.smem %s0, 23
  %s47 = sld [smem:[%s46]]
  %s48 = scalar_lea.smem %s0, 24
  %s49 = sld [smem:[%s48]]
  %s50 = scalar_lea.smem %s0, 25
  %s51 = sld [smem:[%s50]]
  %s52 = scalar_lea.smem %s0, 26
  %s53 = sld [smem:[%s52]]
  %s54 = scalar_lea.smem %s0, 27
  %s55 = sld [smem:[%s54]]
  %s56 = scalar_lea.smem %s0, 28
  %s57 = sld [smem:[%s56]]
  %s58 = scalar_lea.smem %s0, 29
  %s59 = sld [smem:[%s58]]
  %s60 = scalar_lea.smem %s0, 30
  %s61 = sld [smem:[%s60]]
  %s62 = scalar_lea.smem %s0, 31
  %s63 = sld [smem:[%s62]]
  %s64 = scalar_lea.smem %s0, 32
  %s65 = sld [smem:[%s64]]
  %s66 = scalar_lea.smem %s0, 33
  %s67 = sld [smem:[%s66]]
  %68 = xla_tuple %s65, %s67
  %s69 = sld [smem:[#allocation0]]
  $region146: #{model_forward.1} parent=0
    _
  %s71 = ssub.s32 1, %s69
  %s72 = scalar_select 0, %s71, %s69
  // Predicated region
  $region2: #{model_forward.1} parent=0 // pred_check
    _
  $region3: #{model_forward.1} parent=0 // pred_check_branch
    %74 = sbr.rel (0) target = $region5
  $region4: #{model_forward.1} parent=0 // pred_region
    _
  $region5: #{model_forward.1} parent=0 // pred_fallthru
    _
  // Predicated region
  $region6: #{model_forward.1} parent=0 // pred_check
    _
  $region7: #{model_forward.1} parent=0 // pred_check_branch
    %76 = sbr.rel (0) target = $region9
  $region8: #{model_forward.1} parent=0 // pred_region
    _
  $region9: #{model_forward.1} parent=0 // pred_fallthru
    _
  // Predicated region
  $region10: #{model_forward.1} parent=0 // pred_check
    _
  $region11: #{model_forward.1} parent=0 // pred_check_branch
    %78 = sbr.rel (0) target = $region13
  $region12: #{model_forward.1} parent=0 // pred_region
    _
  $region13: #{model_forward.1} parent=0 // pred_fallthru
    _
  // Predicated region
  $region14: #{model_forward.1} parent=0 // pred_check
    _
  $region15: #{model_forward.1} parent=0 // pred_check_branch
    %80 = sbr.rel (0) target = $region17
  $region16: #{model_forward.1} parent=0 // pred_region
    _
  $region17: #{model_forward.1} parent=0 // pred_fallthru
    _
  // Predicated region
  $region18: #{model_forward.1} parent=0 // pred_check
    _
  $region19: #{model_forward.1} parent=0 // pred_check_branch
    %82 = sbr.rel (0) target = $region21
  $region20: #{model_forward.1} parent=0 // pred_region
    _
  $region21: #{model_forward.1} parent=0 // pred_fallthru
    _
  // Predicated region
  $region22: #{model_forward.1} parent=0 // pred_check
    _
  $region23: #{model_forward.1} parent=0 // pred_check_branch
    %84 = sbr.rel (0) target = $region25
  $region24: #{model_forward.1} parent=0 // pred_region
    _
  $region25: #{model_forward.1} parent=0 // pred_fallthru
    _
  // Predicated region
  $region26: #{model_forward.1} parent=0 // pred_check
    _
  $region27: #{model_forward.1} parent=0 // pred_check_branch
    %86 = sbr.rel (0) target = $region29
  $region28: #{model_forward.1} parent=0 // pred_region
    _
  $region29: #{model_forward.1} parent=0 // pred_fallthru
    _
  // Predicated region
  $region30: #{model_forward.1} parent=0 // pred_check
    _
  $region31: #{model_forward.1} parent=0 // pred_check_branch
    %88 = sbr.rel (0) target = $region33
  $region32: #{model_forward.1} parent=0 // pred_region
    _
  $region33: #{model_forward.1} parent=0 // pred_fallthru
    _
  // Predicated region
  $region34: #{model_forward.1} parent=0 // pred_check
    _
  $region35: #{model_forward.1} parent=0 // pred_check_branch
    %90 = sbr.rel (0) target = $region37
  $region36: #{model_forward.1} parent=0 // pred_region
    _
  $region37: #{model_forward.1} parent=0 // pred_fallthru
    _
  // Predicated region
  $region38: #{model_forward.1} parent=0 // pred_check
    _
  $region39: #{model_forward.1} parent=0 // pred_check_branch
    %92 = sbr.rel (0) target = $region41
  $region40: #{model_forward.1} parent=0 // pred_region
    _
  $region41: #{model_forward.1} parent=0 // pred_fallthru
    _
  // Predicated region
  $region42: #{model_forward.1} parent=0 // pred_check
    _
  $region43: #{model_forward.1} parent=0 // pred_check_branch
    %94 = sbr.rel (0) target = $region45
  $region44: #{model_forward.1} parent=0 // pred_region
    _
  $region45: #{model_forward.1} parent=0 // pred_fallthru
    _
  // Predicated region
  $region46: #{model_forward.1} parent=0 // pred_check
    _
  $region47: #{model_forward.1} parent=0 // pred_check_branch
    %96 = sbr.rel (0) target = $region49
  $region48: #{model_forward.1} parent=0 // pred_region
    _
  $region49: #{model_forward.1} parent=0 // pred_fallthru
    _
  // Predicated region
  $region50: #{model_forward.1} parent=0 // pred_check
    _
  $region51: #{model_forward.1} parent=0 // pred_check_branch
    %98 = sbr.rel (0) target = $region53
  $region52: #{model_forward.1} parent=0 // pred_region
    _
  $region53: #{model_forward.1} parent=0 // pred_fallthru
    _
  // Predicated region
  $region54: #{model_forward.1} parent=0 // pred_check
    _
  $region55: #{model_forward.1} parent=0 // pred_check_branch
    %100 = sbr.rel (0) target = $region57
  $region56: #{model_forward.1} parent=0 // pred_region
    _
  $region57: #{model_forward.1} parent=0 // pred_fallthru
    _
  // Predicated region
  $region58: #{model_forward.1} parent=0 // pred_check
    _
  $region59: #{model_forward.1} parent=0 // pred_check_branch
    %102 = sbr.rel (0) target = $region61
  $region60: #{model_forward.1} parent=0 // pred_region
    _
  $region61: #{model_forward.1} parent=0 // pred_fallthru
    _
  // Predicated region
  $region62: #{model_forward.1} parent=0 // pred_check
    _
  $region63: #{model_forward.1} parent=0 // pred_check_branch
    %104 = sbr.rel (0) target = $region65
  $region64: #{model_forward.1} parent=0 // pred_region
    _
  $region65: #{model_forward.1} parent=0 // pred_fallthru
    _
  // Predicated region
  $region66: #{model_forward.1} parent=0 // pred_check
    _
  $region67: #{model_forward.1} parent=0 // pred_check_branch
    %106 = sbr.rel (0) target = $region69
  $region68: #{model_forward.1} parent=0 // pred_region
    _
  $region69: #{model_forward.1} parent=0 // pred_fallthru
    _
  // Predicated region
  $region70: #{model_forward.1} parent=0 // pred_check
    _
  $region71: #{model_forward.1} parent=0 // pred_check_branch
    %108 = sbr.rel (0) target = $region73
  $region72: #{model_forward.1} parent=0 // pred_region
    _
  $region73: #{model_forward.1} parent=0 // pred_fallthru
    _
  // Predicated region
  $region74: #{model_forward.1} parent=0 // pred_check
    _
  $region75: #{model_forward.1} parent=0 // pred_check_branch
    %110 = sbr.rel (0) target = $region77
  $region76: #{model_forward.1} parent=0 // pred_region
    _
  $region77: #{model_forward.1} parent=0 // pred_fallthru
    _
  // Predicated region
  $region78: #{model_forward.1} parent=0 // pred_check
    _
  $region79: #{model_forward.1} parent=0 // pred_check_branch
    %112 = sbr.rel (0) target = $region81
  $region80: #{model_forward.1} parent=0 // pred_region
    _
  $region81: #{model_forward.1} parent=0 // pred_fallthru
    _
  // Predicated region
  $region82: #{model_forward.1} parent=0 // pred_check
    _
  $region83: #{model_forward.1} parent=0 // pred_check_branch
    %114 = sbr.rel (0) target = $region85
  $region84: #{model_forward.1} parent=0 // pred_region
    _
  $region85: #{model_forward.1} parent=0 // pred_fallthru
    _
  // Predicated region
  $region86: #{model_forward.1} parent=0 // pred_check
    _
  $region87: #{model_forward.1} parent=0 // pred_check_branch
    %116 = sbr.rel (0) target = $region89
  $region88: #{model_forward.1} parent=0 // pred_region
    _
  $region89: #{model_forward.1} parent=0 // pred_fallthru
    _
  // Predicated region
  $region90: #{model_forward.1} parent=0 // pred_check
    _
  $region91: #{model_forward.1} parent=0 // pred_check_branch
    %118 = sbr.rel (0) target = $region93
  $region92: #{model_forward.1} parent=0 // pred_region
    _
  $region93: #{model_forward.1} parent=0 // pred_fallthru
    _
  // Predicated region
  $region94: #{model_forward.1} parent=0 // pred_check
    _
  $region95: #{model_forward.1} parent=0 // pred_check_branch
    %120 = sbr.rel (0) target = $region97
  $region96: #{model_forward.1} parent=0 // pred_region
    _
  $region97: #{model_forward.1} parent=0 // pred_fallthru
    _
  // Predicated region
  $region98: #{model_forward.1} parent=0 // pred_check
    _
  $region99: #{model_forward.1} parent=0 // pred_check_branch
    %122 = sbr.rel (0) target = $region101
  $region100: #{model_forward.1} parent=0 // pred_region
    _
  $region101: #{model_forward.1} parent=0 // pred_fallthru
    _
  // Predicated region
  $region102: #{model_forward.1} parent=0 // pred_check
    _
  $region103: #{model_forward.1} parent=0 // pred_check_branch
    %124 = sbr.rel (0) target = $region105
  $region104: #{model_forward.1} parent=0 // pred_region
    _
  $region105: #{model_forward.1} parent=0 // pred_fallthru
    _
  // Predicated region
  $region106: #{model_forward.1} parent=0 // pred_check
    _
  $region107: #{model_forward.1} parent=0 // pred_check_branch
    %126 = sbr.rel (0) target = $region109
  $region108: #{model_forward.1} parent=0 // pred_region
    _
  $region109: #{model_forward.1} parent=0 // pred_fallthru
    _
  // Predicated region
  $region110: #{model_forward.1} parent=0 // pred_check
    _
  $region111: #{model_forward.1} parent=0 // pred_check_branch
    %128 = sbr.rel (0) target = $region113
  $region112: #{model_forward.1} parent=0 // pred_region
    _
  $region113: #{model_forward.1} parent=0 // pred_fallthru
    _
  // Predicated region
  $region114: #{model_forward.1} parent=0 // pred_check
    _
  $region115: #{model_forward.1} parent=0 // pred_check_branch
    %130 = sbr.rel (0) target = $region117
  $region116: #{model_forward.1} parent=0 // pred_region
    _
  $region117: #{model_forward.1} parent=0 // pred_fallthru
    _
  // Predicated region
  $region118: #{model_forward.1} parent=0 // pred_check
    _
  $region119: #{model_forward.1} parent=0 // pred_check_branch
    %132 = sbr.rel (0) target = $region121
  $region120: #{model_forward.1} parent=0 // pred_region
    _
  $region121: #{model_forward.1} parent=0 // pred_fallthru
    _
  // Predicated region
  $region122: #{model_forward.1} parent=0 // pred_check
    _
  $region123: #{model_forward.1} parent=0 // pred_check_branch
    %134 = sbr.rel (0) target = $region125
  $region124: #{model_forward.1} parent=0 // pred_region
    _
  $region125: #{model_forward.1} parent=0 // pred_fallthru
    _
  // Predicated region
  $region126: #{model_forward.1} parent=0 // pred_check
    _
  $region127: #{model_forward.1} parent=0 // pred_check_branch
    %136 = sbr.rel (0) target = $region129
  $region128: #{model_forward.1} parent=0 // pred_region
    _
  $region129: #{model_forward.1} parent=0 // pred_fallthru
    _
  %v138 = vlaneseq
  %v139 = vand.u32 %v138, 127
  %vm140 = vcmp.lt.s32.totalorder %v139, 17
  %v141 = vsel %vm140, 0.0, -1e+09
  %v142 = vld [vmem:[%s15] sm:$0x1]
  %s143 = scalar_lea.vmem %s15, 1
  %v144 = vld [vmem:[%s143] sm:$0x1]
  %s145 = scalar_lea.vmem %s15, 2
  %v146 = vld [vmem:[%s145] sm:$0x1]
  %s147 = scalar_lea.vmem %s15, 3
  %v148 = vld [vmem:[%s147] sm:$0x1]
  %v149 = vld [vmem:[%s3] sm:$0xff]
  %v150 = vld [vmem:[%s3 + $0x8] sm:$0xff]
  %v151 = vld [vmem:[%s3 + $0x10] sm:$0xff]
  %v152 = vld [vmem:[%s3 + $0x18] sm:$0xff]
  %v153 = vld [vmem:[%s3 + $0x20] sm:$0xff]
  %v154 = vld [vmem:[%s3 + $0x28] sm:$0xff]
  %vm155 = vcmp.gt.f32.partialorder %v149, 0.5
  %vm156 = vcmp.gt.f32.partialorder %v150, 0.5
  %vm157 = vcmp.gt.f32.partialorder %v151, 0.5
  %vm158 = vcmp.gt.f32.partialorder %v152, 0.5
  %vm159 = vcmp.gt.f32.partialorder %v153, 0.5
  %vm160 = vcmp.gt.f32.partialorder %v154, 0.5
  %v161 = vld [vmem:[%s9] sm:$0x1]
  %v162 = vld [vmem:[%s1] sm:$0xff]
  %v163 = vld [vmem:[%s1 + $0x8] sm:$0xff]
  %v164 = vld [vmem:[%s1 + $0x10] sm:$0xff]
  %v165 = vld [vmem:[%s1 + $0x18] sm:$0xff]
  %v166 = vld [vmem:[%s1 + $0x20] sm:$0xff]
  %v167 = vld [vmem:[%s1 + $0x28] sm:$0xff]
  %v168 = vsel %vm155, 1, 0
  %v169 = vsel %vm156, 1, 0
  %v170 = vsel %vm157, 1, 0
  %v171 = vsel %vm158, 1, 0
  %v172 = vsel %vm159, 1, 0
  %v173 = vsel %vm160, 1, 0
  %174 = vset.pattern.permute.xlu0 0
  %175 = vperm.xlu0 %174, %v168
  %v176 = vpop.permute.xlu0 %175
  %177 = vset.pattern.permute.xlu0 0
  %178 = vperm.xlu0 %177, %v169
  %v179 = vpop.permute.xlu0 %178
  %180 = vset.pattern.permute.xlu0 0
  %181 = vperm.xlu0 %180, %v170
  %v182 = vpop.permute.xlu0 %181
  %183 = vset.pattern.permute.xlu0 0
  %184 = vperm.xlu0 %183, %v171
  %v185 = vpop.permute.xlu0 %184
  %186 = vset.pattern.permute.xlu0 0
  %187 = vperm.xlu0 %186, %v172
  %v188 = vpop.permute.xlu0 %187
  %189 = vset.pattern.permute.xlu0 0
  %190 = vperm.xlu0 %189, %v173
  %v191 = vpop.permute.xlu0 %190
  %vm192 = vcmp.eq.s32.totalorder %v176, 1
  %vm193 = vcmp.eq.s32.totalorder %v179, 1
  %vm194 = vcmp.eq.s32.totalorder %v182, 1
  %vm195 = vcmp.eq.s32.totalorder %v185, 1
  %vm196 = vcmp.eq.s32.totalorder %v188, 1
  %vm197 = vcmp.eq.s32.totalorder %v191, 1
  %v199 = vlaneseq
  %v200 = vshrl.u32 %v199, 7
  %v201 = vsub.s32 0, %v200
  %v202 = vrot.slane %v161, %v201
  %v204 = vsel %vm192, %v202, %v162
  %v205 = vsel %vm193, %v202, %v163
  %v206 = vsel %vm194, %v202, %v164
  %v207 = vsel %vm195, %v202, %v165
  %v208 = vsel %vm196, %v202, %v166
  %v209 = vsel %vm197, %v202, %v167
  %v210 = vpack.c.bf16 %v205, %v204
  %v211 = vpack.c.bf16 %v207, %v206
  %v212 = vpack.c.bf16 %v209, %v208
  %v213 = vld [vmem:[%s11] sm:$0xf]
  %v214 = vld [vmem:[%s11 + $0x4] sm:$0xf]
  %v215 = vld [vmem:[%s11 + $0x8] sm:$0xf]
  %v216 = vld [vmem:[%s11 + $0xc] sm:$0xf]
  %v217 = vld [vmem:[%s11 + $0x10] sm:$0xf]
  %v218 = vld [vmem:[%s11 + $0x14] sm:$0xf]
  %v219 = vld [vmem:[%s13] sm:$0x1]
  %v221 = vlaneseq
  %v222 = vshrl.u32 %v221, 7
  %v223 = vsub.s32 0, %v222
  %v224 = vrot.slane %v219, %v223
  %v232 = vunpack.c.l.b16 %v213
  %v233 = vunpack.c.l.b16 %v214
  %v234 = vunpack.c.l.b16 %v215
  %v235 = vunpack.c.l.b16 %v216
  %v236 = vunpack.c.l.b16 %v217
  %v237 = vunpack.c.l.b16 %v218
  %v238 = vpack.c.b16 %v233, %v232
  %v239 = vpack.c.b16 %v235, %v234
  %v240 = vpack.c.b16 %v237, %v236
  %vm244 = vcmask 392192
  %v246 = vsel %vm244, %v210, 0
  %v249 = vsel %vm244, %v211, 0
  %v252 = vsel %vm244, %v212, 0
  %254 = vmatprep.subr.bf16.mxu0 0
  %255 = vmatpush1.bf16.msra.mxu0 0
  %256 = vmatprep.subr.bf16.mxu0 0
  %257 = vmatpush1.bf16.msra.mxu0 0
  %258 = vmatprep.subr.bf16.mxu0 0
  %259 = vmatpush1.bf16.msra.mxu0 0
  %260 = vmatprep.subr.bf16.mxu0 0
  %261 = vmatpush1.bf16.msra.mxu0 0
  %262 = vmatprep.subr.bf16.mxu0 0
  %263 = vmatpush1.bf16.msra.mxu0 0
  %264 = vmatprep.subr.bf16.mxu0 0
  %265 = vmatpush1.bf16.msra.mxu0 %v240
  %266 = vmatprep.subr.bf16.mxu0 0
  %267 = vmatpush1.bf16.msra.mxu0 %v239
  %268 = vmatprep.subr.bf16.mxu0 0
  %269 = vmatpush1.bf16.msra.mxu0 %v238
  %270 = vmatprep.subr.bf16.mxu0 0
  %271 = vmatpush2.bf16.msra.mxu0 0
  %272 = vmatprep.subr.bf16.mxu0 0
  %273 = vmatpush2.bf16.msra.mxu0 0
  %274 = vmatprep.subr.bf16.mxu0 0
  %275 = vmatpush2.bf16.msra.mxu0 0
  %276 = vmatprep.subr.bf16.mxu0 0
  %277 = vmatpush2.bf16.msra.mxu0 0
  %278 = vmatprep.subr.bf16.mxu0 0
  %279 = vmatpush2.bf16.msra.mxu0 0
  %280 = vmatprep.subr.bf16.mxu0 0
  %281 = vmatpush2.bf16.msra.mxu0 0
  %282 = vmatprep.subr.bf16.mxu0 0
  %283 = vmatpush2.bf16.msra.mxu0 0
  %284 = vmatprep.subr.bf16.mxu0 0
  %285 = vmatpush2.bf16.msra.mxu0 0
  %286 = vmatprep.mubr.bf16.mxu0 0
  %287 = vmatmul.mubr.bf16.gmra.mxu0 %v246
  %v288 = vpop.f32.mrf.mxu0
  %v289 = vadd.f32 %v224, %v288
  %v290 = vpop.f32.mrf.mxu0
  %v291 = vpop.f32.mrf.mxu0
  %v292 = vadd.f32 %v224, %v291
  %v293 = vpop.f32.mrf.mxu0
  %294 = vmatprep.mubr.bf16.mxu0 0
  %295 = vmatmul.mubr.bf16.gmra.mxu0 %v249
  %v296 = vpop.f32.mrf.mxu0
  %v297 = vadd.f32 %v224, %v296
  %v298 = vpop.f32.mrf.mxu0
  %v299 = vpop.f32.mrf.mxu0
  %v300 = vadd.f32 %v224, %v299
  %v301 = vpop.f32.mrf.mxu0
  %302 = vmatprep.mubr.bf16.mxu0 0
  %303 = vmatmul.mubr.bf16.gmra.mxu0 %v252
  %v304 = vpop.f32.mrf.mxu0
  %v305 = vadd.f32 %v224, %v304
  %v306 = vpop.f32.mrf.mxu0
  %v307 = vpop.f32.mrf.mxu0
  %v308 = vadd.f32 %v224, %v307
  %v309 = vpop.f32.mrf.mxu0
  %310 = vdwg.mxu0
  %v311 = vld [vmem:[%s5] sm:$0xff]
  %v312 = vld [vmem:[%s5 + $0x8] sm:$0xff]
  %v313 = vld [vmem:[%s5 + $0x10] sm:$0xff]
  %v314 = vld [vmem:[%s5 + $0x18] sm:$0xff]
  %v315 = vld [vmem:[%s5 + $0x20] sm:$0xff]
  %v316 = vld [vmem:[%s5 + $0x28] sm:$0xff]
  %318 = vset.pattern.permute.xlu0 0
  %319 = vperm.xlu0 %318, %v311
  %v320 = vpop.permute.xlu0 %319
  %323 = vset.pattern.permute.xlu0 0
  %324 = vperm.xlu0 %323, %v312
  %v325 = vpop.permute.xlu0 %324
  %328 = vset.pattern.permute.xlu0 0
  %329 = vperm.xlu0 %328, %v313
  %v330 = vpop.permute.xlu0 %329
  %333 = vset.pattern.permute.xlu0 0
  %334 = vperm.xlu0 %333, %v314
  %v335 = vpop.permute.xlu0 %334
  %338 = vset.pattern.permute.xlu0 0
  %339 = vperm.xlu0 %338, %v315
  %v340 = vpop.permute.xlu0 %339
  %343 = vset.pattern.permute.xlu0 0
  %344 = vperm.xlu0 %343, %v316
  %v345 = vpop.permute.xlu0 %344
  %v347 = vmul.f32 %v320, %v289
  %v348 = vmul.f32 %v325, %v292
  %v349 = vmul.f32 %v330, %v297
  %v350 = vmul.f32 %v335, %v300
  %v351 = vmul.f32 %v340, %v305
  %v352 = vmul.f32 %v345, %v308
  %v353 = vld [vmem:[%s7] sm:$0xff]
  %v354 = vld [vmem:[%s7 + $0x8] sm:$0xff]
  %v355 = vld [vmem:[%s7 + $0x10] sm:$0xff]
  %v356 = vld [vmem:[%s7 + $0x18] sm:$0xff]
  %v357 = vld [vmem:[%s7 + $0x20] sm:$0xff]
  %v358 = vld [vmem:[%s7 + $0x28] sm:$0xff]
  %v359 = vadd.f32 %v347, %v353
  %v360 = vadd.f32 %v348, %v354
  %v361 = vadd.f32 %v349, %v355
  %v362 = vadd.f32 %v350, %v356
  %v363 = vadd.f32 %v351, %v357
  %v364 = vadd.f32 %v352, %v358
  %v365 = vld [vmem:[%s17] sm:$0x1]
  %v366 = vld [vmem:[%s19] sm:$0x1]
  %vm367 = vcmask 261120
  %v368 = vsel %vm367, %v359, 0.0
  %369 = vadd.xlane.f32.xlu0 %v368
  %v370 = vpop.xlane.xlu0 %369
  %v371 = vsel %vm367, %v360, 0.0
  %372 = vadd.xlane.f32.xlu0 %v371
  %v373 = vpop.xlane.xlu0 %372
  %v374 = vsel %vm367, %v361, 0.0
  %375 = vadd.xlane.f32.xlu0 %v374
  %v376 = vpop.xlane.xlu0 %375
  %v377 = vsel %vm367, %v362, 0.0
  %378 = vadd.xlane.f32.xlu0 %v377
  %v379 = vpop.xlane.xlu0 %378
  %v380 = vsel %vm367, %v363, 0.0
  %381 = vadd.xlane.f32.xlu0 %v380
  %v382 = vpop.xlane.xlu0 %381
  %v383 = vsel %vm367, %v364, 0.0
  %384 = vadd.xlane.f32.xlu0 %v383
  %v385 = vpop.xlane.xlu0 %384
  %v386 = vrcp.pop 32.0
  %v387 = vmul.f32 %v370, %v386
  %v388 = vmul.f32 %v373, %v386
  %v389 = vmul.f32 %v376, %v386
  %v390 = vmul.f32 %v379, %v386
  %v391 = vmul.f32 %v382, %v386
  %v392 = vmul.f32 %v385, %v386
  %v393 = vsub.f32 %v359, %v387
  %v394 = vsub.f32 %v360, %v388
  %v395 = vsub.f32 %v361, %v389
  %v396 = vsub.f32 %v362, %v390
  %v397 = vsub.f32 %v363, %v391
  %v398 = vsub.f32 %v364, %v392
  %v399 = vmul.f32 %v393, %v393
  %v400 = vmul.f32 %v394, %v394
  %v401 = vmul.f32 %v395, %v395
  %v402 = vmul.f32 %v396, %v396
  %v403 = vmul.f32 %v397, %v397
  %v404 = vmul.f32 %v398, %v398
  %v405 = vsel %vm367, %v399, 0.0
  %406 = vadd.xlane.f32.xlu0 %v405
  %v407 = vpop.xlane.xlu0 %406
  %v408 = vsel %vm367, %v400, 0.0
  %409 = vadd.xlane.f32.xlu0 %v408
  %v410 = vpop.xlane.xlu0 %409
  %v411 = vsel %vm367, %v401, 0.0
  %412 = vadd.xlane.f32.xlu0 %v411
  %v413 = vpop.xlane.xlu0 %412
  %v414 = vsel %vm367, %v402, 0.0
  %415 = vadd.xlane.f32.xlu0 %v414
  %v416 = vpop.xlane.xlu0 %415
  %v417 = vsel %vm367, %v403, 0.0
  %418 = vadd.xlane.f32.xlu0 %v417
  %v419 = vpop.xlane.xlu0 %418
  %v420 = vsel %vm367, %v404, 0.0
  %421 = vadd.xlane.f32.xlu0 %v420
  %v422 = vpop.xlane.xlu0 %421
  %v423 = vmul.f32 %v407, %v386
  %v424 = vmul.f32 %v410, %v386
  %v425 = vmul.f32 %v413, %v386
  %v426 = vmul.f32 %v416, %v386
  %v427 = vmul.f32 %v419, %v386
  %v428 = vmul.f32 %v422, %v386
  %v429 = vadd.f32 %v423, 1e-05
  %v430 = vadd.f32 %v424, 1e-05
  %v431 = vadd.f32 %v425, 1e-05
  %v432 = vadd.f32 %v426, 1e-05
  %v433 = vadd.f32 %v427, 1e-05
  %v434 = vadd.f32 %v428, 1e-05
  %v435 = vrsqrt.pop %v429
  %v436 = vrsqrt.pop %v430
  %v437 = vrsqrt.pop %v431
  %v438 = vrsqrt.pop %v432
  %v439 = vrsqrt.pop %v433
  %v440 = vrsqrt.pop %v434
  %v441 = vmul.f32 %v393, %v435
  %v442 = vmul.f32 %v394, %v436
  %v443 = vmul.f32 %v395, %v437
  %v444 = vmul.f32 %v396, %v438
  %v445 = vmul.f32 %v397, %v439
  %v446 = vmul.f32 %v398, %v440
  %v448 = vlaneseq
  %v449 = vshrl.u32 %v448, 7
  %v450 = vsub.s32 0, %v449
  %v451 = vrot.slane %v365, %v450
  %v453 = vmul.f32 %v441, %v451
  %v454 = vmul.f32 %v442, %v451
  %v455 = vmul.f32 %v443, %v451
  %v456 = vmul.f32 %v444, %v451
  %v457 = vmul.f32 %v445, %v451
  %v458 = vmul.f32 %v446, %v451
  %v460 = vlaneseq
  %v461 = vshrl.u32 %v460, 7
  %v462 = vsub.s32 0, %v461
  %v463 = vrot.slane %v366, %v462
  %v465 = vadd.f32 %v453, %v463
  %v466 = vadd.f32 %v454, %v463
  %v467 = vadd.f32 %v455, %v463
  %v468 = vadd.f32 %v456, %v463
  %v469 = vadd.f32 %v457, %v463
  %v470 = vadd.f32 %v458, %v463
  %v471 = vpack.c.bf16 %v466, %v465
  %v472 = vpack.c.bf16 %v468, %v467
  %v473 = vpack.c.bf16 %v470, %v469
  %v474 = vld [vmem:[%s21] sm:$0xf]
  %v475 = vld [vmem:[%s21 + $0x4] sm:$0xf]
  %v476 = vld [vmem:[%s21 + $0x8] sm:$0xf]
  %v477 = vld [vmem:[%s21 + $0xc] sm:$0xf]
  %v478 = vld [vmem:[%s23] sm:$0x1]
  %v480 = vlaneseq
  %v481 = vshrl.u32 %v480, 7
  %v482 = vsub.s32 0, %v481
  %v483 = vrot.slane %v478, %v482
  %v489 = vunpack.c.l.b16 %v474
  %v490 = vunpack.c.l.b16 %v475
  %v491 = vunpack.c.l.b16 %v476
  %v492 = vunpack.c.l.b16 %v477
  %v493 = vpack.c.b16 %v490, %v489
  %v494 = vpack.c.b16 %v492, %v491
  %v498 = vsel %vm367, %v471, 0
  %v501 = vsel %vm367, %v472, 0
  %v504 = vsel %vm367, %v473, 0
  %506 = vmatprep.subr.bf16.mxu0 0
  %507 = vmatpush1.bf16.msra.mxu0 0
  %508 = vmatprep.subr.bf16.mxu0 0
  %509 = vmatpush1.bf16.msra.mxu0 0
  %510 = vmatprep.subr.bf16.mxu0 0
  %511 = vmatpush1.bf16.msra.mxu0 0
  %512 = vmatprep.subr.bf16.mxu0 0
  %513 = vmatpush1.bf16.msra.mxu0 0
  %514 = vmatprep.subr.bf16.mxu0 0
  %515 = vmatpush1.bf16.msra.mxu0 0
  %516 = vmatprep.subr.bf16.mxu0 0
  %517 = vmatpush1.bf16.msra.mxu0 0
  %518 = vmatprep.subr.bf16.mxu0 0
  %519 = vmatpush1.bf16.msra.mxu0 %v494
  %520 = vmatprep.subr.bf16.mxu0 0
  %521 = vmatpush1.bf16.msra.mxu0 %v493
  %522 = vmatprep.subr.bf16.mxu0 0
  %523 = vmatpush2.bf16.msra.mxu0 0
  %524 = vmatprep.subr.bf16.mxu0 0
  %525 = vmatpush2.bf16.msra.mxu0 0
  %526 = vmatprep.subr.bf16.mxu0 0
  %527 = vmatpush2.bf16.msra.mxu0 0
  %528 = vmatprep.subr.bf16.mxu0 0
  %529 = vmatpush2.bf16.msra.mxu0 0
  %530 = vmatprep.subr.bf16.mxu0 0
  %531 = vmatpush2.bf16.msra.mxu0 0
  %532 = vmatprep.subr.bf16.mxu0 0
  %533 = vmatpush2.bf16.msra.mxu0 0
  %534 = vmatprep.subr.bf16.mxu0 0
  %535 = vmatpush2.bf16.msra.mxu0 0
  %536 = vmatprep.subr.bf16.mxu0 0
  %537 = vmatpush2.bf16.msra.mxu0 0
  %538 = vmatprep.mubr.bf16.mxu0 0
  %539 = vmatmul.mubr.bf16.gmra.mxu0 %v498
  %v540 = vpop.f32.mrf.mxu0
  %v541 = vadd.f32 %v483, %v540
  %v542 = vpop.f32.mrf.mxu0
  %v543 = vpop.f32.mrf.mxu0
  %v544 = vadd.f32 %v483, %v543
  %v545 = vpop.f32.mrf.mxu0
  %546 = vmatprep.mubr.bf16.mxu0 0
  %547 = vmatmul.mubr.bf16.gmra.mxu0 %v501
  %v548 = vpop.f32.mrf.mxu0
  %v549 = vadd.f32 %v483, %v548
  %v550 = vpop.f32.mrf.mxu0
  %v551 = vpop.f32.mrf.mxu0
  %v552 = vadd.f32 %v483, %v551
  %v553 = vpop.f32.mrf.mxu0
  %554 = vmatprep.mubr.bf16.mxu0 0
  %555 = vmatmul.mubr.bf16.gmra.mxu0 %v504
  %v556 = vpop.f32.mrf.mxu0
  %v557 = vadd.f32 %v483, %v556
  %v558 = vpop.f32.mrf.mxu0
  %v559 = vpop.f32.mrf.mxu0
  %v560 = vadd.f32 %v483, %v559
  %v561 = vpop.f32.mrf.mxu0
  %562 = vdwg.mxu0
  %v563 = vld [vmem:[%s25] sm:$0xf]
  %v564 = vld [vmem:[%s25 + $0x4] sm:$0xf]
  %v565 = vld [vmem:[%s25 + $0x8] sm:$0xf]
  %v566 = vld [vmem:[%s25 + $0xc] sm:$0xf]
  %v567 = vld [vmem:[%s27] sm:$0x1]
  %v569 = vlaneseq
  %v570 = vshrl.u32 %v569, 7
  %v571 = vsub.s32 0, %v570
  %v572 = vrot.slane %v567, %v571
  %v578 = vunpack.c.l.b16 %v563
  %v579 = vunpack.c.l.b16 %v564
  %v580 = vunpack.c.l.b16 %v565
  %v581 = vunpack.c.l.b16 %v566
  %v582 = vpack.c.b16 %v579, %v578
  %v583 = vpack.c.b16 %v581, %v580
  %586 = vmatprep.subr.bf16.mxu0 0
  %587 = vmatpush1.bf16.msra.mxu0 0
  %588 = vmatprep.subr.bf16.mxu0 0
  %589 = vmatpush1.bf16.msra.mxu0 0
  %590 = vmatprep.subr.bf16.mxu0 0
  %591 = vmatpush1.bf16.msra.mxu0 0
  %592 = vmatprep.subr.bf16.mxu0 0
  %593 = vmatpush1.bf16.msra.mxu0 0
  %594 = vmatprep.subr.bf16.mxu0 0
  %595 = vmatpush1.bf16.msra.mxu0 0
  %596 = vmatprep.subr.bf16.mxu0 0
  %597 = vmatpush1.bf16.msra.mxu0 0
  %598 = vmatprep.subr.bf16.mxu0 0
  %599 = vmatpush1.bf16.msra.mxu0 %v583
  %600 = vmatprep.subr.bf16.mxu0 0
  %601 = vmatpush1.bf16.msra.mxu0 %v582
  %602 = vmatprep.subr.bf16.mxu0 0
  %603 = vmatpush2.bf16.msra.mxu0 0
  %604 = vmatprep.subr.bf16.mxu0 0
  %605 = vmatpush2.bf16.msra.mxu0 0
  %606 = vmatprep.subr.bf16.mxu0 0
  %607 = vmatpush2.bf16.msra.mxu0 0
  %608 = vmatprep.subr.bf16.mxu0 0
  %609 = vmatpush2.bf16.msra.mxu0 0
  %610 = vmatprep.subr.bf16.mxu0 0
  %611 = vmatpush2.bf16.msra.mxu0 0
  %612 = vmatprep.subr.bf16.mxu0 0
  %613 = vmatpush2.bf16.msra.mxu0 0
  %614 = vmatprep.subr.bf16.mxu0 0
  %615 = vmatpush2.bf16.msra.mxu0 0
  %616 = vmatprep.subr.bf16.mxu0 0
  %617 = vmatpush2.bf16.msra.mxu0 0
  %618 = vmatprep.mubr.bf16.mxu0 0
  %619 = vmatmul.mubr.bf16.gmra.mxu0 %v498
  %v620 = vpop.f32.mrf.mxu0
  %v621 = vadd.f32 %v572, %v620
  %v622 = vpop.f32.mrf.mxu0
  %v623 = vpop.f32.mrf.mxu0
  %v624 = vadd.f32 %v572, %v623
  %v625 = vpop.f32.mrf.mxu0
  %626 = vmatprep.mubr.bf16.mxu0 0
  %627 = vmatmul.mubr.bf16.gmra.mxu0 %v501
  %v628 = vpop.f32.mrf.mxu0
  %v629 = vadd.f32 %v572, %v628
  %v630 = vpop.f32.mrf.mxu0
  %v631 = vpop.f32.mrf.mxu0
  %v632 = vadd.f32 %v572, %v631
  %v633 = vpop.f32.mrf.mxu0
  %634 = vmatprep.mubr.bf16.mxu0 0
  %635 = vmatmul.mubr.bf16.gmra.mxu0 %v504
  %v636 = vpop.f32.mrf.mxu0
  %v637 = vadd.f32 %v572, %v636
  %v638 = vpop.f32.mrf.mxu0
  %v639 = vpop.f32.mrf.mxu0
  %v640 = vadd.f32 %v572, %v639
  %v641 = vpop.f32.mrf.mxu0
  %642 = vdwg.mxu0
  %v643 = vld [vmem:[%s29] sm:$0xf]
  %v644 = vld [vmem:[%s29 + $0x4] sm:$0xf]
  %v645 = vld [vmem:[%s29 + $0x8] sm:$0xf]
  %v646 = vld [vmem:[%s29 + $0xc] sm:$0xf]
  %v647 = vld [vmem:[%s31] sm:$0x1]
  %v649 = vlaneseq
  %v650 = vshrl.u32 %v649, 7
  %v651 = vsub.s32 0, %v650
  %v652 = vrot.slane %v647, %v651
  %v658 = vunpack.c.l.b16 %v643
  %v659 = vunpack.c.l.b16 %v644
  %v660 = vunpack.c.l.b16 %v645
  %v661 = vunpack.c.l.b16 %v646
  %v662 = vpack.c.b16 %v659, %v658
  %v663 = vpack.c.b16 %v661, %v660
  %666 = vmatprep.subr.bf16.mxu0 0
  %667 = vmatpush1.bf16.msra.mxu0 0
  %668 = vmatprep.subr.bf16.mxu0 0
  %669 = vmatpush1.bf16.msra.mxu0 0
  %670 = vmatprep.subr.bf16.mxu0 0
  %671 = vmatpush1.bf16.msra.mxu0 0
  %672 = vmatprep.subr.bf16.mxu0 0
  %673 = vmatpush1.bf16.msra.mxu0 0
  %674 = vmatprep.subr.bf16.mxu0 0
  %675 = vmatpush1.bf16.msra.mxu0 0
  %676 = vmatprep.subr.bf16.mxu0 0
  %677 = vmatpush1.bf16.msra.mxu0 0
  %678 = vmatprep.subr.bf16.mxu0 0
  %679 = vmatpush1.bf16.msra.mxu0 %v663
  %680 = vmatprep.subr.bf16.mxu0 0
  %681 = vmatpush1.bf16.msra.mxu0 %v662
  %682 = vmatprep.subr.bf16.mxu0 0
  %683 = vmatpush2.bf16.msra.mxu0 0
  %684 = vmatprep.subr.bf16.mxu0 0
  %685 = vmatpush2.bf16.msra.mxu0 0
  %686 = vmatprep.subr.bf16.mxu0 0
  %687 = vmatpush2.bf16.msra.mxu0 0
  %688 = vmatprep.subr.bf16.mxu0 0
  %689 = vmatpush2.bf16.msra.mxu0 0
  %690 = vmatprep.subr.bf16.mxu0 0
  %691 = vmatpush2.bf16.msra.mxu0 0
  %692 = vmatprep.subr.bf16.mxu0 0
  %693 = vmatpush2.bf16.msra.mxu0 0
  %694 = vmatprep.subr.bf16.mxu0 0
  %695 = vmatpush2.bf16.msra.mxu0 0
  %696 = vmatprep.subr.bf16.mxu0 0
  %697 = vmatpush2.bf16.msra.mxu0 0
  %698 = vmatprep.mubr.bf16.mxu0 0
  %699 = vmatmul.mubr.bf16.gmra.mxu0 %v498
  %v700 = vpop.f32.mrf.mxu0
  %v701 = vadd.f32 %v652, %v700
  %v702 = vpop.f32.mrf.mxu0
  %v703 = vpop.f32.mrf.mxu0
  %v704 = vadd.f32 %v652, %v703
  %v705 = vpop.f32.mrf.mxu0
  %706 = vmatprep.mubr.bf16.mxu0 0
  %707 = vmatmul.mubr.bf16.gmra.mxu0 %v501
  %v708 = vpop.f32.mrf.mxu0
  %v709 = vadd.f32 %v652, %v708
  %v710 = vpop.f32.mrf.mxu0
  %v711 = vpop.f32.mrf.mxu0
  %v712 = vadd.f32 %v652, %v711
  %v713 = vpop.f32.mrf.mxu0
  %714 = vmatprep.mubr.bf16.mxu0 0
  %715 = vmatmul.mubr.bf16.gmra.mxu0 %v504
  %v716 = vpop.f32.mrf.mxu0
  %v717 = vadd.f32 %v652, %v716
  %v718 = vpop.f32.mrf.mxu0
  %v719 = vpop.f32.mrf.mxu0
  %v720 = vadd.f32 %v652, %v719
  %v721 = vpop.f32.mrf.mxu0
  %722 = vdwg.mxu0
  %v723 = vpack.c.bf16 %v544, %v541
  %v724 = vpack.c.bf16 %v552, %v549
  %v725 = vpack.c.bf16 %v560, %v557
  %v726 = vpack.c.bf16 %v624, %v621
  %v727 = vpack.c.bf16 %v632, %v629
  %v728 = vpack.c.bf16 %v640, %v637
  %v729 = vpack.c.bf16 %v704, %v701
  %v730 = vpack.c.bf16 %v712, %v709
  %v731 = vpack.c.bf16 %v720, %v717
  %v733 = vpack.i.b16 %v142, %v142
  %v735 = vlaneseq
  %v736 = vshrl.u32 %v735, 7
  %v737 = vsub.s32 0, %v736
  %v738 = vrot.slane %v733, %v737
  %v739 = vmul.bf16 %v726, %v738
  %v740 = vmul.bf16 %v727, %v738
  %v741 = vmul.bf16 %v729, %v738
  %v742 = vmul.bf16 %v730, %v738
  %v744 = vsel %vm367, %v723, 0
  %v747 = vsel %vm367, %v724, 0
  %v750 = vsel %vm367, %v739, 0
  %v753 = vsel %vm367, %v740, 0
  %755 = vmatprep.subr.bf16.mxu0 0
  %756 = vmatpush1.bf16.xpose.msra.mxu0 0
  %757 = vmatprep.subr.bf16.mxu0 0
  %758 = vmatpush1.bf16.xpose.msra.mxu0 0
  %759 = vmatprep.subr.bf16.mxu0 0
  %760 = vmatpush1.bf16.xpose.msra.mxu0 0
  %761 = vmatprep.subr.bf16.mxu0 0
  %762 = vmatpush1.bf16.xpose.msra.mxu0 0
  %763 = vmatprep.subr.bf16.mxu0 0
  %764 = vmatpush1.bf16.xpose.msra.mxu0 0
  %765 = vmatprep.subr.bf16.mxu0 0
  %766 = vmatpush1.bf16.xpose.msra.mxu0 0
  %767 = vmatprep.subr.bf16.mxu0 0
  %768 = vmatpush1.bf16.xpose.msra.mxu0 %v753
  %769 = vmatprep.subr.bf16.mxu0 0
  %770 = vmatpush1.bf16.xpose.msra.mxu0 %v750
  %771 = vmatprep.subr.bf16.mxu0 0
  %772 = vmatpush2.bf16.xpose.msra.mxu0 0
  %773 = vmatprep.subr.bf16.mxu0 0
  %774 = vmatpush2.bf16.xpose.msra.mxu0 0
  %775 = vmatprep.subr.bf16.mxu0 0
  %776 = vmatpush2.bf16.xpose.msra.mxu0 0
  %777 = vmatprep.subr.bf16.mxu0 0
  %778 = vmatpush2.bf16.xpose.msra.mxu0 0
  %779 = vmatprep.subr.bf16.mxu0 0
  %780 = vmatpush2.bf16.xpose.msra.mxu0 0
  %781 = vmatprep.subr.bf16.mxu0 0
  %782 = vmatpush2.bf16.xpose.msra.mxu0 0
  %783 = vmatprep.subr.bf16.mxu0 0
  %784 = vmatpush2.bf16.xpose.msra.mxu0 0
  %785 = vmatprep.subr.bf16.mxu0 0
  %786 = vmatpush2.bf16.xpose.msra.mxu0 0
  %787 = vmatprep.mubr.bf16.mxu0 0
  %788 = vmatmul.mubr.bf16.gmra.mxu0 %v744
  %v789 = vpop.f32.mrf.mxu0
  %v790 = vadd.f32 %v141, %v789
  %v791 = vpop.f32.mrf.mxu0
  %v792 = vpop.f32.mrf.mxu0
  %v793 = vadd.f32 %v141, %v792
  %v794 = vpop.f32.mrf.mxu0
  %795 = vmatprep.mubr.bf16.mxu0 0
  %796 = vmatmul.mubr.bf16.gmra.mxu0 %v747
  %v797 = vpop.f32.mrf.mxu0
  %v798 = vadd.f32 %v141, %v797
  %v799 = vpop.f32.mrf.mxu0
  %v800 = vpop.f32.mrf.mxu0
  %v801 = vpop.f32.mrf.mxu0
  %802 = vdwg.mxu0
  %vm803 = vcmask 195584
  %v804 = vsel %vm803, %v790, -inf
  %805 = vmax.xlane.f32.xlu0 %v804
  %v806 = vpop.xlane.xlu0 %805
  %v807 = vsel %vm803, %v793, -inf
  %808 = vmax.xlane.f32.xlu0 %v807
  %v809 = vpop.xlane.xlu0 %808
  %v810 = vsel %vm803, %v798, -inf
  %811 = vmax.xlane.f32.xlu0 %v810
  %v812 = vpop.xlane.xlu0 %811
  %v813 = vsub.f32 %v790, %v806
  %v814 = vsub.f32 %v793, %v809
  %v815 = vsub.f32 %v798, %v812
  %v816 = vmul.f32 %v813, 1.442695
  %v817 = vpow.pop %v816
  %v818 = vmul.f32 %v814, 1.442695
  %v819 = vpow.pop %v818
  %v820 = vmul.f32 %v815, 1.442695
  %v821 = vpow.pop %v820
  %v822 = vsel %vm803, %v817, 0.0
  %823 = vadd.xlane.f32.xlu0 %v822
  %v824 = vpop.xlane.xlu0 %823
  %v825 = vsel %vm803, %v819, 0.0
  %826 = vadd.xlane.f32.xlu0 %v825
  %v827 = vpop.xlane.xlu0 %826
  %v828 = vsel %vm803, %v821, 0.0
  %829 = vadd.xlane.f32.xlu0 %v828
  %v830 = vpop.xlane.xlu0 %829
  %v831 = vrcp.pop %v824
  %v832 = vrcp.pop %v827
  %v833 = vrcp.pop %v830
  %v834 = vmul.f32 %v817, %v831
  %v835 = vmul.f32 %v819, %v832
  %v836 = vmul.f32 %v821, %v833
  %v837 = vpack.c.bf16 %v835, %v834
  %v838 = vpack.c.bf16 %v836, %v836
  %v840 = vpack.i.b16 %v144, %v144
  %v842 = vlaneseq
  %v843 = vshrl.u32 %v842, 7
  %v844 = vsub.s32 0, %v843
  %v845 = vrot.slane %v840, %v844
  %v846 = vmul.bf16 %v726, %v845
  %v847 = vmul.bf16 %v727, %v845
  %v848 = vmul.bf16 %v729, %v845
  %v849 = vmul.bf16 %v730, %v845
  %v851 = vsel %vm367, %v846, 0
  %v854 = vsel %vm367, %v847, 0
  %856 = vmatprep.subr.bf16.mxu0 0
  %857 = vmatpush1.bf16.xpose.msra.mxu0 0
  %858 = vmatprep.subr.bf16.mxu0 0
  %859 = vmatpush1.bf16.xpose.msra.mxu0 0
  %860 = vmatprep.subr.bf16.mxu0 0
  %861 = vmatpush1.bf16.xpose.msra.mxu0 0
  %862 = vmatprep.subr.bf16.mxu0 0
  %863 = vmatpush1.bf16.xpose.msra.mxu0 0
  %864 = vmatprep.subr.bf16.mxu0 0
  %865 = vmatpush1.bf16.xpose.msra.mxu0 0
  %866 = vmatprep.subr.bf16.mxu0 0
  %867 = vmatpush1.bf16.xpose.msra.mxu0 0
  %868 = vmatprep.subr.bf16.mxu0 0
  %869 = vmatpush1.bf16.xpose.msra.mxu0 %v854
  %870 = vmatprep.subr.bf16.mxu0 0
  %871 = vmatpush1.bf16.xpose.msra.mxu0 %v851
  %872 = vmatprep.subr.bf16.mxu0 0
  %873 = vmatpush2.bf16.xpose.msra.mxu0 0
  %874 = vmatprep.subr.bf16.mxu0 0
  %875 = vmatpush2.bf16.xpose.msra.mxu0 0
  %876 = vmatprep.subr.bf16.mxu0 0
  %877 = vmatpush2.bf16.xpose.msra.mxu0 0
  %878 = vmatprep.subr.bf16.mxu0 0
  %879 = vmatpush2.bf16.xpose.msra.mxu0 0
  %880 = vmatprep.subr.bf16.mxu0 0
  %881 = vmatpush2.bf16.xpose.msra.mxu0 0
  %882 = vmatprep.subr.bf16.mxu0 0
  %883 = vmatpush2.bf16.xpose.msra.mxu0 0
  %884 = vmatprep.subr.bf16.mxu0 0
  %885 = vmatpush2.bf16.xpose.msra.mxu0 0
  %886 = vmatprep.subr.bf16.mxu0 0
  %887 = vmatpush2.bf16.xpose.msra.mxu0 0
  %888 = vmatprep.mubr.bf16.mxu0 0
  %889 = vmatmul.mubr.bf16.gmra.mxu0 %v744
  %v890 = vpop.f32.mrf.mxu0
  %v891 = vadd.f32 %v141, %v890
  %v892 = vpop.f32.mrf.mxu0
  %v893 = vpop.f32.mrf.mxu0
  %v894 = vadd.f32 %v141, %v893
  %v895 = vpop.f32.mrf.mxu0
  %896 = vmatprep.mubr.bf16.mxu0 0
  %897 = vmatmul.mubr.bf16.gmra.mxu0 %v747
  %v898 = vpop.f32.mrf.mxu0
  %v899 = vadd.f32 %v141, %v898
  %v900 = vpop.f32.mrf.mxu0
  %v901 = vpop.f32.mrf.mxu0
  %v902 = vpop.f32.mrf.mxu0
  %903 = vdwg.mxu0
  %v904 = vsel %vm803, %v891, -inf
  %905 = vmax.xlane.f32.xlu0 %v904
  %v906 = vpop.xlane.xlu0 %905
  %v907 = vsel %vm803, %v894, -inf
  %908 = vmax.xlane.f32.xlu0 %v907
  %v909 = vpop.xlane.xlu0 %908
  %v910 = vsel %vm803, %v899, -inf
  %911 = vmax.xlane.f32.xlu0 %v910
  %v912 = vpop.xlane.xlu0 %911
  %v913 = vsub.f32 %v891, %v906
  %v914 = vsub.f32 %v894, %v909
  %v915 = vsub.f32 %v899, %v912
  %v916 = vmul.f32 %v913, 1.442695
  %v917 = vpow.pop %v916
  %v918 = vmul.f32 %v914, 1.442695
  %v919 = vpow.pop %v918
  %v920 = vmul.f32 %v915, 1.442695
  %v921 = vpow.pop %v920
  %v922 = vsel %vm803, %v917, 0.0
  %923 = vadd.xlane.f32.xlu0 %v922
  %v924 = vpop.xlane.xlu0 %923
  %v925 = vsel %vm803, %v919, 0.0
  %926 = vadd.xlane.f32.xlu0 %v925
  %v927 = vpop.xlane.xlu0 %926
  %v928 = vsel %vm803, %v921, 0.0
  %929 = vadd.xlane.f32.xlu0 %v928
  %v930 = vpop.xlane.xlu0 %929
  %v931 = vrcp.pop %v924
  %v932 = vrcp.pop %v927
  %v933 = vrcp.pop %v930
  %v934 = vmul.f32 %v917, %v931
  %v935 = vmul.f32 %v919, %v932
  %v936 = vmul.f32 %v921, %v933
  %v937 = vpack.c.bf16 %v935, %v934
  %v938 = vpack.c.bf16 %v936, %v936
  %v940 = vsel %vm803, %v937, 0
  %v943 = vsel %vm803, %v938, 0
  %vm945 = vcmask 1043456
  %v947 = vsel %vm945, %v849, 0
  %949 = vmatprep.subr.bf16.mxu0 0
  %950 = vmatpush1.bf16.msra.mxu0 0
  %951 = vmatprep.subr.bf16.mxu0 0
  %952 = vmatpush1.bf16.msra.mxu0 0
  %953 = vmatprep.subr.bf16.mxu0 0
  %954 = vmatpush1.bf16.msra.mxu0 0
  %955 = vmatprep.subr.bf16.mxu0 0
  %956 = vmatpush1.bf16.msra.mxu0 0
  %957 = vmatprep.subr.bf16.mxu0 0
  %958 = vmatpush1.bf16.msra.mxu0 0
  %959 = vmatprep.subr.bf16.mxu0 0
  %960 = vmatpush1.bf16.msra.mxu0 0
  %961 = vmatprep.subr.bf16.mxu0 0
  %962 = vmatpush1.bf16.msra.mxu0 %v947
  %963 = vmatprep.subr.bf16.mxu0 0
  %964 = vmatpush1.bf16.msra.mxu0 %v848
  %965 = vmatprep.subr.bf16.mxu0 0
  %966 = vmatpush2.bf16.msra.mxu0 0
  %967 = vmatprep.subr.bf16.mxu0 0
  %968 = vmatpush2.bf16.msra.mxu0 0
  %969 = vmatprep.subr.bf16.mxu0 0
  %970 = vmatpush2.bf16.msra.mxu0 0
  %971 = vmatprep.subr.bf16.mxu0 0
  %972 = vmatpush2.bf16.msra.mxu0 0
  %973 = vmatprep.subr.bf16.mxu0 0
  %974 = vmatpush2.bf16.msra.mxu0 0
  %975 = vmatprep.subr.bf16.mxu0 0
  %976 = vmatpush2.bf16.msra.mxu0 0
  %977 = vmatprep.subr.bf16.mxu0 0
  %978 = vmatpush2.bf16.msra.mxu0 0
  %979 = vmatprep.subr.bf16.mxu0 0
  %980 = vmatpush2.bf16.msra.mxu0 0
  %981 = vmatprep.mubr.bf16.mxu0 0
  %982 = vmatmul.mubr.bf16.gmra.mxu0 %v940
  %v983 = vpop.f32.mrf.mxu0
  %v984 = vadd.f32 0.0, %v983
  %v985 = vpop.f32.mrf.mxu0
  %v986 = vpop.f32.mrf.mxu0
  %v987 = vadd.f32 0.0, %v986
  %v988 = vpop.f32.mrf.mxu0
  %989 = vmatprep.mubr.bf16.mxu0 0
  %990 = vmatmul.mubr.bf16.gmra.mxu0 %v943
  %v991 = vpop.f32.mrf.mxu0
  %v992 = vadd.f32 0.0, %v991
  %v993 = vpop.f32.mrf.mxu0
  %v994 = vpop.f32.mrf.mxu0
  %v995 = vpop.f32.mrf.mxu0
  %996 = vdwg.mxu0
  %v998 = vsel %vm803, %v837, 0
  %v1001 = vsel %vm803, %v838, 0
  %v1004 = vsel %vm945, %v742, 0
  %1006 = vmatprep.subr.bf16.mxu0 0
  %1007 = vmatpush1.bf16.msra.mxu0 0
  %1008 = vmatprep.subr.bf16.mxu0 0
  %1009 = vmatpush1.bf16.msra.mxu0 0
  %1010 = vmatprep.subr.bf16.mxu0 0
  %1011 = vmatpush1.bf16.msra.mxu0 0
  %1012 = vmatprep.subr.bf16.mxu0 0
  %1013 = vmatpush1.bf16.msra.mxu0 0
  %1014 = vmatprep.subr.bf16.mxu0 0
  %1015 = vmatpush1.bf16.msra.mxu0 0
  %1016 = vmatprep.subr.bf16.mxu0 0
  %1017 = vmatpush1.bf16.msra.mxu0 0
  %1018 = vmatprep.subr.bf16.mxu0 0
  %1019 = vmatpush1.bf16.msra.mxu0 %v1004
  %1020 = vmatprep.subr.bf16.mxu0 0
  %1021 = vmatpush1.bf16.msra.mxu0 %v741
  %1022 = vmatprep.subr.bf16.mxu0 0
  %1023 = vmatpush2.bf16.msra.mxu0 0
  %1024 = vmatprep.subr.bf16.mxu0 0
  %1025 = vmatpush2.bf16.msra.mxu0 0
  %1026 = vmatprep.subr.bf16.mxu0 0
  %1027 = vmatpush2.bf16.msra.mxu0 0
  %1028 = vmatprep.subr.bf16.mxu0 0
  %1029 = vmatpush2.bf16.msra.mxu0 0
  %1030 = vmatprep.subr.bf16.mxu0 0
  %1031 = vmatpush2.bf16.msra.mxu0 0
  %1032 = vmatprep.subr.bf16.mxu0 0
  %1033 = vmatpush2.bf16.msra.mxu0 0
  %1034 = vmatprep.subr.bf16.mxu0 0
  %1035 = vmatpush2.bf16.msra.mxu0 0
  %1036 = vmatprep.subr.bf16.mxu0 0
  %1037 = vmatpush2.bf16.msra.mxu0 0
  %1038 = vmatprep.mubr.bf16.mxu0 0
  %1039 = vmatmul.mubr.bf16.gmra.mxu0 %v998
  %v1040 = vpop.f32.mrf.mxu0
  %v1041 = vadd.f32 %v984, %v1040
  %v1042 = vpop.f32.mrf.mxu0
  %v1043 = vpop.f32.mrf.mxu0
  %v1044 = vadd.f32 %v987, %v1043
  %v1045 = vpop.f32.mrf.mxu0
  %1046 = vmatprep.mubr.bf16.mxu0 0
  %1047 = vmatmul.mubr.bf16.gmra.mxu0 %v1001
  %v1048 = vpop.f32.mrf.mxu0
  %v1049 = vadd.f32 %v992, %v1048
  %v1050 = vpop.f32.mrf.mxu0
  %v1051 = vpop.f32.mrf.mxu0
  %v1052 = vpop.f32.mrf.mxu0
  %1053 = vdwg.mxu0
  %v1055 = vpack.i.b16 %v146, %v146
  %v1057 = vlaneseq
  %v1058 = vshrl.u32 %v1057, 7
  %v1059 = vsub.s32 0, %v1058
  %v1060 = vrot.slane %v1055, %v1059
  %v1061 = vmul.bf16 %v726, %v1060
  %v1062 = vmul.bf16 %v727, %v1060
  %v1063 = vmul.bf16 %v729, %v1060
  %v1064 = vmul.bf16 %v730, %v1060
  %v1066 = vsel %vm367, %v1061, 0
  %v1069 = vsel %vm367, %v1062, 0
  %1071 = vmatprep.subr.bf16.mxu0 0
  %1072 = vmatpush1.bf16.xpose.msra.mxu0 0
  %1073 = vmatprep.subr.bf16.mxu0 0
  %1074 = vmatpush1.bf16.xpose.msra.mxu0 0
  %1075 = vmatprep.subr.bf16.mxu0 0
  %1076 = vmatpush1.bf16.xpose.msra.mxu0 0
  %1077 = vmatprep.subr.bf16.mxu0 0
  %1078 = vmatpush1.bf16.xpose.msra.mxu0 0
  %1079 = vmatprep.subr.bf16.mxu0 0
  %1080 = vmatpush1.bf16.xpose.msra.mxu0 0
  %1081 = vmatprep.subr.bf16.mxu0 0
  %1082 = vmatpush1.bf16.xpose.msra.mxu0 0
  %1083 = vmatprep.subr.bf16.mxu0 0
  %1084 = vmatpush1.bf16.xpose.msra.mxu0 %v1069
  %1085 = vmatprep.subr.bf16.mxu0 0
  %1086 = vmatpush1.bf16.xpose.msra.mxu0 %v1066
  %1087 = vmatprep.subr.bf16.mxu0 0
  %1088 = vmatpush2.bf16.xpose.msra.mxu0 0
  %1089 = vmatprep.subr.bf16.mxu0 0
  %1090 = vmatpush2.bf16.xpose.msra.mxu0 0
  %1091 = vmatprep.subr.bf16.mxu0 0
  %1092 = vmatpush2.bf16.xpose.msra.mxu0 0
  %1093 = vmatprep.subr.bf16.mxu0 0
  %1094 = vmatpush2.bf16.xpose.msra.mxu0 0
  %1095 = vmatprep.subr.bf16.mxu0 0
  %1096 = vmatpush2.bf16.xpose.msra.mxu0 0
  %1097 = vmatprep.subr.bf16.mxu0 0
  %1098 = vmatpush2.bf16.xpose.msra.mxu0 0
  %1099 = vmatprep.subr.bf16.mxu0 0
  %1100 = vmatpush2.bf16.xpose.msra.mxu0 0
  %1101 = vmatprep.subr.bf16.mxu0 0
  %1102 = vmatpush2.bf16.xpose.msra.mxu0 0
  %1103 = vmatprep.mubr.bf16.mxu0 0
  %1104 = vmatmul.mubr.bf16.gmra.mxu0 %v744
  %v1105 = vpop.f32.mrf.mxu0
  %v1106 = vadd.f32 %v141, %v1105
  %v1107 = vpop.f32.mrf.mxu0
  %v1108 = vpop.f32.mrf.mxu0
  %v1109 = vadd.f32 %v141, %v1108
  %v1110 = vpop.f32.mrf.mxu0
  %1111 = vmatprep.mubr.bf16.mxu0 0
  %1112 = vmatmul.mubr.bf16.gmra.mxu0 %v747
  %v1113 = vpop.f32.mrf.mxu0
  %v1114 = vadd.f32 %v141, %v1113
  %v1115 = vpop.f32.mrf.mxu0
  %v1116 = vpop.f32.mrf.mxu0
  %v1117 = vpop.f32.mrf.mxu0
  %1118 = vdwg.mxu0
  %v1119 = vsel %vm803, %v1106, -inf
  %1120 = vmax.xlane.f32.xlu0 %v1119
  %v1121 = vpop.xlane.xlu0 %1120
  %v1122 = vsel %vm803, %v1109, -inf
  %1123 = vmax.xlane.f32.xlu0 %v1122
  %v1124 = vpop.xlane.xlu0 %1123
  %v1125 = vsel %vm803, %v1114, -inf
  %1126 = vmax.xlane.f32.xlu0 %v1125
  %v1127 = vpop.xlane.xlu0 %1126
  %v1128 = vsub.f32 %v1106, %v1121
  %v1129 = vsub.f32 %v1109, %v1124
  %v1130 = vsub.f32 %v1114, %v1127
  %v1131 = vmul.f32 %v1128, 1.442695
  %v1132 = vpow.pop %v1131
  %v1133 = vmul.f32 %v1129, 1.442695
  %v1134 = vpow.pop %v1133
  %v1135 = vmul.f32 %v1130, 1.442695
  %v1136 = vpow.pop %v1135
  %v1137 = vsel %vm803, %v1132, 0.0
  %1138 = vadd.xlane.f32.xlu0 %v1137
  %v1139 = vpop.xlane.xlu0 %1138
  %v1140 = vsel %vm803, %v1134, 0.0
  %1141 = vadd.xlane.f32.xlu0 %v1140
  %v1142 = vpop.xlane.xlu0 %1141
  %v1143 = vsel %vm803, %v1136, 0.0
  %1144 = vadd.xlane.f32.xlu0 %v1143
  %v1145 = vpop.xlane.xlu0 %1144
  %v1146 = vrcp.pop %v1139
  %v1147 = vrcp.pop %v1142
  %v1148 = vrcp.pop %v1145
  %v1149 = vmul.f32 %v1132, %v1146
  %v1150 = vmul.f32 %v1134, %v1147
  %v1151 = vmul.f32 %v1136, %v1148
  %v1152 = vpack.c.bf16 %v1150, %v1149
  %v1153 = vpack.c.bf16 %v1151, %v1151
  %v1155 = vsel %vm803, %v1152, 0
  %v1158 = vsel %vm803, %v1153, 0
  %v1161 = vsel %vm945, %v1064, 0
  %1163 = vmatprep.subr.bf16.mxu0 0
  %1164 = vmatpush1.bf16.msra.mxu0 0
  %1165 = vmatprep.subr.bf16.mxu0 0
  %1166 = vmatpush1.bf16.msra.mxu0 0
  %1167 = vmatprep.subr.bf16.mxu0 0
  %1168 = vmatpush1.bf16.msra.mxu0 0
  %1169 = vmatprep.subr.bf16.mxu0 0
  %1170 = vmatpush1.bf16.msra.mxu0 0
  %1171 = vmatprep.subr.bf16.mxu0 0
  %1172 = vmatpush1.bf16.msra.mxu0 0
  %1173 = vmatprep.subr.bf16.mxu0 0
  %1174 = vmatpush1.bf16.msra.mxu0 0
  %1175 = vmatprep.subr.bf16.mxu0 0
  %1176 = vmatpush1.bf16.msra.mxu0 %v1161
  %1177 = vmatprep.subr.bf16.mxu0 0
  %1178 = vmatpush1.bf16.msra.mxu0 %v1063
  %1179 = vmatprep.subr.bf16.mxu0 0
  %1180 = vmatpush2.bf16.msra.mxu0 0
  %1181 = vmatprep.subr.bf16.mxu0 0
  %1182 = vmatpush2.bf16.msra.mxu0 0
  %1183 = vmatprep.subr.bf16.mxu0 0
  %1184 = vmatpush2.bf16.msra.mxu0 0
  %1185 = vmatprep.subr.bf16.mxu0 0
  %1186 = vmatpush2.bf16.msra.mxu0 0
  %1187 = vmatprep.subr.bf16.mxu0 0
  %1188 = vmatpush2.bf16.msra.mxu0 0
  %1189 = vmatprep.subr.bf16.mxu0 0
  %1190 = vmatpush2.bf16.msra.mxu0 0
  %1191 = vmatprep.subr.bf16.mxu0 0
  %1192 = vmatpush2.bf16.msra.mxu0 0
  %1193 = vmatprep.subr.bf16.mxu0 0
  %1194 = vmatpush2.bf16.msra.mxu0 0
  %1195 = vmatprep.mubr.bf16.mxu0 0
  %1196 = vmatmul.mubr.bf16.gmra.mxu0 %v1155
  %v1197 = vpop.f32.mrf.mxu0
  %v1198 = vadd.f32 0.0, %v1197
  %v1199 = vpop.f32.mrf.mxu0
  %v1200 = vpop.f32.mrf.mxu0
  %v1201 = vadd.f32 0.0, %v1200
  %v1202 = vpop.f32.mrf.mxu0
  %1203 = vmatprep.mubr.bf16.mxu0 0
  %1204 = vmatmul.mubr.bf16.gmra.mxu0 %v1158
  %v1205 = vpop.f32.mrf.mxu0
  %v1206 = vadd.f32 0.0, %v1205
  %v1207 = vpop.f32.mrf.mxu0
  %v1208 = vpop.f32.mrf.mxu0
  %v1209 = vpop.f32.mrf.mxu0
  %1210 = vdwg.mxu0
  %v1211 = vadd.f32 %v1041, %v1198
  %v1212 = vadd.f32 %v1044, %v1201
  %v1213 = vadd.f32 %v1049, %v1206
  %v1215 = vpack.i.b16 %v148, %v148
  %v1217 = vlaneseq
  %v1218 = vshrl.u32 %v1217, 7
  %v1219 = vsub.s32 0, %v1218
  %v1220 = vrot.slane %v1215, %v1219
  %v1221 = vmul.bf16 %v726, %v1220
  %v1222 = vmul.bf16 %v727, %v1220
  %v1223 = vmul.bf16 %v729, %v1220
  %v1224 = vmul.bf16 %v730, %v1220
  %v1226 = vsel %vm367, %v1221, 0
  %v1229 = vsel %vm367, %v1222, 0
  %1231 = vmatprep.subr.bf16.mxu0 0
  %1232 = vmatpush1.bf16.xpose.msra.mxu0 0
  %1233 = vmatprep.subr.bf16.mxu0 0
  %1234 = vmatpush1.bf16.xpose.msra.mxu0 0
  %1235 = vmatprep.subr.bf16.mxu0 0
  %1236 = vmatpush1.bf16.xpose.msra.mxu0 0
  %1237 = vmatprep.subr.bf16.mxu0 0
  %1238 = vmatpush1.bf16.xpose.msra.mxu0 0
  %1239 = vmatprep.subr.bf16.mxu0 0
  %1240 = vmatpush1.bf16.xpose.msra.mxu0 0
  %1241 = vmatprep.subr.bf16.mxu0 0
  %1242 = vmatpush1.bf16.xpose.msra.mxu0 0
  %1243 = vmatprep.subr.bf16.mxu0 0
  %1244 = vmatpush1.bf16.xpose.msra.mxu0 %v1229
  %1245 = vmatprep.subr.bf16.mxu0 0
  %1246 = vmatpush1.bf16.xpose.msra.mxu0 %v1226
  %1247 = vmatprep.subr.bf16.mxu0 0
  %1248 = vmatpush2.bf16.xpose.msra.mxu0 0
  %1249 = vmatprep.subr.bf16.mxu0 0
  %1250 = vmatpush2.bf16.xpose.msra.mxu0 0
  %1251 = vmatprep.subr.bf16.mxu0 0
  %1252 = vmatpush2.bf16.xpose.msra.mxu0 0
  %1253 = vmatprep.subr.bf16.mxu0 0
  %1254 = vmatpush2.bf16.xpose.msra.mxu0 0
  %1255 = vmatprep.subr.bf16.mxu0 0
  %1256 = vmatpush2.bf16.xpose.msra.mxu0 0
  %1257 = vmatprep.subr.bf16.mxu0 0
  %1258 = vmatpush2.bf16.xpose.msra.mxu0 0
  %1259 = vmatprep.subr.bf16.mxu0 0
  %1260 = vmatpush2.bf16.xpose.msra.mxu0 0
  %1261 = vmatprep.subr.bf16.mxu0 0
  %1262 = vmatpush2.bf16.xpose.msra.mxu0 0
  %1263 = vmatprep.mubr.bf16.mxu0 0
  %1264 = vmatmul.mubr.bf16.gmra.mxu0 %v744
  %v1265 = vpop.f32.mrf.mxu0
  %v1266 = vadd.f32 %v141, %v1265
  %v1267 = vpop.f32.mrf.mxu0
  %v1268 = vpop.f32.mrf.mxu0
  %v1269 = vadd.f32 %v141, %v1268
  %v1270 = vpop.f32.mrf.mxu0
  %1271 = vmatprep.mubr.bf16.mxu0 0
  %1272 = vmatmul.mubr.bf16.gmra.mxu0 %v747
  %v1273 = vpop.f32.mrf.mxu0
  %v1274 = vadd.f32 %v141, %v1273
  %v1275 = vpop.f32.mrf.mxu0
  %v1276 = vpop.f32.mrf.mxu0
  %v1277 = vpop.f32.mrf.mxu0
  %1278 = vdwg.mxu0
  %v1279 = vsel %vm803, %v1266, -inf
  %1280 = vmax.xlane.f32.xlu0 %v1279
  %v1281 = vpop.xlane.xlu0 %1280
  %v1282 = vsel %vm803, %v1269, -inf
  %1283 = vmax.xlane.f32.xlu0 %v1282
  %v1284 = vpop.xlane.xlu0 %1283
  %v1285 = vsel %vm803, %v1274, -inf
  %1286 = vmax.xlane.f32.xlu0 %v1285
  %v1287 = vpop.xlane.xlu0 %1286
  %v1288 = vsub.f32 %v1266, %v1281
  %v1289 = vsub.f32 %v1269, %v1284
  %v1290 = vsub.f32 %v1274, %v1287
  %v1291 = vmul.f32 %v1288, 1.442695
  %v1292 = vpow.pop %v1291
  %v1293 = vmul.f32 %v1289, 1.442695
  %v1294 = vpow.pop %v1293
  %v1295 = vmul.f32 %v1290, 1.442695
  %v1296 = vpow.pop %v1295
  %v1297 = vsel %vm803, %v1292, 0.0
  %1298 = vadd.xlane.f32.xlu0 %v1297
  %v1299 = vpop.xlane.xlu0 %1298
  %v1300 = vsel %vm803, %v1294, 0.0
  %1301 = vadd.xlane.f32.xlu0 %v1300
  %v1302 = vpop.xlane.xlu0 %1301
  %v1303 = vsel %vm803, %v1296, 0.0
  %1304 = vadd.xlane.f32.xlu0 %v1303
  %v1305 = vpop.xlane.xlu0 %1304
  %v1306 = vrcp.pop %v1299
  %v1307 = vrcp.pop %v1302
  %v1308 = vrcp.pop %v1305
  %v1309 = vmul.f32 %v1292, %v1306
  %v1310 = vmul.f32 %v1294, %v1307
  %v1311 = vmul.f32 %v1296, %v1308
  %v1312 = vpack.c.bf16 %v1310, %v1309
  %v1313 = vpack.c.bf16 %v1311, %v1311
  %v1315 = vsel %vm803, %v1312, 0
  %v1318 = vsel %vm803, %v1313, 0
  %v1321 = vsel %vm945, %v1224, 0
  %1323 = vmatprep.subr.bf16.mxu0 0
  %1324 = vmatpush1.bf16.msra.mxu0 0
  %1325 = vmatprep.subr.bf16.mxu0 0
  %1326 = vmatpush1.bf16.msra.mxu0 0
  %1327 = vmatprep.subr.bf16.mxu0 0
  %1328 = vmatpush1.bf16.msra.mxu0 0
  %1329 = vmatprep.subr.bf16.mxu0 0
  %1330 = vmatpush1.bf16.msra.mxu0 0
  %1331 = vmatprep.subr.bf16.mxu0 0
  %1332 = vmatpush1.bf16.msra.mxu0 0
  %1333 = vmatprep.subr.bf16.mxu0 0
  %1334 = vmatpush1.bf16.msra.mxu0 0
  %1335 = vmatprep.subr.bf16.mxu0 0
  %1336 = vmatpush1.bf16.msra.mxu0 %v1321
  %1337 = vmatprep.subr.bf16.mxu0 0
  %1338 = vmatpush1.bf16.msra.mxu0 %v1223
  %1339 = vmatprep.subr.bf16.mxu0 0
  %1340 = vmatpush2.bf16.msra.mxu0 0
  %1341 = vmatprep.subr.bf16.mxu0 0
  %1342 = vmatpush2.bf16.msra.mxu0 0
  %1343 = vmatprep.subr.bf16.mxu0 0
  %1344 = vmatpush2.bf16.msra.mxu0 0
  %1345 = vmatprep.subr.bf16.mxu0 0
  %1346 = vmatpush2.bf16.msra.mxu0 0
  %1347 = vmatprep.subr.bf16.mxu0 0
  %1348 = vmatpush2.bf16.msra.mxu0 0
  %1349 = vmatprep.subr.bf16.mxu0 0
  %1350 = vmatpush2.bf16.msra.mxu0 0
  %1351 = vmatprep.subr.bf16.mxu0 0
  %1352 = vmatpush2.bf16.msra.mxu0 0
  %1353 = vmatprep.subr.bf16.mxu0 0
  %1354 = vmatpush2.bf16.msra.mxu0 0
  %1355 = vmatprep.mubr.bf16.mxu0 0
  %1356 = vmatmul.mubr.bf16.gmra.mxu0 %v1315
  %v1357 = vpop.f32.mrf.mxu0
  %v1358 = vadd.f32 0.0, %v1357
  %v1359 = vpop.f32.mrf.mxu0
  %v1360 = vpop.f32.mrf.mxu0
  %v1361 = vadd.f32 0.0, %v1360
  %v1362 = vpop.f32.mrf.mxu0
  %1363 = vmatprep.mubr.bf16.mxu0 0
  %1364 = vmatmul.mubr.bf16.gmra.mxu0 %v1318
  %v1365 = vpop.f32.mrf.mxu0
  %v1366 = vadd.f32 0.0, %v1365
  %v1367 = vpop.f32.mrf.mxu0
  %v1368 = vpop.f32.mrf.mxu0
  %v1369 = vpop.f32.mrf.mxu0
  %1370 = vdwg.mxu0
  %v1371 = vadd.f32 %v1211, %v1358
  %v1372 = vadd.f32 %v1212, %v1361
  %v1373 = vadd.f32 %v1213, %v1366
  %v1374 = vmul.bf16 %v728, %v738
  %v1375 = vmul.bf16 %v731, %v738
  %vm1378 = vcmask 1043456
  %v1379 = vrot.slane %v724, 4
  %v1380 = vrot.slane %v725, 4
  %v1381 = vsel %vm1378, %v1379, %v1380
  %v1384 = vrot.slane %v740, 4
  %v1385 = vrot.slane %v1374, 4
  %v1386 = vsel %vm1378, %v1384, %v1385
  %v1388 = vsel %vm367, %v1381, 0
  %v1391 = vsel %vm367, %v1380, 0
  %v1394 = vsel %vm367, %v1386, 0
  %v1397 = vsel %vm367, %v1385, 0
  %1399 = vmatprep.subr.bf16.mxu0 0
  %1400 = vmatpush1.bf16.xpose.msra.mxu0 0
  %1401 = vmatprep.subr.bf16.mxu0 0
  %1402 = vmatpush1.bf16.xpose.msra.mxu0 0
  %1403 = vmatprep.subr.bf16.mxu0 0
  %1404 = vmatpush1.bf16.xpose.msra.mxu0 0
  %1405 = vmatprep.subr.bf16.mxu0 0
  %1406 = vmatpush1.bf16.xpose.msra.mxu0 0
  %1407 = vmatprep.subr.bf16.mxu0 0
  %1408 = vmatpush1.bf16.xpose.msra.mxu0 0
  %1409 = vmatprep.subr.bf16.mxu0 0
  %1410 = vmatpush1.bf16.xpose.msra.mxu0 0
  %1411 = vmatprep.subr.bf16.mxu0 0
  %1412 = vmatpush1.bf16.xpose.msra.mxu0 %v1397
  %1413 = vmatprep.subr.bf16.mxu0 0
  %1414 = vmatpush1.bf16.xpose.msra.mxu0 %v1394
  %1415 = vmatprep.subr.bf16.mxu0 0
  %1416 = vmatpush2.bf16.xpose.msra.mxu0 0
  %1417 = vmatprep.subr.bf16.mxu0 0
  %1418 = vmatpush2.bf16.xpose.msra.mxu0 0
  %1419 = vmatprep.subr.bf16.mxu0 0
  %1420 = vmatpush2.bf16.xpose.msra.mxu0 0
  %1421 = vmatprep.subr.bf16.mxu0 0
  %1422 = vmatpush2.bf16.xpose.msra.mxu0 0
  %1423 = vmatprep.subr.bf16.mxu0 0
  %1424 = vmatpush2.bf16.xpose.msra.mxu0 0
  %1425 = vmatprep.subr.bf16.mxu0 0
  %1426 = vmatpush2.bf16.xpose.msra.mxu0 0
  %1427 = vmatprep.subr.bf16.mxu0 0
  %1428 = vmatpush2.bf16.xpose.msra.mxu0 0
  %1429 = vmatprep.subr.bf16.mxu0 0
  %1430 = vmatpush2.bf16.xpose.msra.mxu0 0
  %1431 = vmatprep.mubr.bf16.mxu0 0
  %1432 = vmatmul.mubr.bf16.gmra.mxu0 %v1388
  %v1433 = vpop.f32.mrf.mxu0
  %v1434 = vadd.f32 %v141, %v1433
  %v1435 = vpop.f32.mrf.mxu0
  %v1436 = vpop.f32.mrf.mxu0
  %v1437 = vadd.f32 %v141, %v1436
  %v1438 = vpop.f32.mrf.mxu0
  %1439 = vmatprep.mubr.bf16.mxu0 0
  %1440 = vmatmul.mubr.bf16.gmra.mxu0 %v1391
  %v1441 = vpop.f32.mrf.mxu0
  %v1442 = vadd.f32 %v141, %v1441
  %v1443 = vpop.f32.mrf.mxu0
  %v1444 = vpop.f32.mrf.mxu0
  %v1445 = vpop.f32.mrf.mxu0
  %1446 = vdwg.mxu0
  %v1447 = vsel %vm803, %v1434, -inf
  %1448 = vmax.xlane.f32.xlu0 %v1447
  %v1449 = vpop.xlane.xlu0 %1448
  %v1450 = vsel %vm803, %v1437, -inf
  %1451 = vmax.xlane.f32.xlu0 %v1450
  %v1452 = vpop.xlane.xlu0 %1451
  %v1453 = vsel %vm803, %v1442, -inf
  %1454 = vmax.xlane.f32.xlu0 %v1453
  %v1455 = vpop.xlane.xlu0 %1454
  %v1456 = vsub.f32 %v1434, %v1449
  %v1457 = vsub.f32 %v1437, %v1452
  %v1458 = vsub.f32 %v1442, %v1455
  %v1459 = vmul.f32 %v1456, 1.442695
  %v1460 = vpow.pop %v1459
  %v1461 = vmul.f32 %v1457, 1.442695
  %v1462 = vpow.pop %v1461
  %v1463 = vmul.f32 %v1458, 1.442695
  %v1464 = vpow.pop %v1463
  %v1465 = vsel %vm803, %v1460, 0.0
  %1466 = vadd.xlane.f32.xlu0 %v1465
  %v1467 = vpop.xlane.xlu0 %1466
  %v1468 = vsel %vm803, %v1462, 0.0
  %1469 = vadd.xlane.f32.xlu0 %v1468
  %v1470 = vpop.xlane.xlu0 %1469
  %v1471 = vsel %vm803, %v1464, 0.0
  %1472 = vadd.xlane.f32.xlu0 %v1471
  %v1473 = vpop.xlane.xlu0 %1472
  %v1474 = vrcp.pop %v1467
  %v1475 = vrcp.pop %v1470
  %v1476 = vrcp.pop %v1473
  %v1477 = vmul.f32 %v1460, %v1474
  %v1478 = vmul.f32 %v1462, %v1475
  %v1479 = vmul.f32 %v1464, %v1476
  %v1480 = vpack.c.bf16 %v1478, %v1477
  %v1481 = vpack.c.bf16 %v1479, %v1479
  %v1482 = vmul.bf16 %v728, %v845
  %v1483 = vmul.bf16 %v731, %v845
  %v1486 = vrot.slane %v847, 4
  %v1487 = vrot.slane %v1482, 4
  %v1488 = vsel %vm1378, %v1486, %v1487
  %v1490 = vsel %vm367, %v1488, 0
  %v1493 = vsel %vm367, %v1487, 0
  %1495 = vmatprep.subr.bf16.mxu0 0
  %1496 = vmatpush1.bf16.xpose.msra.mxu0 0
  %1497 = vmatprep.subr.bf16.mxu0 0
  %1498 = vmatpush1.bf16.xpose.msra.mxu0 0
  %1499 = vmatprep.subr.bf16.mxu0 0
  %1500 = vmatpush1.bf16.xpose.msra.mxu0 0
  %1501 = vmatprep.subr.bf16.mxu0 0
  %1502 = vmatpush1.bf16.xpose.msra.mxu0 0
  %1503 = vmatprep.subr.bf16.mxu0 0
  %1504 = vmatpush1.bf16.xpose.msra.mxu0 0
  %1505 = vmatprep.subr.bf16.mxu0 0
  %1506 = vmatpush1.bf16.xpose.msra.mxu0 0
  %1507 = vmatprep.subr.bf16.mxu0 0
  %1508 = vmatpush1.bf16.xpose.msra.mxu0 %v1493
  %1509 = vmatprep.subr.bf16.mxu0 0
  %1510 = vmatpush1.bf16.xpose.msra.mxu0 %v1490
  %1511 = vmatprep.subr.bf16.mxu0 0
  %1512 = vmatpush2.bf16.xpose.msra.mxu0 0
  %1513 = vmatprep.subr.bf16.mxu0 0
  %1514 = vmatpush2.bf16.xpose.msra.mxu0 0
  %1515 = vmatprep.subr.bf16.mxu0 0
  %1516 = vmatpush2.bf16.xpose.msra.mxu0 0
  %1517 = vmatprep.subr.bf16.mxu0 0
  %1518 = vmatpush2.bf16.xpose.msra.mxu0 0
  %1519 = vmatprep.subr.bf16.mxu0 0
  %1520 = vmatpush2.bf16.xpose.msra.mxu0 0
  %1521 = vmatprep.subr.bf16.mxu0 0
  %1522 = vmatpush2.bf16.xpose.msra.mxu0 0
  %1523 = vmatprep.subr.bf16.mxu0 0
  %1524 = vmatpush2.bf16.xpose.msra.mxu0 0
  %1525 = vmatprep.subr.bf16.mxu0 0
  %1526 = vmatpush2.bf16.xpose.msra.mxu0 0
  %1527 = vmatprep.mubr.bf16.mxu0 0
  %1528 = vmatmul.mubr.bf16.gmra.mxu0 %v1388
  %v1529 = vpop.f32.mrf.mxu0
  %v1530 = vadd.f32 %v141, %v1529
  %v1531 = vpop.f32.mrf.mxu0
  %v1532 = vpop.f32.mrf.mxu0
  %v1533 = vadd.f32 %v141, %v1532
  %v1534 = vpop.f32.mrf.mxu0
  %1535 = vmatprep.mubr.bf16.mxu0 0
  %1536 = vmatmul.mubr.bf16.gmra.mxu0 %v1391
  %v1537 = vpop.f32.mrf.mxu0
  %v1538 = vadd.f32 %v141, %v1537
  %v1539 = vpop.f32.mrf.mxu0
  %v1540 = vpop.f32.mrf.mxu0
  %v1541 = vpop.f32.mrf.mxu0
  %1542 = vdwg.mxu0
  %v1543 = vsel %vm803, %v1530, -inf
  %1544 = vmax.xlane.f32.xlu0 %v1543
  %v1545 = vpop.xlane.xlu0 %1544
  %v1546 = vsel %vm803, %v1533, -inf
  %1547 = vmax.xlane.f32.xlu0 %v1546
  %v1548 = vpop.xlane.xlu0 %1547
  %v1549 = vsel %vm803, %v1538, -inf
  %1550 = vmax.xlane.f32.xlu0 %v1549
  %v1551 = vpop.xlane.xlu0 %1550
  %v1552 = vsub.f32 %v1530, %v1545
  %v1553 = vsub.f32 %v1533, %v1548
  %v1554 = vsub.f32 %v1538, %v1551
  %v1555 = vmul.f32 %v1552, 1.442695
  %v1556 = vpow.pop %v1555
  %v1557 = vmul.f32 %v1553, 1.442695
  %v1558 = vpow.pop %v1557
  %v1559 = vmul.f32 %v1554, 1.442695
  %v1560 = vpow.pop %v1559
  %v1561 = vsel %vm803, %v1556, 0.0
  %1562 = vadd.xlane.f32.xlu0 %v1561
  %v1563 = vpop.xlane.xlu0 %1562
  %v1564 = vsel %vm803, %v1558, 0.0
  %1565 = vadd.xlane.f32.xlu0 %v1564
  %v1566 = vpop.xlane.xlu0 %1565
  %v1567 = vsel %vm803, %v1560, 0.0
  %1568 = vadd.xlane.f32.xlu0 %v1567
  %v1569 = vpop.xlane.xlu0 %1568
  %v1570 = vrcp.pop %v1563
  %v1571 = vrcp.pop %v1566
  %v1572 = vrcp.pop %v1569
  %v1573 = vmul.f32 %v1556, %v1570
  %v1574 = vmul.f32 %v1558, %v1571
  %v1575 = vmul.f32 %v1560, %v1572
  %v1576 = vpack.c.bf16 %v1574, %v1573
  %v1577 = vpack.c.bf16 %v1575, %v1575
  %v1580 = vrot.slane %v849, 4
  %v1581 = vrot.slane %v1483, 4
  %v1582 = vsel %vm1378, %v1580, %v1581
  %v1585 = vsel %vm803, %v1576, 0
  %v1588 = vsel %vm803, %v1577, 0
  %v1591 = vsel %vm945, %v1581, 0
  %1593 = vmatprep.subr.bf16.mxu0 0
  %1594 = vmatpush1.bf16.msra.mxu0 0
  %1595 = vmatprep.subr.bf16.mxu0 0
  %1596 = vmatpush1.bf16.msra.mxu0 0
  %1597 = vmatprep.subr.bf16.mxu0 0
  %1598 = vmatpush1.bf16.msra.mxu0 0
  %1599 = vmatprep.subr.bf16.mxu0 0
  %1600 = vmatpush1.bf16.msra.mxu0 0
  %1601 = vmatprep.subr.bf16.mxu0 0
  %1602 = vmatpush1.bf16.msra.mxu0 0
  %1603 = vmatprep.subr.bf16.mxu0 0
  %1604 = vmatpush1.bf16.msra.mxu0 0
  %1605 = vmatprep.subr.bf16.mxu0 0
  %1606 = vmatpush1.bf16.msra.mxu0 %v1591
  %1607 = vmatprep.subr.bf16.mxu0 0
  %1608 = vmatpush1.bf16.msra.mxu0 %v1582
  %1609 = vmatprep.subr.bf16.mxu0 0
  %1610 = vmatpush2.bf16.msra.mxu0 0
  %1611 = vmatprep.subr.bf16.mxu0 0
  %1612 = vmatpush2.bf16.msra.mxu0 0
  %1613 = vmatprep.subr.bf16.mxu0 0
  %1614 = vmatpush2.bf16.msra.mxu0 0
  %1615 = vmatprep.subr.bf16.mxu0 0
  %1616 = vmatpush2.bf16.msra.mxu0 0
  %1617 = vmatprep.subr.bf16.mxu0 0
  %1618 = vmatpush2.bf16.msra.mxu0 0
  %1619 = vmatprep.subr.bf16.mxu0 0
  %1620 = vmatpush2.bf16.msra.mxu0 0
  %1621 = vmatprep.subr.bf16.mxu0 0
  %1622 = vmatpush2.bf16.msra.mxu0 0
  %1623 = vmatprep.subr.bf16.mxu0 0
  %1624 = vmatpush2.bf16.msra.mxu0 0
  %1625 = vmatprep.mubr.bf16.mxu0 0
  %1626 = vmatmul.mubr.bf16.gmra.mxu0 %v1585
  %v1627 = vpop.f32.mrf.mxu0
  %v1628 = vadd.f32 0.0, %v1627
  %v1629 = vpop.f32.mrf.mxu0
  %v1630 = vpop.f32.mrf.mxu0
  %v1631 = vadd.f32 0.0, %v1630
  %v1632 = vpop.f32.mrf.mxu0
  %1633 = vmatprep.mubr.bf16.mxu0 0
  %1634 = vmatmul.mubr.bf16.gmra.mxu0 %v1588
  %v1635 = vpop.f32.mrf.mxu0
  %v1636 = vadd.f32 0.0, %v1635
  %v1637 = vpop.f32.mrf.mxu0
  %v1638 = vpop.f32.mrf.mxu0
  %v1639 = vpop.f32.mrf.mxu0
  %1640 = vdwg.mxu0
  %v1643 = vrot.slane %v742, 4
  %v1644 = vrot.slane %v1375, 4
  %v1645 = vsel %vm1378, %v1643, %v1644
  %v1648 = vsel %vm803, %v1480, 0
  %v1651 = vsel %vm803, %v1481, 0
  %v1654 = vsel %vm945, %v1644, 0
  %1656 = vmatprep.subr.bf16.mxu0 0
  %1657 = vmatpush1.bf16.msra.mxu0 0
  %1658 = vmatprep.subr.bf16.mxu0 0
  %1659 = vmatpush1.bf16.msra.mxu0 0
  %1660 = vmatprep.subr.bf16.mxu0 0
  %1661 = vmatpush1.bf16.msra.mxu0 0
  %1662 = vmatprep.subr.bf16.mxu0 0
  %1663 = vmatpush1.bf16.msra.mxu0 0
  %1664 = vmatprep.subr.bf16.mxu0 0
  %1665 = vmatpush1.bf16.msra.mxu0 0
  %1666 = vmatprep.subr.bf16.mxu0 0
  %1667 = vmatpush1.bf16.msra.mxu0 0
  %1668 = vmatprep.subr.bf16.mxu0 0
  %1669 = vmatpush1.bf16.msra.mxu0 %v1654
  %1670 = vmatprep.subr.bf16.mxu0 0
  %1671 = vmatpush1.bf16.msra.mxu0 %v1645
  %1672 = vmatprep.subr.bf16.mxu0 0
  %1673 = vmatpush2.bf16.msra.mxu0 0
  %1674 = vmatprep.subr.bf16.mxu0 0
  %1675 = vmatpush2.bf16.msra.mxu0 0
  %1676 = vmatprep.subr.bf16.mxu0 0
  %1677 = vmatpush2.bf16.msra.mxu0 0
  %1678 = vmatprep.subr.bf16.mxu0 0
  %1679 = vmatpush2.bf16.msra.mxu0 0
  %1680 = vmatprep.subr.bf16.mxu0 0
  %1681 = vmatpush2.bf16.msra.mxu0 0
  %1682 = vmatprep.subr.bf16.mxu0 0
  %1683 = vmatpush2.bf16.msra.mxu0 0
  %1684 = vmatprep.subr.bf16.mxu0 0
  %1685 = vmatpush2.bf16.msra.mxu0 0
  %1686 = vmatprep.subr.bf16.mxu0 0
  %1687 = vmatpush2.bf16.msra.mxu0 0
  %1688 = vmatprep.mubr.bf16.mxu0 0
  %1689 = vmatmul.mubr.bf16.gmra.mxu0 %v1648
  %v1690 = vpop.f32.mrf.mxu0
  %v1691 = vadd.f32 %v1628, %v1690
  %v1692 = vpop.f32.mrf.mxu0
  %v1693 = vpop.f32.mrf.mxu0
  %v1694 = vadd.f32 %v1631, %v1693
  %v1695 = vpop.f32.mrf.mxu0
  %1696 = vmatprep.mubr.bf16.mxu0 0
  %1697 = vmatmul.mubr.bf16.gmra.mxu0 %v1651
  %v1698 = vpop.f32.mrf.mxu0
  %v1699 = vadd.f32 %v1636, %v1698
  %v1700 = vpop.f32.mrf.mxu0
  %v1701 = vpop.f32.mrf.mxu0
  %v1702 = vpop.f32.mrf.mxu0
  %1703 = vdwg.mxu0
  %v1704 = vmul.bf16 %v728, %v1060
  %v1705 = vmul.bf16 %v731, %v1060
  %v1708 = vrot.slane %v1062, 4
  %v1709 = vrot.slane %v1704, 4
  %v1710 = vsel %vm1378, %v1708, %v1709
  %v1712 = vsel %vm367, %v1710, 0
  %v1715 = vsel %vm367, %v1709, 0
  %1717 = vmatprep.subr.bf16.mxu0 0
  %1718 = vmatpush1.bf16.xpose.msra.mxu0 0
  %1719 = vmatprep.subr.bf16.mxu0 0
  %1720 = vmatpush1.bf16.xpose.msra.mxu0 0
  %1721 = vmatprep.subr.bf16.mxu0 0
  %1722 = vmatpush1.bf16.xpose.msra.mxu0 0
  %1723 = vmatprep.subr.bf16.mxu0 0
  %1724 = vmatpush1.bf16.xpose.msra.mxu0 0
  %1725 = vmatprep.subr.bf16.mxu0 0
  %1726 = vmatpush1.bf16.xpose.msra.mxu0 0
  %1727 = vmatprep.subr.bf16.mxu0 0
  %1728 = vmatpush1.bf16.xpose.msra.mxu0 0
  %1729 = vmatprep.subr.bf16.mxu0 0
  %1730 = vmatpush1.bf16.xpose.msra.mxu0 %v1715
  %1731 = vmatprep.subr.bf16.mxu0 0
  %1732 = vmatpush1.bf16.xpose.msra.mxu0 %v1712
  %1733 = vmatprep.subr.bf16.mxu0 0
  %1734 = vmatpush2.bf16.xpose.msra.mxu0 0
  %1735 = vmatprep.subr.bf16.mxu0 0
  %1736 = vmatpush2.bf16.xpose.msra.mxu0 0
  %1737 = vmatprep.subr.bf16.mxu0 0
  %1738 = vmatpush2.bf16.xpose.msra.mxu0 0
  %1739 = vmatprep.subr.bf16.mxu0 0
  %1740 = vmatpush2.bf16.xpose.msra.mxu0 0
  %1741 = vmatprep.subr.bf16.mxu0 0
  %1742 = vmatpush2.bf16.xpose.msra.mxu0 0
  %1743 = vmatprep.subr.bf16.mxu0 0
  %1744 = vmatpush2.bf16.xpose.msra.mxu0 0
  %1745 = vmatprep.subr.bf16.mxu0 0
  %1746 = vmatpush2.bf16.xpose.msra.mxu0 0
  %1747 = vmatprep.subr.bf16.mxu0 0
  %1748 = vmatpush2.bf16.xpose.msra.mxu0 0
  %1749 = vmatprep.mubr.bf16.mxu0 0
  %1750 = vmatmul.mubr.bf16.gmra.mxu0 %v1388
  %v1751 = vpop.f32.mrf.mxu0
  %v1752 = vadd.f32 %v141, %v1751
  %v1753 = vpop.f32.mrf.mxu0
  %v1754 = vpop.f32.mrf.mxu0
  %v1755 = vadd.f32 %v141, %v1754
  %v1756 = vpop.f32.mrf.mxu0
  %1757 = vmatprep.mubr.bf16.mxu0 0
  %1758 = vmatmul.mubr.bf16.gmra.mxu0 %v1391
  %v1759 = vpop.f32.mrf.mxu0
  %v1760 = vadd.f32 %v141, %v1759
  %v1761 = vpop.f32.mrf.mxu0
  %v1762 = vpop.f32.mrf.mxu0
  %v1763 = vpop.f32.mrf.mxu0
  %1764 = vdwg.mxu0
  %v1765 = vsel %vm803, %v1752, -inf
  %1766 = vmax.xlane.f32.xlu0 %v1765
  %v1767 = vpop.xlane.xlu0 %1766
  %v1768 = vsel %vm803, %v1755, -inf
  %1769 = vmax.xlane.f32.xlu0 %v1768
  %v1770 = vpop.xlane.xlu0 %1769
  %v1771 = vsel %vm803, %v1760, -inf
  %1772 = vmax.xlane.f32.xlu0 %v1771
  %v1773 = vpop.xlane.xlu0 %1772
  %v1774 = vsub.f32 %v1752, %v1767
  %v1775 = vsub.f32 %v1755, %v1770
  %v1776 = vsub.f32 %v1760, %v1773
  %v1777 = vmul.f32 %v1774, 1.442695
  %v1778 = vpow.pop %v1777
  %v1779 = vmul.f32 %v1775, 1.442695
  %v1780 = vpow.pop %v1779
  %v1781 = vmul.f32 %v1776, 1.442695
  %v1782 = vpow.pop %v1781
  %v1783 = vsel %vm803, %v1778, 0.0
  %1784 = vadd.xlane.f32.xlu0 %v1783
  %v1785 = vpop.xlane.xlu0 %1784
  %v1786 = vsel %vm803, %v1780, 0.0
  %1787 = vadd.xlane.f32.xlu0 %v1786
  %v1788 = vpop.xlane.xlu0 %1787
  %v1789 = vsel %vm803, %v1782, 0.0
  %1790 = vadd.xlane.f32.xlu0 %v1789
  %v1791 = vpop.xlane.xlu0 %1790
  %v1792 = vrcp.pop %v1785
  %v1793 = vrcp.pop %v1788
  %v1794 = vrcp.pop %v1791
  %v1795 = vmul.f32 %v1778, %v1792
  %v1796 = vmul.f32 %v1780, %v1793
  %v1797 = vmul.f32 %v1782, %v1794
  %v1798 = vpack.c.bf16 %v1796, %v1795
  %v1799 = vpack.c.bf16 %v1797, %v1797
  %v1802 = vrot.slane %v1064, 4
  %v1803 = vrot.slane %v1705, 4
  %v1804 = vsel %vm1378, %v1802, %v1803
  %v1807 = vsel %vm803, %v1798, 0
  %v1810 = vsel %vm803, %v1799, 0
  %v1813 = vsel %vm945, %v1803, 0
  %1815 = vmatprep.subr.bf16.mxu0 0
  %1816 = vmatpush1.bf16.msra.mxu0 0
  %1817 = vmatprep.subr.bf16.mxu0 0
  %1818 = vmatpush1.bf16.msra.mxu0 0
  %1819 = vmatprep.subr.bf16.mxu0 0
  %1820 = vmatpush1.bf16.msra.mxu0 0
  %1821 = vmatprep.subr.bf16.mxu0 0
  %1822 = vmatpush1.bf16.msra.mxu0 0
  %1823 = vmatprep.subr.bf16.mxu0 0
  %1824 = vmatpush1.bf16.msra.mxu0 0
  %1825 = vmatprep.subr.bf16.mxu0 0
  %1826 = vmatpush1.bf16.msra.mxu0 0
  %1827 = vmatprep.subr.bf16.mxu0 0
  %1828 = vmatpush1.bf16.msra.mxu0 %v1813
  %1829 = vmatprep.subr.bf16.mxu0 0
  %1830 = vmatpush1.bf16.msra.mxu0 %v1804
  %1831 = vmatprep.subr.bf16.mxu0 0
  %1832 = vmatpush2.bf16.msra.mxu0 0
  %1833 = vmatprep.subr.bf16.mxu0 0
  %1834 = vmatpush2.bf16.msra.mxu0 0
  %1835 = vmatprep.subr.bf16.mxu0 0
  %1836 = vmatpush2.bf16.msra.mxu0 0
  %1837 = vmatprep.subr.bf16.mxu0 0
  %1838 = vmatpush2.bf16.msra.mxu0 0
  %1839 = vmatprep.subr.bf16.mxu0 0
  %1840 = vmatpush2.bf16.msra.mxu0 0
  %1841 = vmatprep.subr.bf16.mxu0 0
  %1842 = vmatpush2.bf16.msra.mxu0 0
  %1843 = vmatprep.subr.bf16.mxu0 0
  %1844 = vmatpush2.bf16.msra.mxu0 0
  %1845 = vmatprep.subr.bf16.mxu0 0
  %1846 = vmatpush2.bf16.msra.mxu0 0
  %1847 = vmatprep.mubr.bf16.mxu0 0
  %1848 = vmatmul.mubr.bf16.gmra.mxu0 %v1807
  %v1849 = vpop.f32.mrf.mxu0
  %v1850 = vadd.f32 0.0, %v1849
  %v1851 = vpop.f32.mrf.mxu0
  %v1852 = vpop.f32.mrf.mxu0
  %v1853 = vadd.f32 0.0, %v1852
  %v1854 = vpop.f32.mrf.mxu0
  %1855 = vmatprep.mubr.bf16.mxu0 0
  %1856 = vmatmul.mubr.bf16.gmra.mxu0 %v1810
  %v1857 = vpop.f32.mrf.mxu0
  %v1858 = vadd.f32 0.0, %v1857
  %v1859 = vpop.f32.mrf.mxu0
  %v1860 = vpop.f32.mrf.mxu0
  %v1861 = vpop.f32.mrf.mxu0
  %1862 = vdwg.mxu0
  %v1863 = vadd.f32 %v1691, %v1850
  %v1864 = vadd.f32 %v1694, %v1853
  %v1865 = vadd.f32 %v1699, %v1858
  %v1866 = vmul.bf16 %v728, %v1220
  %v1867 = vmul.bf16 %v731, %v1220
  %v1870 = vrot.slane %v1222, 4
  %v1871 = vrot.slane %v1866, 4
  %v1872 = vsel %vm1378, %v1870, %v1871
  %v1874 = vsel %vm367, %v1872, 0
  %v1877 = vsel %vm367, %v1871, 0
  %1879 = vmatprep.subr.bf16.mxu0 0
  %1880 = vmatpush1.bf16.xpose.msra.mxu0 0
  %1881 = vmatprep.subr.bf16.mxu0 0
  %1882 = vmatpush1.bf16.xpose.msra.mxu0 0
  %1883 = vmatprep.subr.bf16.mxu0 0
  %1884 = vmatpush1.bf16.xpose.msra.mxu0 0
  %1885 = vmatprep.subr.bf16.mxu0 0
  %1886 = vmatpush1.bf16.xpose.msra.mxu0 0
  %1887 = vmatprep.subr.bf16.mxu0 0
  %1888 = vmatpush1.bf16.xpose.msra.mxu0 0
  %1889 = vmatprep.subr.bf16.mxu0 0
  %1890 = vmatpush1.bf16.xpose.msra.mxu0 0
  %1891 = vmatprep.subr.bf16.mxu0 0
  %1892 = vmatpush1.bf16.xpose.msra.mxu0 %v1877
  %1893 = vmatprep.subr.bf16.mxu0 0
  %1894 = vmatpush1.bf16.xpose.msra.mxu0 %v1874
  %1895 = vmatprep.subr.bf16.mxu0 0
  %1896 = vmatpush2.bf16.xpose.msra.mxu0 0
  %1897 = vmatprep.subr.bf16.mxu0 0
  %1898 = vmatpush2.bf16.xpose.msra.mxu0 0
  %1899 = vmatprep.subr.bf16.mxu0 0
  %1900 = vmatpush2.bf16.xpose.msra.mxu0 0
  %1901 = vmatprep.subr.bf16.mxu0 0
  %1902 = vmatpush2.bf16.xpose.msra.mxu0 0
  %1903 = vmatprep.subr.bf16.mxu0 0
  %1904 = vmatpush2.bf16.xpose.msra.mxu0 0
  %1905 = vmatprep.subr.bf16.mxu0 0
  %1906 = vmatpush2.bf16.xpose.msra.mxu0 0
  %1907 = vmatprep.subr.bf16.mxu0 0
  %1908 = vmatpush2.bf16.xpose.msra.mxu0 0
  %1909 = vmatprep.subr.bf16.mxu0 0
  %1910 = vmatpush2.bf16.xpose.msra.mxu0 0
  %1911 = vmatprep.mubr.bf16.mxu0 0
  %1912 = vmatmul.mubr.bf16.gmra.mxu0 %v1388
  %v1913 = vpop.f32.mrf.mxu0
  %v1914 = vadd.f32 %v141, %v1913
  %v1915 = vpop.f32.mrf.mxu0
  %v1916 = vpop.f32.mrf.mxu0
  %v1917 = vadd.f32 %v141, %v1916
  %v1918 = vpop.f32.mrf.mxu0
  %1919 = vmatprep.mubr.bf16.mxu0 0
  %1920 = vmatmul.mubr.bf16.gmra.mxu0 %v1391
  %v1921 = vpop.f32.mrf.mxu0
  %v1922 = vadd.f32 %v141, %v1921
  %v1923 = vpop.f32.mrf.mxu0
  %v1924 = vpop.f32.mrf.mxu0
  %v1925 = vpop.f32.mrf.mxu0
  %1926 = vdwg.mxu0
  %v1927 = vsel %vm803, %v1914, -inf
  %1928 = vmax.xlane.f32.xlu0 %v1927
  %v1929 = vpop.xlane.xlu0 %1928
  %v1930 = vsel %vm803, %v1917, -inf
  %1931 = vmax.xlane.f32.xlu0 %v1930
  %v1932 = vpop.xlane.xlu0 %1931
  %v1933 = vsel %vm803, %v1922, -inf
  %1934 = vmax.xlane.f32.xlu0 %v1933
  %v1935 = vpop.xlane.xlu0 %1934
  %v1936 = vsub.f32 %v1914, %v1929
  %v1937 = vsub.f32 %v1917, %v1932
  %v1938 = vsub.f32 %v1922, %v1935
  %v1939 = vmul.f32 %v1936, 1.442695
  %v1940 = vpow.pop %v1939
  %v1941 = vmul.f32 %v1937, 1.442695
  %v1942 = vpow.pop %v1941
  %v1943 = vmul.f32 %v1938, 1.442695
  %v1944 = vpow.pop %v1943
  %v1945 = vsel %vm803, %v1940, 0.0
  %1946 = vadd.xlane.f32.xlu0 %v1945
  %v1947 = vpop.xlane.xlu0 %1946
  %v1948 = vsel %vm803, %v1942, 0.0
  %1949 = vadd.xlane.f32.xlu0 %v1948
  %v1950 = vpop.xlane.xlu0 %1949
  %v1951 = vsel %vm803, %v1944, 0.0
  %1952 = vadd.xlane.f32.xlu0 %v1951
  %v1953 = vpop.xlane.xlu0 %1952
  %v1954 = vrcp.pop %v1947
  %v1955 = vrcp.pop %v1950
  %v1956 = vrcp.pop %v1953
  %v1957 = vmul.f32 %v1940, %v1954
  %v1958 = vmul.f32 %v1942, %v1955
  %v1959 = vmul.f32 %v1944, %v1956
  %v1960 = vpack.c.bf16 %v1958, %v1957
  %v1961 = vpack.c.bf16 %v1959, %v1959
  %v1964 = vrot.slane %v1224, 4
  %v1965 = vrot.slane %v1867, 4
  %v1966 = vsel %vm1378, %v1964, %v1965
  %v1969 = vsel %vm803, %v1960, 0
  %v1972 = vsel %vm803, %v1961, 0
  %v1975 = vsel %vm945, %v1965, 0
  %1977 = vmatprep.subr.bf16.mxu0 0
  %1978 = vmatpush1.bf16.msra.mxu0 0
  %1979 = vmatprep.subr.bf16.mxu0 0
  %1980 = vmatpush1.bf16.msra.mxu0 0
  %1981 = vmatprep.subr.bf16.mxu0 0
  %1982 = vmatpush1.bf16.msra.mxu0 0
  %1983 = vmatprep.subr.bf16.mxu0 0
  %1984 = vmatpush1.bf16.msra.mxu0 0
  %1985 = vmatprep.subr.bf16.mxu0 0
  %1986 = vmatpush1.bf16.msra.mxu0 0
  %1987 = vmatprep.subr.bf16.mxu0 0
  %1988 = vmatpush1.bf16.msra.mxu0 0
  %1989 = vmatprep.subr.bf16.mxu0 0
  %1990 = vmatpush1.bf16.msra.mxu0 %v1975
  %1991 = vmatprep.subr.bf16.mxu0 0
  %1992 = vmatpush1.bf16.msra.mxu0 %v1966
  %1993 = vmatprep.subr.bf16.mxu0 0
  %1994 = vmatpush2.bf16.msra.mxu0 0
  %1995 = vmatprep.subr.bf16.mxu0 0
  %1996 = vmatpush2.bf16.msra.mxu0 0
  %1997 = vmatprep.subr.bf16.mxu0 0
  %1998 = vmatpush2.bf16.msra.mxu0 0
  %1999 = vmatprep.subr.bf16.mxu0 0
  %2000 = vmatpush2.bf16.msra.mxu0 0
  %2001 = vmatprep.subr.bf16.mxu0 0
  %2002 = vmatpush2.bf16.msra.mxu0 0
  %2003 = vmatprep.subr.bf16.mxu0 0
  %2004 = vmatpush2.bf16.msra.mxu0 0
  %2005 = vmatprep.subr.bf16.mxu0 0
  %2006 = vmatpush2.bf16.msra.mxu0 0
  %2007 = vmatprep.subr.bf16.mxu0 0
  %2008 = vmatpush2.bf16.msra.mxu0 0
  %2009 = vmatprep.mubr.bf16.mxu0 0
  %2010 = vmatmul.mubr.bf16.gmra.mxu0 %v1969
  %v2011 = vpop.f32.mrf.mxu0
  %v2012 = vadd.f32 0.0, %v2011
  %v2013 = vpop.f32.mrf.mxu0
  %v2014 = vpop.f32.mrf.mxu0
  %v2015 = vadd.f32 0.0, %v2014
  %v2016 = vpop.f32.mrf.mxu0
  %2017 = vmatprep.mubr.bf16.mxu0 0
  %2018 = vmatmul.mubr.bf16.gmra.mxu0 %v1972
  %v2019 = vpop.f32.mrf.mxu0
  %v2020 = vadd.f32 0.0, %v2019
  %v2021 = vpop.f32.mrf.mxu0
  %v2022 = vpop.f32.mrf.mxu0
  %v2023 = vpop.f32.mrf.mxu0
  %2024 = vdwg.mxu0
  %v2025 = vadd.f32 %v1863, %v2012
  %v2026 = vadd.f32 %v1864, %v2015
  %v2027 = vadd.f32 %v1865, %v2020
  %v2028 = vpack.c.bf16 %v1372, %v1371
  %v2029 = vpack.c.bf16 %v2025, %v1373
  %v2030 = vpack.c.bf16 %v2027, %v2026
  %v2031 = vld [vmem:[%s33] sm:$0xf]
  %v2032 = vld [vmem:[%s33 + $0x4] sm:$0xf]
  %v2033 = vld [vmem:[%s33 + $0x8] sm:$0xf]
  %v2034 = vld [vmem:[%s33 + $0xc] sm:$0xf]
  %v2039 = vunpack.c.l.b16 %v2031
  %v2040 = vunpack.c.l.b16 %v2032
  %v2041 = vunpack.c.l.b16 %v2033
  %v2042 = vunpack.c.l.b16 %v2034
  %v2043 = vpack.c.b16 %v2040, %v2039
  %v2044 = vpack.c.b16 %v2042, %v2041
  %v2048 = vsel %vm367, %v2028, 0
  %v2051 = vsel %vm367, %v2029, 0
  %v2054 = vsel %vm367, %v2030, 0
  %2056 = vmatprep.subr.bf16.mxu0 0
  %2057 = vmatpush1.bf16.msra.mxu0 0
  %2058 = vmatprep.subr.bf16.mxu0 0
  %2059 = vmatpush1.bf16.msra.mxu0 0
  %2060 = vmatprep.subr.bf16.mxu0 0
  %2061 = vmatpush1.bf16.msra.mxu0 0
  %2062 = vmatprep.subr.bf16.mxu0 0
  %2063 = vmatpush1.bf16.msra.mxu0 0
  %2064 = vmatprep.subr.bf16.mxu0 0
  %2065 = vmatpush1.bf16.msra.mxu0 0
  %2066 = vmatprep.subr.bf16.mxu0 0
  %2067 = vmatpush1.bf16.msra.mxu0 0
  %2068 = vmatprep.subr.bf16.mxu0 0
  %2069 = vmatpush1.bf16.msra.mxu0 %v2044
  %2070 = vmatprep.subr.bf16.mxu0 0
  %2071 = vmatpush1.bf16.msra.mxu0 %v2043
  %2072 = vmatprep.subr.bf16.mxu0 0
  %2073 = vmatpush2.bf16.msra.mxu0 0
  %2074 = vmatprep.subr.bf16.mxu0 0
  %2075 = vmatpush2.bf16.msra.mxu0 0
  %2076 = vmatprep.subr.bf16.mxu0 0
  %2077 = vmatpush2.bf16.msra.mxu0 0
  %2078 = vmatprep.subr.bf16.mxu0 0
  %2079 = vmatpush2.bf16.msra.mxu0 0
  %2080 = vmatprep.subr.bf16.mxu0 0
  %2081 = vmatpush2.bf16.msra.mxu0 0
  %2082 = vmatprep.subr.bf16.mxu0 0
  %2083 = vmatpush2.bf16.msra.mxu0 0
  %2084 = vmatprep.subr.bf16.mxu0 0
  %2085 = vmatpush2.bf16.msra.mxu0 0
  %2086 = vmatprep.subr.bf16.mxu0 0
  %2087 = vmatpush2.bf16.msra.mxu0 0
  %2088 = vmatprep.mubr.bf16.mxu0 0
  %2089 = vmatmul.mubr.bf16.gmra.mxu0 %v2048
  %v2090 = vpop.f32.mrf.mxu0
  %v2091 = vadd.f32 0.0, %v2090
  %v2092 = vpop.f32.mrf.mxu0
  %v2093 = vpop.f32.mrf.mxu0
  %v2094 = vadd.f32 0.0, %v2093
  %v2095 = vpop.f32.mrf.mxu0
  %2096 = vmatprep.mubr.bf16.mxu0 0
  %2097 = vmatmul.mubr.bf16.gmra.mxu0 %v2051
  %v2098 = vpop.f32.mrf.mxu0
  %v2099 = vadd.f32 0.0, %v2098
  %v2100 = vpop.f32.mrf.mxu0
  %v2101 = vpop.f32.mrf.mxu0
  %v2102 = vadd.f32 0.0, %v2101
  %v2103 = vpop.f32.mrf.mxu0
  %2104 = vmatprep.mubr.bf16.mxu0 0
  %2105 = vmatmul.mubr.bf16.gmra.mxu0 %v2054
  %v2106 = vpop.f32.mrf.mxu0
  %v2107 = vadd.f32 0.0, %v2106
  %v2108 = vpop.f32.mrf.mxu0
  %v2109 = vpop.f32.mrf.mxu0
  %v2110 = vadd.f32 0.0, %v2109
  %v2111 = vpop.f32.mrf.mxu0
  %2112 = vdwg.mxu0
  %v2113 = vadd.f32 %v359, %v2091
  %v2114 = vadd.f32 %v360, %v2094
  %v2115 = vadd.f32 %v361, %v2099
  %v2116 = vadd.f32 %v362, %v2102
  %v2117 = vadd.f32 %v363, %v2107
  %v2118 = vadd.f32 %v364, %v2110
  %v2119 = vld [vmem:[%s35] sm:$0x1]
  %v2121 = vlaneseq
  %v2122 = vshrl.u32 %v2121, 7
  %v2123 = vsub.s32 0, %v2122
  %v2124 = vrot.slane %v2119, %v2123
  %v2126 = vadd.f32 %v2113, %v2124
  %v2127 = vadd.f32 %v2114, %v2124
  %v2128 = vadd.f32 %v2115, %v2124
  %v2129 = vadd.f32 %v2116, %v2124
  %v2130 = vadd.f32 %v2117, %v2124
  %v2131 = vadd.f32 %v2118, %v2124
  %v2132 = vld [vmem:[%s37] sm:$0x1]
  %v2133 = vld [vmem:[%s39] sm:$0x1]
  %v2134 = vsel %vm367, %v2126, 0.0
  %2135 = vadd.xlane.f32.xlu0 %v2134
  %v2136 = vpop.xlane.xlu0 %2135
  %v2137 = vsel %vm367, %v2127, 0.0
  %2138 = vadd.xlane.f32.xlu0 %v2137
  %v2139 = vpop.xlane.xlu0 %2138
  %v2140 = vsel %vm367, %v2128, 0.0
  %2141 = vadd.xlane.f32.xlu0 %v2140
  %v2142 = vpop.xlane.xlu0 %2141
  %v2143 = vsel %vm367, %v2129, 0.0
  %2144 = vadd.xlane.f32.xlu0 %v2143
  %v2145 = vpop.xlane.xlu0 %2144
  %v2146 = vsel %vm367, %v2130, 0.0
  %2147 = vadd.xlane.f32.xlu0 %v2146
  %v2148 = vpop.xlane.xlu0 %2147
  %v2149 = vsel %vm367, %v2131, 0.0
  %2150 = vadd.xlane.f32.xlu0 %v2149
  %v2151 = vpop.xlane.xlu0 %2150
  %v2152 = vmul.f32 %v2136, %v386
  %v2153 = vmul.f32 %v2139, %v386
  %v2154 = vmul.f32 %v2142, %v386
  %v2155 = vmul.f32 %v2145, %v386
  %v2156 = vmul.f32 %v2148, %v386
  %v2157 = vmul.f32 %v2151, %v386
  %v2158 = vsub.f32 %v2126, %v2152
  %v2159 = vsub.f32 %v2127, %v2153
  %v2160 = vsub.f32 %v2128, %v2154
  %v2161 = vsub.f32 %v2129, %v2155
  %v2162 = vsub.f32 %v2130, %v2156
  %v2163 = vsub.f32 %v2131, %v2157
  %v2164 = vmul.f32 %v2158, %v2158
  %v2165 = vmul.f32 %v2159, %v2159
  %v2166 = vmul.f32 %v2160, %v2160
  %v2167 = vmul.f32 %v2161, %v2161
  %v2168 = vmul.f32 %v2162, %v2162
  %v2169 = vmul.f32 %v2163, %v2163
  %v2170 = vsel %vm367, %v2164, 0.0
  %2171 = vadd.xlane.f32.xlu0 %v2170
  %v2172 = vpop.xlane.xlu0 %2171
  %v2173 = vsel %vm367, %v2165, 0.0
  %2174 = vadd.xlane.f32.xlu0 %v2173
  %v2175 = vpop.xlane.xlu0 %2174
  %v2176 = vsel %vm367, %v2166, 0.0
  %2177 = vadd.xlane.f32.xlu0 %v2176
  %v2178 = vpop.xlane.xlu0 %2177
  %v2179 = vsel %vm367, %v2167, 0.0
  %2180 = vadd.xlane.f32.xlu0 %v2179
  %v2181 = vpop.xlane.xlu0 %2180
  %v2182 = vsel %vm367, %v2168, 0.0
  %2183 = vadd.xlane.f32.xlu0 %v2182
  %v2184 = vpop.xlane.xlu0 %2183
  %v2185 = vsel %vm367, %v2169, 0.0
  %2186 = vadd.xlane.f32.xlu0 %v2185
  %v2187 = vpop.xlane.xlu0 %2186
  %v2188 = vmul.f32 %v2172, %v386
  %v2189 = vmul.f32 %v2175, %v386
  %v2190 = vmul.f32 %v2178, %v386
  %v2191 = vmul.f32 %v2181, %v386
  %v2192 = vmul.f32 %v2184, %v386
  %v2193 = vmul.f32 %v2187, %v386
  %v2194 = vadd.f32 %v2188, 1e-05
  %v2195 = vadd.f32 %v2189, 1e-05
  %v2196 = vadd.f32 %v2190, 1e-05
  %v2197 = vadd.f32 %v2191, 1e-05
  %v2198 = vadd.f32 %v2192, 1e-05
  %v2199 = vadd.f32 %v2193, 1e-05
  %v2200 = vrsqrt.pop %v2194
  %v2201 = vrsqrt.pop %v2195
  %v2202 = vrsqrt.pop %v2196
  %v2203 = vrsqrt.pop %v2197
  %v2204 = vrsqrt.pop %v2198
  %v2205 = vrsqrt.pop %v2199
  %v2206 = vmul.f32 %v2158, %v2200
  %v2207 = vmul.f32 %v2159, %v2201
  %v2208 = vmul.f32 %v2160, %v2202
  %v2209 = vmul.f32 %v2161, %v2203
  %v2210 = vmul.f32 %v2162, %v2204
  %v2211 = vmul.f32 %v2163, %v2205
  %v2213 = vlaneseq
  %v2214 = vshrl.u32 %v2213, 7
  %v2215 = vsub.s32 0, %v2214
  %v2216 = vrot.slane %v2132, %v2215
  %v2218 = vmul.f32 %v2206, %v2216
  %v2219 = vmul.f32 %v2207, %v2216
  %v2220 = vmul.f32 %v2208, %v2216
  %v2221 = vmul.f32 %v2209, %v2216
  %v2222 = vmul.f32 %v2210, %v2216
  %v2223 = vmul.f32 %v2211, %v2216
  %v2225 = vlaneseq
  %v2226 = vshrl.u32 %v2225, 7
  %v2227 = vsub.s32 0, %v2226
  %v2228 = vrot.slane %v2133, %v2227
  %v2230 = vadd.f32 %v2218, %v2228
  %v2231 = vadd.f32 %v2219, %v2228
  %v2232 = vadd.f32 %v2220, %v2228
  %v2233 = vadd.f32 %v2221, %v2228
  %v2234 = vadd.f32 %v2222, %v2228
  %v2235 = vadd.f32 %v2223, %v2228
  %v2236 = vpack.c.bf16 %v2231, %v2230
  %v2237 = vpack.c.bf16 %v2233, %v2232
  %v2238 = vpack.c.bf16 %v2235, %v2234
  %v2239 = vld [vmem:[%s41] sm:$0xf]
  %v2240 = vld [vmem:[%s41 + $0x4] sm:$0xf]
  %v2241 = vld [vmem:[%s41 + $0x8] sm:$0xf]
  %v2242 = vld [vmem:[%s41 + $0xc] sm:$0xf]
  %v2243 = vld [vmem:[%s43] sm:$0x1]
  %v2245 = vlaneseq
  %v2246 = vshrl.u32 %v2245, 7
  %v2247 = vsub.s32 0, %v2246
  %v2248 = vrot.slane %v2243, %v2247
  %v2254 = vunpack.c.l.b16 %v2239
  %v2255 = vunpack.c.l.b16 %v2240
  %v2256 = vunpack.c.l.b16 %v2241
  %v2257 = vunpack.c.l.b16 %v2242
  %v2258 = vpack.c.b16 %v2255, %v2254
  %v2259 = vpack.c.b16 %v2257, %v2256
  %v2263 = vsel %vm367, %v2236, 0
  %v2266 = vsel %vm367, %v2237, 0
  %v2269 = vsel %vm367, %v2238, 0
  %2271 = vmatprep.subr.bf16.mxu0 0
  %2272 = vmatpush1.bf16.msra.mxu0 0
  %2273 = vmatprep.subr.bf16.mxu0 0
  %2274 = vmatpush1.bf16.msra.mxu0 0
  %2275 = vmatprep.subr.bf16.mxu0 0
  %2276 = vmatpush1.bf16.msra.mxu0 0
  %2277 = vmatprep.subr.bf16.mxu0 0
  %2278 = vmatpush1.bf16.msra.mxu0 0
  %2279 = vmatprep.subr.bf16.mxu0 0
  %2280 = vmatpush1.bf16.msra.mxu0 0
  %2281 = vmatprep.subr.bf16.mxu0 0
  %2282 = vmatpush1.bf16.msra.mxu0 0
  %2283 = vmatprep.subr.bf16.mxu0 0
  %2284 = vmatpush1.bf16.msra.mxu0 %v2259
  %2285 = vmatprep.subr.bf16.mxu0 0
  %2286 = vmatpush1.bf16.msra.mxu0 %v2258
  %2287 = vmatprep.subr.bf16.mxu0 0
  %2288 = vmatpush2.bf16.msra.mxu0 0
  %2289 = vmatprep.subr.bf16.mxu0 0
  %2290 = vmatpush2.bf16.msra.mxu0 0
  %2291 = vmatprep.subr.bf16.mxu0 0
  %2292 = vmatpush2.bf16.msra.mxu0 0
  %2293 = vmatprep.subr.bf16.mxu0 0
  %2294 = vmatpush2.bf16.msra.mxu0 0
  %2295 = vmatprep.subr.bf16.mxu0 0
  %2296 = vmatpush2.bf16.msra.mxu0 0
  %2297 = vmatprep.subr.bf16.mxu0 0
  %2298 = vmatpush2.bf16.msra.mxu0 0
  %2299 = vmatprep.subr.bf16.mxu0 0
  %2300 = vmatpush2.bf16.msra.mxu0 0
  %2301 = vmatprep.subr.bf16.mxu0 0
  %2302 = vmatpush2.bf16.msra.mxu0 0
  %2303 = vmatprep.mubr.bf16.mxu0 0
  %2304 = vmatmul.mubr.bf16.gmra.mxu0 %v2263
  %v2305 = vpop.f32.mrf.mxu0
  %v2306 = vadd.f32 %v2248, %v2305
  %v2307 = vpop.f32.mrf.mxu0
  %v2308 = vpop.f32.mrf.mxu0
  %v2309 = vadd.f32 %v2248, %v2308
  %v2310 = vpop.f32.mrf.mxu0
  %2311 = vmatprep.mubr.bf16.mxu0 0
  %2312 = vmatmul.mubr.bf16.gmra.mxu0 %v2266
  %v2313 = vpop.f32.mrf.mxu0
  %v2314 = vadd.f32 %v2248, %v2313
  %v2315 = vpop.f32.mrf.mxu0
  %v2316 = vpop.f32.mrf.mxu0
  %v2317 = vadd.f32 %v2248, %v2316
  %v2318 = vpop.f32.mrf.mxu0
  %2319 = vmatprep.mubr.bf16.mxu0 0
  %2320 = vmatmul.mubr.bf16.gmra.mxu0 %v2269
  %v2321 = vpop.f32.mrf.mxu0
  %v2322 = vadd.f32 %v2248, %v2321
  %v2323 = vpop.f32.mrf.mxu0
  %v2324 = vpop.f32.mrf.mxu0
  %v2325 = vadd.f32 %v2248, %v2324
  %v2326 = vpop.f32.mrf.mxu0
  %2327 = vdwg.mxu0
  %v2328 = vmul.f32 %v2306, 0.5
  %v2329 = vmul.f32 %v2309, 0.5
  %v2330 = vmul.f32 %v2314, 0.5
  %v2331 = vmul.f32 %v2317, 0.5
  %v2332 = vmul.f32 %v2322, 0.5
  %v2333 = vmul.f32 %v2325, 0.5
  %v2334 = vmul.f32 %v2306, 0.70710677
  %v2335 = vmul.f32 %v2309, 0.70710677
  %v2336 = vmul.f32 %v2314, 0.70710677
  %v2337 = vmul.f32 %v2317, 0.70710677
  %v2338 = vmul.f32 %v2322, 0.70710677
  %v2339 = vmul.f32 %v2325, 0.70710677
  %v2340 = verf.f32.pop %v2334
  %v2341 = verf.f32.pop %v2335
  %v2342 = verf.f32.pop %v2336
  %v2343 = verf.f32.pop %v2337
  %v2344 = verf.f32.pop %v2338
  %v2345 = verf.f32.pop %v2339
  %v2346 = vadd.f32 %v2340, 1.0
  %v2347 = vadd.f32 %v2341, 1.0
  %v2348 = vadd.f32 %v2342, 1.0
  %v2349 = vadd.f32 %v2343, 1.0
  %v2350 = vadd.f32 %v2344, 1.0
  %v2351 = vadd.f32 %v2345, 1.0
  %v2352 = vmul.f32 %v2328, %v2346
  %v2353 = vmul.f32 %v2329, %v2347
  %v2354 = vmul.f32 %v2330, %v2348
  %v2355 = vmul.f32 %v2331, %v2349
  %v2356 = vmul.f32 %v2332, %v2350
  %v2357 = vmul.f32 %v2333, %v2351
  %v2358 = vpack.c.bf16 %v2353, %v2352
  %v2359 = vpack.c.bf16 %v2355, %v2354
  %v2360 = vpack.c.bf16 %v2357, %v2356
  %v2361 = vld [vmem:[%s45] sm:$0xf]
  %v2362 = vld [vmem:[%s45 + $0x4] sm:$0xf]
  %v2363 = vld [vmem:[%s45 + $0x8] sm:$0xf]
  %v2364 = vld [vmem:[%s45 + $0xc] sm:$0xf]
  %v2365 = vld [vmem:[%s45 + $0x10] sm:$0xf]
  %v2366 = vld [vmem:[%s45 + $0x14] sm:$0xf]
  %v2367 = vld [vmem:[%s45 + $0x18] sm:$0xf]
  %v2368 = vld [vmem:[%s45 + $0x1c] sm:$0xf]
  %v2369 = vld [vmem:[%s47] sm:$0x1]
  %v2371 = vlaneseq
  %v2372 = vshrl.u32 %v2371, 7
  %v2373 = vsub.s32 0, %v2372
  %v2374 = vrot.slane %v2369, %v2373
  %v2384 = vunpack.c.l.b16 %v2361
  %v2385 = vunpack.c.l.b16 %v2362
  %v2386 = vunpack.c.l.b16 %v2363
  %v2387 = vunpack.c.l.b16 %v2364
  %v2388 = vunpack.c.l.b16 %v2365
  %v2389 = vunpack.c.l.b16 %v2366
  %v2390 = vunpack.c.l.b16 %v2367
  %v2391 = vunpack.c.l.b16 %v2368
  %v2392 = vpack.c.b16 %v2385, %v2384
  %v2393 = vpack.c.b16 %v2387, %v2386
  %v2394 = vpack.c.b16 %v2389, %v2388
  %v2395 = vpack.c.b16 %v2391, %v2390
  %vm2400 = vcmask 523264
  %v2402 = vsel %vm2400, %v2358, 0
  %v2405 = vsel %vm2400, %v2359, 0
  %v2408 = vsel %vm2400, %v2360, 0
  %2410 = vmatprep.subr.bf16.mxu0 0
  %2411 = vmatpush1.bf16.msra.mxu0 0
  %2412 = vmatprep.subr.bf16.mxu0 0
  %2413 = vmatpush1.bf16.msra.mxu0 0
  %2414 = vmatprep.subr.bf16.mxu0 0
  %2415 = vmatpush1.bf16.msra.mxu0 0
  %2416 = vmatprep.subr.bf16.mxu0 0
  %2417 = vmatpush1.bf16.msra.mxu0 0
  %2418 = vmatprep.subr.bf16.mxu0 0
  %2419 = vmatpush1.bf16.msra.mxu0 %v2395
  %2420 = vmatprep.subr.bf16.mxu0 0
  %2421 = vmatpush1.bf16.msra.mxu0 %v2394
  %2422 = vmatprep.subr.bf16.mxu0 0
  %2423 = vmatpush1.bf16.msra.mxu0 %v2393
  %2424 = vmatprep.subr.bf16.mxu0 0
  %2425 = vmatpush1.bf16.msra.mxu0 %v2392
  %2426 = vmatprep.subr.bf16.mxu0 0
  %2427 = vmatpush2.bf16.msra.mxu0 0
  %2428 = vmatprep.subr.bf16.mxu0 0
  %2429 = vmatpush2.bf16.msra.mxu0 0
  %2430 = vmatprep.subr.bf16.mxu0 0
  %2431 = vmatpush2.bf16.msra.mxu0 0
  %2432 = vmatprep.subr.bf16.mxu0 0
  %2433 = vmatpush2.bf16.msra.mxu0 0
  %2434 = vmatprep.subr.bf16.mxu0 0
  %2435 = vmatpush2.bf16.msra.mxu0 0
  %2436 = vmatprep.subr.bf16.mxu0 0
  %2437 = vmatpush2.bf16.msra.mxu0 0
  %2438 = vmatprep.subr.bf16.mxu0 0
  %2439 = vmatpush2.bf16.msra.mxu0 0
  %2440 = vmatprep.subr.bf16.mxu0 0
  %2441 = vmatpush2.bf16.msra.mxu0 0
  %2442 = vmatprep.mubr.bf16.mxu0 0
  %2443 = vmatmul.mubr.bf16.gmra.mxu0 %v2402
  %v2444 = vpop.f32.mrf.mxu0
  %v2445 = vadd.f32 %v2374, %v2444
  %v2446 = vpop.f32.mrf.mxu0
  %v2447 = vpop.f32.mrf.mxu0
  %v2448 = vadd.f32 %v2374, %v2447
  %v2449 = vpop.f32.mrf.mxu0
  %2450 = vmatprep.mubr.bf16.mxu0 0
  %2451 = vmatmul.mubr.bf16.gmra.mxu0 %v2405
  %v2452 = vpop.f32.mrf.mxu0
  %v2453 = vadd.f32 %v2374, %v2452
  %v2454 = vpop.f32.mrf.mxu0
  %v2455 = vpop.f32.mrf.mxu0
  %v2456 = vadd.f32 %v2374, %v2455
  %v2457 = vpop.f32.mrf.mxu0
  %2458 = vmatprep.mubr.bf16.mxu0 0
  %2459 = vmatmul.mubr.bf16.gmra.mxu0 %v2408
  %v2460 = vpop.f32.mrf.mxu0
  %v2461 = vadd.f32 %v2374, %v2460
  %v2462 = vpop.f32.mrf.mxu0
  %v2463 = vpop.f32.mrf.mxu0
  %v2464 = vadd.f32 %v2374, %v2463
  %v2465 = vpop.f32.mrf.mxu0
  %2466 = vdwg.mxu0
  %v2467 = vadd.f32 %v2126, %v2445
  %v2468 = vadd.f32 %v2127, %v2448
  %v2469 = vadd.f32 %v2128, %v2453
  %v2470 = vadd.f32 %v2129, %v2456
  %v2471 = vadd.f32 %v2130, %v2461
  %v2472 = vadd.f32 %v2131, %v2464
  %s2473 = scalar_lea.vmem %s17, 1
  %v2474 = vld [vmem:[%s2473] sm:$0x1]
  %s2475 = scalar_lea.vmem %s19, 1
  %v2476 = vld [vmem:[%s2475] sm:$0x1]
  %v2477 = vsel %vm367, %v2467, 0.0
  %2478 = vadd.xlane.f32.xlu0 %v2477
  %v2479 = vpop.xlane.xlu0 %2478
  %v2480 = vsel %vm367, %v2468, 0.0
  %2481 = vadd.xlane.f32.xlu0 %v2480
  %v2482 = vpop.xlane.xlu0 %2481
  %v2483 = vsel %vm367, %v2469, 0.0
  %2484 = vadd.xlane.f32.xlu0 %v2483
  %v2485 = vpop.xlane.xlu0 %2484
  %v2486 = vsel %vm367, %v2470, 0.0
  %2487 = vadd.xlane.f32.xlu0 %v2486
  %v2488 = vpop.xlane.xlu0 %2487
  %v2489 = vsel %vm367, %v2471, 0.0
  %2490 = vadd.xlane.f32.xlu0 %v2489
  %v2491 = vpop.xlane.xlu0 %2490
  %v2492 = vsel %vm367, %v2472, 0.0
  %2493 = vadd.xlane.f32.xlu0 %v2492
  %v2494 = vpop.xlane.xlu0 %2493
  %v2495 = vmul.f32 %v2479, %v386
  %v2496 = vmul.f32 %v2482, %v386
  %v2497 = vmul.f32 %v2485, %v386
  %v2498 = vmul.f32 %v2488, %v386
  %v2499 = vmul.f32 %v2491, %v386
  %v2500 = vmul.f32 %v2494, %v386
  %v2501 = vsub.f32 %v2467, %v2495
  %v2502 = vsub.f32 %v2468, %v2496
  %v2503 = vsub.f32 %v2469, %v2497
  %v2504 = vsub.f32 %v2470, %v2498
  %v2505 = vsub.f32 %v2471, %v2499
  %v2506 = vsub.f32 %v2472, %v2500
  %v2507 = vmul.f32 %v2501, %v2501
  %v2508 = vmul.f32 %v2502, %v2502
  %v2509 = vmul.f32 %v2503, %v2503
  %v2510 = vmul.f32 %v2504, %v2504
  %v2511 = vmul.f32 %v2505, %v2505
  %v2512 = vmul.f32 %v2506, %v2506
  %v2513 = vsel %vm367, %v2507, 0.0
  %2514 = vadd.xlane.f32.xlu0 %v2513
  %v2515 = vpop.xlane.xlu0 %2514
  %v2516 = vsel %vm367, %v2508, 0.0
  %2517 = vadd.xlane.f32.xlu0 %v2516
  %v2518 = vpop.xlane.xlu0 %2517
  %v2519 = vsel %vm367, %v2509, 0.0
  %2520 = vadd.xlane.f32.xlu0 %v2519
  %v2521 = vpop.xlane.xlu0 %2520
  %v2522 = vsel %vm367, %v2510, 0.0
  %2523 = vadd.xlane.f32.xlu0 %v2522
  %v2524 = vpop.xlane.xlu0 %2523
  %v2525 = vsel %vm367, %v2511, 0.0
  %2526 = vadd.xlane.f32.xlu0 %v2525
  %v2527 = vpop.xlane.xlu0 %2526
  %v2528 = vsel %vm367, %v2512, 0.0
  %2529 = vadd.xlane.f32.xlu0 %v2528
  %v2530 = vpop.xlane.xlu0 %2529
  %v2531 = vmul.f32 %v2515, %v386
  %v2532 = vmul.f32 %v2518, %v386
  %v2533 = vmul.f32 %v2521, %v386
  %v2534 = vmul.f32 %v2524, %v386
  %v2535 = vmul.f32 %v2527, %v386
  %v2536 = vmul.f32 %v2530, %v386
  %v2537 = vadd.f32 %v2531, 1e-05
  %v2538 = vadd.f32 %v2532, 1e-05
  %v2539 = vadd.f32 %v2533, 1e-05
  %v2540 = vadd.f32 %v2534, 1e-05
  %v2541 = vadd.f32 %v2535, 1e-05
  %v2542 = vadd.f32 %v2536, 1e-05
  %v2543 = vrsqrt.pop %v2537
  %v2544 = vrsqrt.pop %v2538
  %v2545 = vrsqrt.pop %v2539
  %v2546 = vrsqrt.pop %v2540
  %v2547 = vrsqrt.pop %v2541
  %v2548 = vrsqrt.pop %v2542
  %v2549 = vmul.f32 %v2501, %v2543
  %v2550 = vmul.f32 %v2502, %v2544
  %v2551 = vmul.f32 %v2503, %v2545
  %v2552 = vmul.f32 %v2504, %v2546
  %v2553 = vmul.f32 %v2505, %v2547
  %v2554 = vmul.f32 %v2506, %v2548
  %v2556 = vlaneseq
  %v2557 = vshrl.u32 %v2556, 7
  %v2558 = vsub.s32 0, %v2557
  %v2559 = vrot.slane %v2474, %v2558
  %v2561 = vmul.f32 %v2549, %v2559
  %v2562 = vmul.f32 %v2550, %v2559
  %v2563 = vmul.f32 %v2551, %v2559
  %v2564 = vmul.f32 %v2552, %v2559
  %v2565 = vmul.f32 %v2553, %v2559
  %v2566 = vmul.f32 %v2554, %v2559
  %v2568 = vlaneseq
  %v2569 = vshrl.u32 %v2568, 7
  %v2570 = vsub.s32 0, %v2569
  %v2571 = vrot.slane %v2476, %v2570
  %v2573 = vadd.f32 %v2561, %v2571
  %v2574 = vadd.f32 %v2562, %v2571
  %v2575 = vadd.f32 %v2563, %v2571
  %v2576 = vadd.f32 %v2564, %v2571
  %v2577 = vadd.f32 %v2565, %v2571
  %v2578 = vadd.f32 %v2566, %v2571
  %v2579 = vpack.c.bf16 %v2574, %v2573
  %v2580 = vpack.c.bf16 %v2576, %v2575
  %v2581 = vpack.c.bf16 %v2578, %v2577
  %s2582 = scalar_lea.vmem %s21, 16
  %v2583 = vld [vmem:[%s2582] sm:$0xf]
  %v2584 = vld [vmem:[%s2582 + $0x4] sm:$0xf]
  %v2585 = vld [vmem:[%s2582 + $0x8] sm:$0xf]
  %v2586 = vld [vmem:[%s2582 + $0xc] sm:$0xf]
  %s2587 = scalar_lea.vmem %s23, 1
  %v2588 = vld [vmem:[%s2587] sm:$0x1]
  %v2590 = vlaneseq
  %v2591 = vshrl.u32 %v2590, 7
  %v2592 = vsub.s32 0, %v2591
  %v2593 = vrot.slane %v2588, %v2592
  %v2599 = vunpack.c.l.b16 %v2583
  %v2600 = vunpack.c.l.b16 %v2584
  %v2601 = vunpack.c.l.b16 %v2585
  %v2602 = vunpack.c.l.b16 %v2586
  %v2603 = vpack.c.b16 %v2600, %v2599
  %v2604 = vpack.c.b16 %v2602, %v2601
  %v2608 = vsel %vm367, %v2579, 0
  %v2611 = vsel %vm367, %v2580, 0
  %v2614 = vsel %vm367, %v2581, 0
  %2616 = vmatprep.subr.bf16.mxu0 0
  %2617 = vmatpush1.bf16.msra.mxu0 0
  %2618 = vmatprep.subr.bf16.mxu0 0
  %2619 = vmatpush1.bf16.msra.mxu0 0
  %2620 = vmatprep.subr.bf16.mxu0 0
  %2621 = vmatpush1.bf16.msra.mxu0 0
  %2622 = vmatprep.subr.bf16.mxu0 0
  %2623 = vmatpush1.bf16.msra.mxu0 0
  %2624 = vmatprep.subr.bf16.mxu0 0
  %2625 = vmatpush1.bf16.msra.mxu0 0
  %2626 = vmatprep.subr.bf16.mxu0 0
  %2627 = vmatpush1.bf16.msra.mxu0 0
  %2628 = vmatprep.subr.bf16.mxu0 0
  %2629 = vmatpush1.bf16.msra.mxu0 %v2604
  %2630 = vmatprep.subr.bf16.mxu0 0
  %2631 = vmatpush1.bf16.msra.mxu0 %v2603
  %2632 = vmatprep.subr.bf16.mxu0 0
  %2633 = vmatpush2.bf16.msra.mxu0 0
  %2634 = vmatprep.subr.bf16.mxu0 0
  %2635 = vmatpush2.bf16.msra.mxu0 0
  %2636 = vmatprep.subr.bf16.mxu0 0
  %2637 = vmatpush2.bf16.msra.mxu0 0
  %2638 = vmatprep.subr.bf16.mxu0 0
  %2639 = vmatpush2.bf16.msra.mxu0 0
  %2640 = vmatprep.subr.bf16.mxu0 0
  %2641 = vmatpush2.bf16.msra.mxu0 0
  %2642 = vmatprep.subr.bf16.mxu0 0
  %2643 = vmatpush2.bf16.msra.mxu0 0
  %2644 = vmatprep.subr.bf16.mxu0 0
  %2645 = vmatpush2.bf16.msra.mxu0 0
  %2646 = vmatprep.subr.bf16.mxu0 0
  %2647 = vmatpush2.bf16.msra.mxu0 0
  %2648 = vmatprep.mubr.bf16.mxu0 0
  %2649 = vmatmul.mubr.bf16.gmra.mxu0 %v2608
  %v2650 = vpop.f32.mrf.mxu0
  %v2651 = vadd.f32 %v2593, %v2650
  %v2652 = vpop.f32.mrf.mxu0
  %v2653 = vpop.f32.mrf.mxu0
  %v2654 = vadd.f32 %v2593, %v2653
  %v2655 = vpop.f32.mrf.mxu0
  %2656 = vmatprep.mubr.bf16.mxu0 0
  %2657 = vmatmul.mubr.bf16.gmra.mxu0 %v2611
  %v2658 = vpop.f32.mrf.mxu0
  %v2659 = vadd.f32 %v2593, %v2658
  %v2660 = vpop.f32.mrf.mxu0
  %v2661 = vpop.f32.mrf.mxu0
  %v2662 = vadd.f32 %v2593, %v2661
  %v2663 = vpop.f32.mrf.mxu0
  %2664 = vmatprep.mubr.bf16.mxu0 0
  %2665 = vmatmul.mubr.bf16.gmra.mxu0 %v2614
  %v2666 = vpop.f32.mrf.mxu0
  %v2667 = vadd.f32 %v2593, %v2666
  %v2668 = vpop.f32.mrf.mxu0
  %v2669 = vpop.f32.mrf.mxu0
  %v2670 = vadd.f32 %v2593, %v2669
  %v2671 = vpop.f32.mrf.mxu0
  %2672 = vdwg.mxu0
  %s2673 = scalar_lea.vmem %s25, 16
  %v2674 = vld [vmem:[%s2673] sm:$0xf]
  %v2675 = vld [vmem:[%s2673 + $0x4] sm:$0xf]
  %v2676 = vld [vmem:[%s2673 + $0x8] sm:$0xf]
  %v2677 = vld [vmem:[%s2673 + $0xc] sm:$0xf]
  %s2678 = scalar_lea.vmem %s27, 1
  %v2679 = vld [vmem:[%s2678] sm:$0x1]
  %v2681 = vlaneseq
  %v2682 = vshrl.u32 %v2681, 7
  %v2683 = vsub.s32 0, %v2682
  %v2684 = vrot.slane %v2679, %v2683
  %v2690 = vunpack.c.l.b16 %v2674
  %v2691 = vunpack.c.l.b16 %v2675
  %v2692 = vunpack.c.l.b16 %v2676
  %v2693 = vunpack.c.l.b16 %v2677
  %v2694 = vpack.c.b16 %v2691, %v2690
  %v2695 = vpack.c.b16 %v2693, %v2692
  %2698 = vmatprep.subr.bf16.mxu0 0
  %2699 = vmatpush1.bf16.msra.mxu0 0
  %2700 = vmatprep.subr.bf16.mxu0 0
  %2701 = vmatpush1.bf16.msra.mxu0 0
  %2702 = vmatprep.subr.bf16.mxu0 0
  %2703 = vmatpush1.bf16.msra.mxu0 0
  %2704 = vmatprep.subr.bf16.mxu0 0
  %2705 = vmatpush1.bf16.msra.mxu0 0
  %2706 = vmatprep.subr.bf16.mxu0 0
  %2707 = vmatpush1.bf16.msra.mxu0 0
  %2708 = vmatprep.subr.bf16.mxu0 0
  %2709 = vmatpush1.bf16.msra.mxu0 0
  %2710 = vmatprep.subr.bf16.mxu0 0
  %2711 = vmatpush1.bf16.msra.mxu0 %v2695
  %2712 = vmatprep.subr.bf16.mxu0 0
  %2713 = vmatpush1.bf16.msra.mxu0 %v2694
  %2714 = vmatprep.subr.bf16.mxu0 0
  %2715 = vmatpush2.bf16.msra.mxu0 0
  %2716 = vmatprep.subr.bf16.mxu0 0
  %2717 = vmatpush2.bf16.msra.mxu0 0
  %2718 = vmatprep.subr.bf16.mxu0 0
  %2719 = vmatpush2.bf16.msra.mxu0 0
  %2720 = vmatprep.subr.bf16.mxu0 0
  %2721 = vmatpush2.bf16.msra.mxu0 0
  %2722 = vmatprep.subr.bf16.mxu0 0
  %2723 = vmatpush2.bf16.msra.mxu0 0
  %2724 = vmatprep.subr.bf16.mxu0 0
  %2725 = vmatpush2.bf16.msra.mxu0 0
  %2726 = vmatprep.subr.bf16.mxu0 0
  %2727 = vmatpush2.bf16.msra.mxu0 0
  %2728 = vmatprep.subr.bf16.mxu0 0
  %2729 = vmatpush2.bf16.msra.mxu0 0
  %2730 = vmatprep.mubr.bf16.mxu0 0
  %2731 = vmatmul.mubr.bf16.gmra.mxu0 %v2608
  %v2732 = vpop.f32.mrf.mxu0
  %v2733 = vadd.f32 %v2684, %v2732
  %v2734 = vpop.f32.mrf.mxu0
  %v2735 = vpop.f32.mrf.mxu0
  %v2736 = vadd.f32 %v2684, %v2735
  %v2737 = vpop.f32.mrf.mxu0
  %2738 = vmatprep.mubr.bf16.mxu0 0
  %2739 = vmatmul.mubr.bf16.gmra.mxu0 %v2611
  %v2740 = vpop.f32.mrf.mxu0
  %v2741 = vadd.f32 %v2684, %v2740
  %v2742 = vpop.f32.mrf.mxu0
  %v2743 = vpop.f32.mrf.mxu0
  %v2744 = vadd.f32 %v2684, %v2743
  %v2745 = vpop.f32.mrf.mxu0
  %2746 = vmatprep.mubr.bf16.mxu0 0
  %2747 = vmatmul.mubr.bf16.gmra.mxu0 %v2614
  %v2748 = vpop.f32.mrf.mxu0
  %v2749 = vadd.f32 %v2684, %v2748
  %v2750 = vpop.f32.mrf.mxu0
  %v2751 = vpop.f32.mrf.mxu0
  %v2752 = vadd.f32 %v2684, %v2751
  %v2753 = vpop.f32.mrf.mxu0
  %2754 = vdwg.mxu0
  %s2755 = scalar_lea.vmem %s29, 16
  %v2756 = vld [vmem:[%s2755] sm:$0xf]
  %v2757 = vld [vmem:[%s2755 + $0x4] sm:$0xf]
  %v2758 = vld [vmem:[%s2755 + $0x8] sm:$0xf]
  %v2759 = vld [vmem:[%s2755 + $0xc] sm:$0xf]
  %s2760 = scalar_lea.vmem %s31, 1
  %v2761 = vld [vmem:[%s2760] sm:$0x1]
  %v2763 = vlaneseq
  %v2764 = vshrl.u32 %v2763, 7
  %v2765 = vsub.s32 0, %v2764
  %v2766 = vrot.slane %v2761, %v2765
  %v2772 = vunpack.c.l.b16 %v2756
  %v2773 = vunpack.c.l.b16 %v2757
  %v2774 = vunpack.c.l.b16 %v2758
  %v2775 = vunpack.c.l.b16 %v2759
  %v2776 = vpack.c.b16 %v2773, %v2772
  %v2777 = vpack.c.b16 %v2775, %v2774
  %2780 = vmatprep.subr.bf16.mxu0 0
  %2781 = vmatpush1.bf16.msra.mxu0 0
  %2782 = vmatprep.subr.bf16.mxu0 0
  %2783 = vmatpush1.bf16.msra.mxu0 0
  %2784 = vmatprep.subr.bf16.mxu0 0
  %2785 = vmatpush1.bf16.msra.mxu0 0
  %2786 = vmatprep.subr.bf16.mxu0 0
  %2787 = vmatpush1.bf16.msra.mxu0 0
  %2788 = vmatprep.subr.bf16.mxu0 0
  %2789 = vmatpush1.bf16.msra.mxu0 0
  %2790 = vmatprep.subr.bf16.mxu0 0
  %2791 = vmatpush1.bf16.msra.mxu0 0
  %2792 = vmatprep.subr.bf16.mxu0 0
  %2793 = vmatpush1.bf16.msra.mxu0 %v2777
  %2794 = vmatprep.subr.bf16.mxu0 0
  %2795 = vmatpush1.bf16.msra.mxu0 %v2776
  %2796 = vmatprep.subr.bf16.mxu0 0
  %2797 = vmatpush2.bf16.msra.mxu0 0
  %2798 = vmatprep.subr.bf16.mxu0 0
  %2799 = vmatpush2.bf16.msra.mxu0 0
  %2800 = vmatprep.subr.bf16.mxu0 0
  %2801 = vmatpush2.bf16.msra.mxu0 0
  %2802 = vmatprep.subr.bf16.mxu0 0
  %2803 = vmatpush2.bf16.msra.mxu0 0
  %2804 = vmatprep.subr.bf16.mxu0 0
  %2805 = vmatpush2.bf16.msra.mxu0 0
  %2806 = vmatprep.subr.bf16.mxu0 0
  %2807 = vmatpush2.bf16.msra.mxu0 0
  %2808 = vmatprep.subr.bf16.mxu0 0
  %2809 = vmatpush2.bf16.msra.mxu0 0
  %2810 = vmatprep.subr.bf16.mxu0 0
  %2811 = vmatpush2.bf16.msra.mxu0 0
  %2812 = vmatprep.mubr.bf16.mxu0 0
  %2813 = vmatmul.mubr.bf16.gmra.mxu0 %v2608
  %v2814 = vpop.f32.mrf.mxu0
  %v2815 = vadd.f32 %v2766, %v2814
  %v2816 = vpop.f32.mrf.mxu0
  %v2817 = vpop.f32.mrf.mxu0
  %v2818 = vadd.f32 %v2766, %v2817
  %v2819 = vpop.f32.mrf.mxu0
  %2820 = vmatprep.mubr.bf16.mxu0 0
  %2821 = vmatmul.mubr.bf16.gmra.mxu0 %v2611
  %v2822 = vpop.f32.mrf.mxu0
  %v2823 = vadd.f32 %v2766, %v2822
  %v2824 = vpop.f32.mrf.mxu0
  %v2825 = vpop.f32.mrf.mxu0
  %v2826 = vadd.f32 %v2766, %v2825
  %v2827 = vpop.f32.mrf.mxu0
  %2828 = vmatprep.mubr.bf16.mxu0 0
  %2829 = vmatmul.mubr.bf16.gmra.mxu0 %v2614
  %v2830 = vpop.f32.mrf.mxu0
  %v2831 = vadd.f32 %v2766, %v2830
  %v2832 = vpop.f32.mrf.mxu0
  %v2833 = vpop.f32.mrf.mxu0
  %v2834 = vadd.f32 %v2766, %v2833
  %v2835 = vpop.f32.mrf.mxu0
  %2836 = vdwg.mxu0
  %v2837 = vpack.c.bf16 %v2654, %v2651
  %v2838 = vpack.c.bf16 %v2662, %v2659
  %v2839 = vpack.c.bf16 %v2670, %v2667
  %v2840 = vpack.c.bf16 %v2736, %v2733
  %v2841 = vpack.c.bf16 %v2744, %v2741
  %v2842 = vpack.c.bf16 %v2752, %v2749
  %v2843 = vpack.c.bf16 %v2818, %v2815
  %v2844 = vpack.c.bf16 %v2826, %v2823
  %v2845 = vpack.c.bf16 %v2834, %v2831
  %v2846 = vmul.bf16 %v2840, %v738
  %v2847 = vmul.bf16 %v2841, %v738
  %v2848 = vmul.bf16 %v2843, %v738
  %v2849 = vmul.bf16 %v2844, %v738
  %v2851 = vsel %vm367, %v2837, 0
  %v2854 = vsel %vm367, %v2838, 0
  %v2857 = vsel %vm367, %v2846, 0
  %v2860 = vsel %vm367, %v2847, 0
  %2862 = vmatprep.subr.bf16.mxu0 0
  %2863 = vmatpush1.bf16.xpose.msra.mxu0 0
  %2864 = vmatprep.subr.bf16.mxu0 0
  %2865 = vmatpush1.bf16.xpose.msra.mxu0 0
  %2866 = vmatprep.subr.bf16.mxu0 0
  %2867 = vmatpush1.bf16.xpose.msra.mxu0 0
  %2868 = vmatprep.subr.bf16.mxu0 0
  %2869 = vmatpush1.bf16.xpose.msra.mxu0 0
  %2870 = vmatprep.subr.bf16.mxu0 0
  %2871 = vmatpush1.bf16.xpose.msra.mxu0 0
  %2872 = vmatprep.subr.bf16.mxu0 0
  %2873 = vmatpush1.bf16.xpose.msra.mxu0 0
  %2874 = vmatprep.subr.bf16.mxu0 0
  %2875 = vmatpush1.bf16.xpose.msra.mxu0 %v2860
  %2876 = vmatprep.subr.bf16.mxu0 0
  %2877 = vmatpush1.bf16.xpose.msra.mxu0 %v2857
  %2878 = vmatprep.subr.bf16.mxu0 0
  %2879 = vmatpush2.bf16.xpose.msra.mxu0 0
  %2880 = vmatprep.subr.bf16.mxu0 0
  %2881 = vmatpush2.bf16.xpose.msra.mxu0 0
  %2882 = vmatprep.subr.bf16.mxu0 0
  %2883 = vmatpush2.bf16.xpose.msra.mxu0 0
  %2884 = vmatprep.subr.bf16.mxu0 0
  %2885 = vmatpush2.bf16.xpose.msra.mxu0 0
  %2886 = vmatprep.subr.bf16.mxu0 0
  %2887 = vmatpush2.bf16.xpose.msra.mxu0 0
  %2888 = vmatprep.subr.bf16.mxu0 0
  %2889 = vmatpush2.bf16.xpose.msra.mxu0 0
  %2890 = vmatprep.subr.bf16.mxu0 0
  %2891 = vmatpush2.bf16.xpose.msra.mxu0 0
  %2892 = vmatprep.subr.bf16.mxu0 0
  %2893 = vmatpush2.bf16.xpose.msra.mxu0 0
  %2894 = vmatprep.mubr.bf16.mxu0 0
  %2895 = vmatmul.mubr.bf16.gmra.mxu0 %v2851
  %v2896 = vpop.f32.mrf.mxu0
  %v2897 = vadd.f32 %v141, %v2896
  %v2898 = vpop.f32.mrf.mxu0
  %v2899 = vpop.f32.mrf.mxu0
  %v2900 = vadd.f32 %v141, %v2899
  %v2901 = vpop.f32.mrf.mxu0
  %2902 = vmatprep.mubr.bf16.mxu0 0
  %2903 = vmatmul.mubr.bf16.gmra.mxu0 %v2854
  %v2904 = vpop.f32.mrf.mxu0
  %v2905 = vadd.f32 %v141, %v2904
  %v2906 = vpop.f32.mrf.mxu0
  %v2907 = vpop.f32.mrf.mxu0
  %v2908 = vpop.f32.mrf.mxu0
  %2909 = vdwg.mxu0
  %v2910 = vsel %vm803, %v2897, -inf
  %2911 = vmax.xlane.f32.xlu0 %v2910
  %v2912 = vpop.xlane.xlu0 %2911
  %v2913 = vsel %vm803, %v2900, -inf
  %2914 = vmax.xlane.f32.xlu0 %v2913
  %v2915 = vpop.xlane.xlu0 %2914
  %v2916 = vsel %vm803, %v2905, -inf
  %2917 = vmax.xlane.f32.xlu0 %v2916
  %v2918 = vpop.xlane.xlu0 %2917
  %v2919 = vsub.f32 %v2897, %v2912
  %v2920 = vsub.f32 %v2900, %v2915
  %v2921 = vsub.f32 %v2905, %v2918
  %v2922 = vmul.f32 %v2919, 1.442695
  %v2923 = vpow.pop %v2922
  %v2924 = vmul.f32 %v2920, 1.442695
  %v2925 = vpow.pop %v2924
  %v2926 = vmul.f32 %v2921, 1.442695
  %v2927 = vpow.pop %v2926
  %v2928 = vsel %vm803, %v2923, 0.0
  %2929 = vadd.xlane.f32.xlu0 %v2928
  %v2930 = vpop.xlane.xlu0 %2929
  %v2931 = vsel %vm803, %v2925, 0.0
  %2932 = vadd.xlane.f32.xlu0 %v2931
  %v2933 = vpop.xlane.xlu0 %2932
  %v2934 = vsel %vm803, %v2927, 0.0
  %2935 = vadd.xlane.f32.xlu0 %v2934
  %v2936 = vpop.xlane.xlu0 %2935
  %v2937 = vrcp.pop %v2930
  %v2938 = vrcp.pop %v2933
  %v2939 = vrcp.pop %v2936
  %v2940 = vmul.f32 %v2923, %v2937
  %v2941 = vmul.f32 %v2925, %v2938
  %v2942 = vmul.f32 %v2927, %v2939
  %v2943 = vpack.c.bf16 %v2941, %v2940
  %v2944 = vpack.c.bf16 %v2942, %v2942
  %v2945 = vmul.bf16 %v2840, %v845
  %v2946 = vmul.bf16 %v2841, %v845
  %v2947 = vmul.bf16 %v2843, %v845
  %v2948 = vmul.bf16 %v2844, %v845
  %v2950 = vsel %vm367, %v2945, 0
  %v2953 = vsel %vm367, %v2946, 0
  %2955 = vmatprep.subr.bf16.mxu0 0
  %2956 = vmatpush1.bf16.xpose.msra.mxu0 0
  %2957 = vmatprep.subr.bf16.mxu0 0
  %2958 = vmatpush1.bf16.xpose.msra.mxu0 0
  %2959 = vmatprep.subr.bf16.mxu0 0
  %2960 = vmatpush1.bf16.xpose.msra.mxu0 0
  %2961 = vmatprep.subr.bf16.mxu0 0
  %2962 = vmatpush1.bf16.xpose.msra.mxu0 0
  %2963 = vmatprep.subr.bf16.mxu0 0
  %2964 = vmatpush1.bf16.xpose.msra.mxu0 0
  %2965 = vmatprep.subr.bf16.mxu0 0
  %2966 = vmatpush1.bf16.xpose.msra.mxu0 0
  %2967 = vmatprep.subr.bf16.mxu0 0
  %2968 = vmatpush1.bf16.xpose.msra.mxu0 %v2953
  %2969 = vmatprep.subr.bf16.mxu0 0
  %2970 = vmatpush1.bf16.xpose.msra.mxu0 %v2950
  %2971 = vmatprep.subr.bf16.mxu0 0
  %2972 = vmatpush2.bf16.xpose.msra.mxu0 0
  %2973 = vmatprep.subr.bf16.mxu0 0
  %2974 = vmatpush2.bf16.xpose.msra.mxu0 0
  %2975 = vmatprep.subr.bf16.mxu0 0
  %2976 = vmatpush2.bf16.xpose.msra.mxu0 0
  %2977 = vmatprep.subr.bf16.mxu0 0
  %2978 = vmatpush2.bf16.xpose.msra.mxu0 0
  %2979 = vmatprep.subr.bf16.mxu0 0
  %2980 = vmatpush2.bf16.xpose.msra.mxu0 0
  %2981 = vmatprep.subr.bf16.mxu0 0
  %2982 = vmatpush2.bf16.xpose.msra.mxu0 0
  %2983 = vmatprep.subr.bf16.mxu0 0
  %2984 = vmatpush2.bf16.xpose.msra.mxu0 0
  %2985 = vmatprep.subr.bf16.mxu0 0
  %2986 = vmatpush2.bf16.xpose.msra.mxu0 0
  %2987 = vmatprep.mubr.bf16.mxu0 0
  %2988 = vmatmul.mubr.bf16.gmra.mxu0 %v2851
  %v2989 = vpop.f32.mrf.mxu0
  %v2990 = vadd.f32 %v141, %v2989
  %v2991 = vpop.f32.mrf.mxu0
  %v2992 = vpop.f32.mrf.mxu0
  %v2993 = vadd.f32 %v141, %v2992
  %v2994 = vpop.f32.mrf.mxu0
  %2995 = vmatprep.mubr.bf16.mxu0 0
  %2996 = vmatmul.mubr.bf16.gmra.mxu0 %v2854
  %v2997 = vpop.f32.mrf.mxu0
  %v2998 = vadd.f32 %v141, %v2997
  %v2999 = vpop.f32.mrf.mxu0
  %v3000 = vpop.f32.mrf.mxu0
  %v3001 = vpop.f32.mrf.mxu0
  %3002 = vdwg.mxu0
  %v3003 = vsel %vm803, %v2990, -inf
  %3004 = vmax.xlane.f32.xlu0 %v3003
  %v3005 = vpop.xlane.xlu0 %3004
  %v3006 = vsel %vm803, %v2993, -inf
  %3007 = vmax.xlane.f32.xlu0 %v3006
  %v3008 = vpop.xlane.xlu0 %3007
  %v3009 = vsel %vm803, %v2998, -inf
  %3010 = vmax.xlane.f32.xlu0 %v3009
  %v3011 = vpop.xlane.xlu0 %3010
  %v3012 = vsub.f32 %v2990, %v3005
  %v3013 = vsub.f32 %v2993, %v3008
  %v3014 = vsub.f32 %v2998, %v3011
  %v3015 = vmul.f32 %v3012, 1.442695
  %v3016 = vpow.pop %v3015
  %v3017 = vmul.f32 %v3013, 1.442695
  %v3018 = vpow.pop %v3017
  %v3019 = vmul.f32 %v3014, 1.442695
  %v3020 = vpow.pop %v3019
  %v3021 = vsel %vm803, %v3016, 0.0
  %3022 = vadd.xlane.f32.xlu0 %v3021
  %v3023 = vpop.xlane.xlu0 %3022
  %v3024 = vsel %vm803, %v3018, 0.0
  %3025 = vadd.xlane.f32.xlu0 %v3024
  %v3026 = vpop.xlane.xlu0 %3025
  %v3027 = vsel %vm803, %v3020, 0.0
  %3028 = vadd.xlane.f32.xlu0 %v3027
  %v3029 = vpop.xlane.xlu0 %3028
  %v3030 = vrcp.pop %v3023
  %v3031 = vrcp.pop %v3026
  %v3032 = vrcp.pop %v3029
  %v3033 = vmul.f32 %v3016, %v3030
  %v3034 = vmul.f32 %v3018, %v3031
  %v3035 = vmul.f32 %v3020, %v3032
  %v3036 = vpack.c.bf16 %v3034, %v3033
  %v3037 = vpack.c.bf16 %v3035, %v3035
  %v3039 = vsel %vm803, %v3036, 0
  %v3042 = vsel %vm803, %v3037, 0
  %v3045 = vsel %vm945, %v2948, 0
  %3047 = vmatprep.subr.bf16.mxu0 0
  %3048 = vmatpush1.bf16.msra.mxu0 0
  %3049 = vmatprep.subr.bf16.mxu0 0
  %3050 = vmatpush1.bf16.msra.mxu0 0
  %3051 = vmatprep.subr.bf16.mxu0 0
  %3052 = vmatpush1.bf16.msra.mxu0 0
  %3053 = vmatprep.subr.bf16.mxu0 0
  %3054 = vmatpush1.bf16.msra.mxu0 0
  %3055 = vmatprep.subr.bf16.mxu0 0
  %3056 = vmatpush1.bf16.msra.mxu0 0
  %3057 = vmatprep.subr.bf16.mxu0 0
  %3058 = vmatpush1.bf16.msra.mxu0 0
  %3059 = vmatprep.subr.bf16.mxu0 0
  %3060 = vmatpush1.bf16.msra.mxu0 %v3045
  %3061 = vmatprep.subr.bf16.mxu0 0
  %3062 = vmatpush1.bf16.msra.mxu0 %v2947
  %3063 = vmatprep.subr.bf16.mxu0 0
  %3064 = vmatpush2.bf16.msra.mxu0 0
  %3065 = vmatprep.subr.bf16.mxu0 0
  %3066 = vmatpush2.bf16.msra.mxu0 0
  %3067 = vmatprep.subr.bf16.mxu0 0
  %3068 = vmatpush2.bf16.msra.mxu0 0
  %3069 = vmatprep.subr.bf16.mxu0 0
  %3070 = vmatpush2.bf16.msra.mxu0 0
  %3071 = vmatprep.subr.bf16.mxu0 0
  %3072 = vmatpush2.bf16.msra.mxu0 0
  %3073 = vmatprep.subr.bf16.mxu0 0
  %3074 = vmatpush2.bf16.msra.mxu0 0
  %3075 = vmatprep.subr.bf16.mxu0 0
  %3076 = vmatpush2.bf16.msra.mxu0 0
  %3077 = vmatprep.subr.bf16.mxu0 0
  %3078 = vmatpush2.bf16.msra.mxu0 0
  %3079 = vmatprep.mubr.bf16.mxu0 0
  %3080 = vmatmul.mubr.bf16.gmra.mxu0 %v3039
  %v3081 = vpop.f32.mrf.mxu0
  %v3082 = vadd.f32 0.0, %v3081
  %v3083 = vpop.f32.mrf.mxu0
  %v3084 = vpop.f32.mrf.mxu0
  %v3085 = vadd.f32 0.0, %v3084
  %v3086 = vpop.f32.mrf.mxu0
  %3087 = vmatprep.mubr.bf16.mxu0 0
  %3088 = vmatmul.mubr.bf16.gmra.mxu0 %v3042
  %v3089 = vpop.f32.mrf.mxu0
  %v3090 = vadd.f32 0.0, %v3089
  %v3091 = vpop.f32.mrf.mxu0
  %v3092 = vpop.f32.mrf.mxu0
  %v3093 = vpop.f32.mrf.mxu0
  %3094 = vdwg.mxu0
  %v3096 = vsel %vm803, %v2943, 0
  %v3099 = vsel %vm803, %v2944, 0
  %v3102 = vsel %vm945, %v2849, 0
  %3104 = vmatprep.subr.bf16.mxu0 0
  %3105 = vmatpush1.bf16.msra.mxu0 0
  %3106 = vmatprep.subr.bf16.mxu0 0
  %3107 = vmatpush1.bf16.msra.mxu0 0
  %3108 = vmatprep.subr.bf16.mxu0 0
  %3109 = vmatpush1.bf16.msra.mxu0 0
  %3110 = vmatprep.subr.bf16.mxu0 0
  %3111 = vmatpush1.bf16.msra.mxu0 0
  %3112 = vmatprep.subr.bf16.mxu0 0
  %3113 = vmatpush1.bf16.msra.mxu0 0
  %3114 = vmatprep.subr.bf16.mxu0 0
  %3115 = vmatpush1.bf16.msra.mxu0 0
  %3116 = vmatprep.subr.bf16.mxu0 0
  %3117 = vmatpush1.bf16.msra.mxu0 %v3102
  %3118 = vmatprep.subr.bf16.mxu0 0
  %3119 = vmatpush1.bf16.msra.mxu0 %v2848
  %3120 = vmatprep.subr.bf16.mxu0 0
  %3121 = vmatpush2.bf16.msra.mxu0 0
  %3122 = vmatprep.subr.bf16.mxu0 0
  %3123 = vmatpush2.bf16.msra.mxu0 0
  %3124 = vmatprep.subr.bf16.mxu0 0
  %3125 = vmatpush2.bf16.msra.mxu0 0
  %3126 = vmatprep.subr.bf16.mxu0 0
  %3127 = vmatpush2.bf16.msra.mxu0 0
  %3128 = vmatprep.subr.bf16.mxu0 0
  %3129 = vmatpush2.bf16.msra.mxu0 0
  %3130 = vmatprep.subr.bf16.mxu0 0
  %3131 = vmatpush2.bf16.msra.mxu0 0
  %3132 = vmatprep.subr.bf16.mxu0 0
  %3133 = vmatpush2.bf16.msra.mxu0 0
  %3134 = vmatprep.subr.bf16.mxu0 0
  %3135 = vmatpush2.bf16.msra.mxu0 0
  %3136 = vmatprep.mubr.bf16.mxu0 0
  %3137 = vmatmul.mubr.bf16.gmra.mxu0 %v3096
  %v3138 = vpop.f32.mrf.mxu0
  %v3139 = vadd.f32 %v3082, %v3138
  %v3140 = vpop.f32.mrf.mxu0
  %v3141 = vpop.f32.mrf.mxu0
  %v3142 = vadd.f32 %v3085, %v3141
  %v3143 = vpop.f32.mrf.mxu0
  %3144 = vmatprep.mubr.bf16.mxu0 0
  %3145 = vmatmul.mubr.bf16.gmra.mxu0 %v3099
  %v3146 = vpop.f32.mrf.mxu0
  %v3147 = vadd.f32 %v3090, %v3146
  %v3148 = vpop.f32.mrf.mxu0
  %v3149 = vpop.f32.mrf.mxu0
  %v3150 = vpop.f32.mrf.mxu0
  %3151 = vdwg.mxu0
  %v3152 = vmul.bf16 %v2840, %v1060
  %v3153 = vmul.bf16 %v2841, %v1060
  %v3154 = vmul.bf16 %v2843, %v1060
  %v3155 = vmul.bf16 %v2844, %v1060
  %v3157 = vsel %vm367, %v3152, 0
  %v3160 = vsel %vm367, %v3153, 0
  %3162 = vmatprep.subr.bf16.mxu0 0
  %3163 = vmatpush1.bf16.xpose.msra.mxu0 0
  %3164 = vmatprep.subr.bf16.mxu0 0
  %3165 = vmatpush1.bf16.xpose.msra.mxu0 0
  %3166 = vmatprep.subr.bf16.mxu0 0
  %3167 = vmatpush1.bf16.xpose.msra.mxu0 0
  %3168 = vmatprep.subr.bf16.mxu0 0
  %3169 = vmatpush1.bf16.xpose.msra.mxu0 0
  %3170 = vmatprep.subr.bf16.mxu0 0
  %3171 = vmatpush1.bf16.xpose.msra.mxu0 0
  %3172 = vmatprep.subr.bf16.mxu0 0
  %3173 = vmatpush1.bf16.xpose.msra.mxu0 0
  %3174 = vmatprep.subr.bf16.mxu0 0
  %3175 = vmatpush1.bf16.xpose.msra.mxu0 %v3160
  %3176 = vmatprep.subr.bf16.mxu0 0
  %3177 = vmatpush1.bf16.xpose.msra.mxu0 %v3157
  %3178 = vmatprep.subr.bf16.mxu0 0
  %3179 = vmatpush2.bf16.xpose.msra.mxu0 0
  %3180 = vmatprep.subr.bf16.mxu0 0
  %3181 = vmatpush2.bf16.xpose.msra.mxu0 0
  %3182 = vmatprep.subr.bf16.mxu0 0
  %3183 = vmatpush2.bf16.xpose.msra.mxu0 0
  %3184 = vmatprep.subr.bf16.mxu0 0
  %3185 = vmatpush2.bf16.xpose.msra.mxu0 0
  %3186 = vmatprep.subr.bf16.mxu0 0
  %3187 = vmatpush2.bf16.xpose.msra.mxu0 0
  %3188 = vmatprep.subr.bf16.mxu0 0
  %3189 = vmatpush2.bf16.xpose.msra.mxu0 0
  %3190 = vmatprep.subr.bf16.mxu0 0
  %3191 = vmatpush2.bf16.xpose.msra.mxu0 0
  %3192 = vmatprep.subr.bf16.mxu0 0
  %3193 = vmatpush2.bf16.xpose.msra.mxu0 0
  %3194 = vmatprep.mubr.bf16.mxu0 0
  %3195 = vmatmul.mubr.bf16.gmra.mxu0 %v2851
  %v3196 = vpop.f32.mrf.mxu0
  %v3197 = vadd.f32 %v141, %v3196
  %v3198 = vpop.f32.mrf.mxu0
  %v3199 = vpop.f32.mrf.mxu0
  %v3200 = vadd.f32 %v141, %v3199
  %v3201 = vpop.f32.mrf.mxu0
  %3202 = vmatprep.mubr.bf16.mxu0 0
  %3203 = vmatmul.mubr.bf16.gmra.mxu0 %v2854
  %v3204 = vpop.f32.mrf.mxu0
  %v3205 = vadd.f32 %v141, %v3204
  %v3206 = vpop.f32.mrf.mxu0
  %v3207 = vpop.f32.mrf.mxu0
  %v3208 = vpop.f32.mrf.mxu0
  %3209 = vdwg.mxu0
  %v3210 = vsel %vm803, %v3197, -inf
  %3211 = vmax.xlane.f32.xlu0 %v3210
  %v3212 = vpop.xlane.xlu0 %3211
  %v3213 = vsel %vm803, %v3200, -inf
  %3214 = vmax.xlane.f32.xlu0 %v3213
  %v3215 = vpop.xlane.xlu0 %3214
  %v3216 = vsel %vm803, %v3205, -inf
  %3217 = vmax.xlane.f32.xlu0 %v3216
  %v3218 = vpop.xlane.xlu0 %3217
  %v3219 = vsub.f32 %v3197, %v3212
  %v3220 = vsub.f32 %v3200, %v3215
  %v3221 = vsub.f32 %v3205, %v3218
  %v3222 = vmul.f32 %v3219, 1.442695
  %v3223 = vpow.pop %v3222
  %v3224 = vmul.f32 %v3220, 1.442695
  %v3225 = vpow.pop %v3224
  %v3226 = vmul.f32 %v3221, 1.442695
  %v3227 = vpow.pop %v3226
  %v3228 = vsel %vm803, %v3223, 0.0
  %3229 = vadd.xlane.f32.xlu0 %v3228
  %v3230 = vpop.xlane.xlu0 %3229
  %v3231 = vsel %vm803, %v3225, 0.0
  %3232 = vadd.xlane.f32.xlu0 %v3231
  %v3233 = vpop.xlane.xlu0 %3232
  %v3234 = vsel %vm803, %v3227, 0.0
  %3235 = vadd.xlane.f32.xlu0 %v3234
  %v3236 = vpop.xlane.xlu0 %3235
  %v3237 = vrcp.pop %v3230
  %v3238 = vrcp.pop %v3233
  %v3239 = vrcp.pop %v3236
  %v3240 = vmul.f32 %v3223, %v3237
  %v3241 = vmul.f32 %v3225, %v3238
  %v3242 = vmul.f32 %v3227, %v3239
  %v3243 = vpack.c.bf16 %v3241, %v3240
  %v3244 = vpack.c.bf16 %v3242, %v3242
  %v3246 = vsel %vm803, %v3243, 0
  %v3249 = vsel %vm803, %v3244, 0
  %v3252 = vsel %vm945, %v3155, 0
  %3254 = vmatprep.subr.bf16.mxu0 0
  %3255 = vmatpush1.bf16.msra.mxu0 0
  %3256 = vmatprep.subr.bf16.mxu0 0
  %3257 = vmatpush1.bf16.msra.mxu0 0
  %3258 = vmatprep.subr.bf16.mxu0 0
  %3259 = vmatpush1.bf16.msra.mxu0 0
  %3260 = vmatprep.subr.bf16.mxu0 0
  %3261 = vmatpush1.bf16.msra.mxu0 0
  %3262 = vmatprep.subr.bf16.mxu0 0
  %3263 = vmatpush1.bf16.msra.mxu0 0
  %3264 = vmatprep.subr.bf16.mxu0 0
  %3265 = vmatpush1.bf16.msra.mxu0 0
  %3266 = vmatprep.subr.bf16.mxu0 0
  %3267 = vmatpush1.bf16.msra.mxu0 %v3252
  %3268 = vmatprep.subr.bf16.mxu0 0
  %3269 = vmatpush1.bf16.msra.mxu0 %v3154
  %3270 = vmatprep.subr.bf16.mxu0 0
  %3271 = vmatpush2.bf16.msra.mxu0 0
  %3272 = vmatprep.subr.bf16.mxu0 0
  %3273 = vmatpush2.bf16.msra.mxu0 0
  %3274 = vmatprep.subr.bf16.mxu0 0
  %3275 = vmatpush2.bf16.msra.mxu0 0
  %3276 = vmatprep.subr.bf16.mxu0 0
  %3277 = vmatpush2.bf16.msra.mxu0 0
  %3278 = vmatprep.subr.bf16.mxu0 0
  %3279 = vmatpush2.bf16.msra.mxu0 0
  %3280 = vmatprep.subr.bf16.mxu0 0
  %3281 = vmatpush2.bf16.msra.mxu0 0
  %3282 = vmatprep.subr.bf16.mxu0 0
  %3283 = vmatpush2.bf16.msra.mxu0 0
  %3284 = vmatprep.subr.bf16.mxu0 0
  %3285 = vmatpush2.bf16.msra.mxu0 0
  %3286 = vmatprep.mubr.bf16.mxu0 0
  %3287 = vmatmul.mubr.bf16.gmra.mxu0 %v3246
  %v3288 = vpop.f32.mrf.mxu0
  %v3289 = vadd.f32 0.0, %v3288
  %v3290 = vpop.f32.mrf.mxu0
  %v3291 = vpop.f32.mrf.mxu0
  %v3292 = vadd.f32 0.0, %v3291
  %v3293 = vpop.f32.mrf.mxu0
  %3294 = vmatprep.mubr.bf16.mxu0 0
  %3295 = vmatmul.mubr.bf16.gmra.mxu0 %v3249
  %v3296 = vpop.f32.mrf.mxu0
  %v3297 = vadd.f32 0.0, %v3296
  %v3298 = vpop.f32.mrf.mxu0
  %v3299 = vpop.f32.mrf.mxu0
  %v3300 = vpop.f32.mrf.mxu0
  %3301 = vdwg.mxu0
  %v3302 = vadd.f32 %v3139, %v3289
  %v3303 = vadd.f32 %v3142, %v3292
  %v3304 = vadd.f32 %v3147, %v3297
  %v3305 = vmul.bf16 %v2840, %v1220
  %v3306 = vmul.bf16 %v2841, %v1220
  %v3307 = vmul.bf16 %v2843, %v1220
  %v3308 = vmul.bf16 %v2844, %v1220
  %v3310 = vsel %vm367, %v3305, 0
  %v3313 = vsel %vm367, %v3306, 0
  %3315 = vmatprep.subr.bf16.mxu0 0
  %3316 = vmatpush1.bf16.xpose.msra.mxu0 0
  %3317 = vmatprep.subr.bf16.mxu0 0
  %3318 = vmatpush1.bf16.xpose.msra.mxu0 0
  %3319 = vmatprep.subr.bf16.mxu0 0
  %3320 = vmatpush1.bf16.xpose.msra.mxu0 0
  %3321 = vmatprep.subr.bf16.mxu0 0
  %3322 = vmatpush1.bf16.xpose.msra.mxu0 0
  %3323 = vmatprep.subr.bf16.mxu0 0
  %3324 = vmatpush1.bf16.xpose.msra.mxu0 0
  %3325 = vmatprep.subr.bf16.mxu0 0
  %3326 = vmatpush1.bf16.xpose.msra.mxu0 0
  %3327 = vmatprep.subr.bf16.mxu0 0
  %3328 = vmatpush1.bf16.xpose.msra.mxu0 %v3313
  %3329 = vmatprep.subr.bf16.mxu0 0
  %3330 = vmatpush1.bf16.xpose.msra.mxu0 %v3310
  %3331 = vmatprep.subr.bf16.mxu0 0
  %3332 = vmatpush2.bf16.xpose.msra.mxu0 0
  %3333 = vmatprep.subr.bf16.mxu0 0
  %3334 = vmatpush2.bf16.xpose.msra.mxu0 0
  %3335 = vmatprep.subr.bf16.mxu0 0
  %3336 = vmatpush2.bf16.xpose.msra.mxu0 0
  %3337 = vmatprep.subr.bf16.mxu0 0
  %3338 = vmatpush2.bf16.xpose.msra.mxu0 0
  %3339 = vmatprep.subr.bf16.mxu0 0
  %3340 = vmatpush2.bf16.xpose.msra.mxu0 0
  %3341 = vmatprep.subr.bf16.mxu0 0
  %3342 = vmatpush2.bf16.xpose.msra.mxu0 0
  %3343 = vmatprep.subr.bf16.mxu0 0
  %3344 = vmatpush2.bf16.xpose.msra.mxu0 0
  %3345 = vmatprep.subr.bf16.mxu0 0
  %3346 = vmatpush2.bf16.xpose.msra.mxu0 0
  %3347 = vmatprep.mubr.bf16.mxu0 0
  %3348 = vmatmul.mubr.bf16.gmra.mxu0 %v2851
  %v3349 = vpop.f32.mrf.mxu0
  %v3350 = vadd.f32 %v141, %v3349
  %v3351 = vpop.f32.mrf.mxu0
  %v3352 = vpop.f32.mrf.mxu0
  %v3353 = vadd.f32 %v141, %v3352
  %v3354 = vpop.f32.mrf.mxu0
  %3355 = vmatprep.mubr.bf16.mxu0 0
  %3356 = vmatmul.mubr.bf16.gmra.mxu0 %v2854
  %v3357 = vpop.f32.mrf.mxu0
  %v3358 = vadd.f32 %v141, %v3357
  %v3359 = vpop.f32.mrf.mxu0
  %v3360 = vpop.f32.mrf.mxu0
  %v3361 = vpop.f32.mrf.mxu0
  %3362 = vdwg.mxu0
  %v3363 = vsel %vm803, %v3350, -inf
  %3364 = vmax.xlane.f32.xlu0 %v3363
  %v3365 = vpop.xlane.xlu0 %3364
  %v3366 = vsel %vm803, %v3353, -inf
  %3367 = vmax.xlane.f32.xlu0 %v3366
  %v3368 = vpop.xlane.xlu0 %3367
  %v3369 = vsel %vm803, %v3358, -inf
  %3370 = vmax.xlane.f32.xlu0 %v3369
  %v3371 = vpop.xlane.xlu0 %3370
  %v3372 = vsub.f32 %v3350, %v3365
  %v3373 = vsub.f32 %v3353, %v3368
  %v3374 = vsub.f32 %v3358, %v3371
  %v3375 = vmul.f32 %v3372, 1.442695
  %v3376 = vpow.pop %v3375
  %v3377 = vmul.f32 %v3373, 1.442695
  %v3378 = vpow.pop %v3377
  %v3379 = vmul.f32 %v3374, 1.442695
  %v3380 = vpow.pop %v3379
  %v3381 = vsel %vm803, %v3376, 0.0
  %3382 = vadd.xlane.f32.xlu0 %v3381
  %v3383 = vpop.xlane.xlu0 %3382
  %v3384 = vsel %vm803, %v3378, 0.0
  %3385 = vadd.xlane.f32.xlu0 %v3384
  %v3386 = vpop.xlane.xlu0 %3385
  %v3387 = vsel %vm803, %v3380, 0.0
  %3388 = vadd.xlane.f32.xlu0 %v3387
  %v3389 = vpop.xlane.xlu0 %3388
  %v3390 = vrcp.pop %v3383
  %v3391 = vrcp.pop %v3386
  %v3392 = vrcp.pop %v3389
  %v3393 = vmul.f32 %v3376, %v3390
  %v3394 = vmul.f32 %v3378, %v3391
  %v3395 = vmul.f32 %v3380, %v3392
  %v3396 = vpack.c.bf16 %v3394, %v3393
  %v3397 = vpack.c.bf16 %v3395, %v3395
  %v3399 = vsel %vm803, %v3396, 0
  %v3402 = vsel %vm803, %v3397, 0
  %v3405 = vsel %vm945, %v3308, 0
  %3407 = vmatprep.subr.bf16.mxu0 0
  %3408 = vmatpush1.bf16.msra.mxu0 0
  %3409 = vmatprep.subr.bf16.mxu0 0
  %3410 = vmatpush1.bf16.msra.mxu0 0
  %3411 = vmatprep.subr.bf16.mxu0 0
  %3412 = vmatpush1.bf16.msra.mxu0 0
  %3413 = vmatprep.subr.bf16.mxu0 0
  %3414 = vmatpush1.bf16.msra.mxu0 0
  %3415 = vmatprep.subr.bf16.mxu0 0
  %3416 = vmatpush1.bf16.msra.mxu0 0
  %3417 = vmatprep.subr.bf16.mxu0 0
  %3418 = vmatpush1.bf16.msra.mxu0 0
  %3419 = vmatprep.subr.bf16.mxu0 0
  %3420 = vmatpush1.bf16.msra.mxu0 %v3405
  %3421 = vmatprep.subr.bf16.mxu0 0
  %3422 = vmatpush1.bf16.msra.mxu0 %v3307
  %3423 = vmatprep.subr.bf16.mxu0 0
  %3424 = vmatpush2.bf16.msra.mxu0 0
  %3425 = vmatprep.subr.bf16.mxu0 0
  %3426 = vmatpush2.bf16.msra.mxu0 0
  %3427 = vmatprep.subr.bf16.mxu0 0
  %3428 = vmatpush2.bf16.msra.mxu0 0
  %3429 = vmatprep.subr.bf16.mxu0 0
  %3430 = vmatpush2.bf16.msra.mxu0 0
  %3431 = vmatprep.subr.bf16.mxu0 0
  %3432 = vmatpush2.bf16.msra.mxu0 0
  %3433 = vmatprep.subr.bf16.mxu0 0
  %3434 = vmatpush2.bf16.msra.mxu0 0
  %3435 = vmatprep.subr.bf16.mxu0 0
  %3436 = vmatpush2.bf16.msra.mxu0 0
  %3437 = vmatprep.subr.bf16.mxu0 0
  %3438 = vmatpush2.bf16.msra.mxu0 0
  %3439 = vmatprep.mubr.bf16.mxu0 0
  %3440 = vmatmul.mubr.bf16.gmra.mxu0 %v3399
  %v3441 = vpop.f32.mrf.mxu0
  %v3442 = vadd.f32 0.0, %v3441
  %v3443 = vpop.f32.mrf.mxu0
  %v3444 = vpop.f32.mrf.mxu0
  %v3445 = vadd.f32 0.0, %v3444
  %v3446 = vpop.f32.mrf.mxu0
  %3447 = vmatprep.mubr.bf16.mxu0 0
  %3448 = vmatmul.mubr.bf16.gmra.mxu0 %v3402
  %v3449 = vpop.f32.mrf.mxu0
  %v3450 = vadd.f32 0.0, %v3449
  %v3451 = vpop.f32.mrf.mxu0
  %v3452 = vpop.f32.mrf.mxu0
  %v3453 = vpop.f32.mrf.mxu0
  %3454 = vdwg.mxu0
  %v3455 = vadd.f32 %v3302, %v3442
  %v3456 = vadd.f32 %v3303, %v3445
  %v3457 = vadd.f32 %v3304, %v3450
  %v3458 = vmul.bf16 %v2842, %v738
  %v3459 = vmul.bf16 %v2845, %v738
  %v3462 = vrot.slane %v2838, 4
  %v3463 = vrot.slane %v2839, 4
  %v3464 = vsel %vm1378, %v3462, %v3463
  %v3467 = vrot.slane %v2847, 4
  %v3468 = vrot.slane %v3458, 4
  %v3469 = vsel %vm1378, %v3467, %v3468
  %v3471 = vsel %vm367, %v3464, 0
  %v3474 = vsel %vm367, %v3463, 0
  %v3477 = vsel %vm367, %v3469, 0
  %v3480 = vsel %vm367, %v3468, 0
  %3482 = vmatprep.subr.bf16.mxu0 0
  %3483 = vmatpush1.bf16.xpose.msra.mxu0 0
  %3484 = vmatprep.subr.bf16.mxu0 0
  %3485 = vmatpush1.bf16.xpose.msra.mxu0 0
  %3486 = vmatprep.subr.bf16.mxu0 0
  %3487 = vmatpush1.bf16.xpose.msra.mxu0 0
  %3488 = vmatprep.subr.bf16.mxu0 0
  %3489 = vmatpush1.bf16.xpose.msra.mxu0 0
  %3490 = vmatprep.subr.bf16.mxu0 0
  %3491 = vmatpush1.bf16.xpose.msra.mxu0 0
  %3492 = vmatprep.subr.bf16.mxu0 0
  %3493 = vmatpush1.bf16.xpose.msra.mxu0 0
  %3494 = vmatprep.subr.bf16.mxu0 0
  %3495 = vmatpush1.bf16.xpose.msra.mxu0 %v3480
  %3496 = vmatprep.subr.bf16.mxu0 0
  %3497 = vmatpush1.bf16.xpose.msra.mxu0 %v3477
  %3498 = vmatprep.subr.bf16.mxu0 0
  %3499 = vmatpush2.bf16.xpose.msra.mxu0 0
  %3500 = vmatprep.subr.bf16.mxu0 0
  %3501 = vmatpush2.bf16.xpose.msra.mxu0 0
  %3502 = vmatprep.subr.bf16.mxu0 0
  %3503 = vmatpush2.bf16.xpose.msra.mxu0 0
  %3504 = vmatprep.subr.bf16.mxu0 0
  %3505 = vmatpush2.bf16.xpose.msra.mxu0 0
  %3506 = vmatprep.subr.bf16.mxu0 0
  %3507 = vmatpush2.bf16.xpose.msra.mxu0 0
  %3508 = vmatprep.subr.bf16.mxu0 0
  %3509 = vmatpush2.bf16.xpose.msra.mxu0 0
  %3510 = vmatprep.subr.bf16.mxu0 0
  %3511 = vmatpush2.bf16.xpose.msra.mxu0 0
  %3512 = vmatprep.subr.bf16.mxu0 0
  %3513 = vmatpush2.bf16.xpose.msra.mxu0 0
  %3514 = vmatprep.mubr.bf16.mxu0 0
  %3515 = vmatmul.mubr.bf16.gmra.mxu0 %v3471
  %v3516 = vpop.f32.mrf.mxu0
  %v3517 = vadd.f32 %v141, %v3516
  %v3518 = vpop.f32.mrf.mxu0
  %v3519 = vpop.f32.mrf.mxu0
  %v3520 = vadd.f32 %v141, %v3519
  %v3521 = vpop.f32.mrf.mxu0
  %3522 = vmatprep.mubr.bf16.mxu0 0
  %3523 = vmatmul.mubr.bf16.gmra.mxu0 %v3474
  %v3524 = vpop.f32.mrf.mxu0
  %v3525 = vadd.f32 %v141, %v3524
  %v3526 = vpop.f32.mrf.mxu0
  %v3527 = vpop.f32.mrf.mxu0
  %v3528 = vpop.f32.mrf.mxu0
  %3529 = vdwg.mxu0
  %v3530 = vsel %vm803, %v3517, -inf
  %3531 = vmax.xlane.f32.xlu0 %v3530
  %v3532 = vpop.xlane.xlu0 %3531
  %v3533 = vsel %vm803, %v3520, -inf
  %3534 = vmax.xlane.f32.xlu0 %v3533
  %v3535 = vpop.xlane.xlu0 %3534
  %v3536 = vsel %vm803, %v3525, -inf
  %3537 = vmax.xlane.f32.xlu0 %v3536
  %v3538 = vpop.xlane.xlu0 %3537
  %v3539 = vsub.f32 %v3517, %v3532
  %v3540 = vsub.f32 %v3520, %v3535
  %v3541 = vsub.f32 %v3525, %v3538
  %v3542 = vmul.f32 %v3539, 1.442695
  %v3543 = vpow.pop %v3542
  %v3544 = vmul.f32 %v3540, 1.442695
  %v3545 = vpow.pop %v3544
  %v3546 = vmul.f32 %v3541, 1.442695
  %v3547 = vpow.pop %v3546
  %v3548 = vsel %vm803, %v3543, 0.0
  %3549 = vadd.xlane.f32.xlu0 %v3548
  %v3550 = vpop.xlane.xlu0 %3549
  %v3551 = vsel %vm803, %v3545, 0.0
  %3552 = vadd.xlane.f32.xlu0 %v3551
  %v3553 = vpop.xlane.xlu0 %3552
  %v3554 = vsel %vm803, %v3547, 0.0
  %3555 = vadd.xlane.f32.xlu0 %v3554
  %v3556 = vpop.xlane.xlu0 %3555
  %v3557 = vrcp.pop %v3550
  %v3558 = vrcp.pop %v3553
  %v3559 = vrcp.pop %v3556
  %v3560 = vmul.f32 %v3543, %v3557
  %v3561 = vmul.f32 %v3545, %v3558
  %v3562 = vmul.f32 %v3547, %v3559
  %v3563 = vpack.c.bf16 %v3561, %v3560
  %v3564 = vpack.c.bf16 %v3562, %v3562
  %v3565 = vmul.bf16 %v2842, %v845
  %v3566 = vmul.bf16 %v2845, %v845
  %v3569 = vrot.slane %v2946, 4
  %v3570 = vrot.slane %v3565, 4
  %v3571 = vsel %vm1378, %v3569, %v3570
  %v3573 = vsel %vm367, %v3571, 0
  %v3576 = vsel %vm367, %v3570, 0
  %3578 = vmatprep.subr.bf16.mxu0 0
  %3579 = vmatpush1.bf16.xpose.msra.mxu0 0
  %3580 = vmatprep.subr.bf16.mxu0 0
  %3581 = vmatpush1.bf16.xpose.msra.mxu0 0
  %3582 = vmatprep.subr.bf16.mxu0 0
  %3583 = vmatpush1.bf16.xpose.msra.mxu0 0
  %3584 = vmatprep.subr.bf16.mxu0 0
  %3585 = vmatpush1.bf16.xpose.msra.mxu0 0
  %3586 = vmatprep.subr.bf16.mxu0 0
  %3587 = vmatpush1.bf16.xpose.msra.mxu0 0
  %3588 = vmatprep.subr.bf16.mxu0 0
  %3589 = vmatpush1.bf16.xpose.msra.mxu0 0
  %3590 = vmatprep.subr.bf16.mxu0 0
  %3591 = vmatpush1.bf16.xpose.msra.mxu0 %v3576
  %3592 = vmatprep.subr.bf16.mxu0 0
  %3593 = vmatpush1.bf16.xpose.msra.mxu0 %v3573
  %3594 = vmatprep.subr.bf16.mxu0 0
  %3595 = vmatpush2.bf16.xpose.msra.mxu0 0
  %3596 = vmatprep.subr.bf16.mxu0 0
  %3597 = vmatpush2.bf16.xpose.msra.mxu0 0
  %3598 = vmatprep.subr.bf16.mxu0 0
  %3599 = vmatpush2.bf16.xpose.msra.mxu0 0
  %3600 = vmatprep.subr.bf16.mxu0 0
  %3601 = vmatpush2.bf16.xpose.msra.mxu0 0
  %3602 = vmatprep.subr.bf16.mxu0 0
  %3603 = vmatpush2.bf16.xpose.msra.mxu0 0
  %3604 = vmatprep.subr.bf16.mxu0 0
  %3605 = vmatpush2.bf16.xpose.msra.mxu0 0
  %3606 = vmatprep.subr.bf16.mxu0 0
  %3607 = vmatpush2.bf16.xpose.msra.mxu0 0
  %3608 = vmatprep.subr.bf16.mxu0 0
  %3609 = vmatpush2.bf16.xpose.msra.mxu0 0
  %3610 = vmatprep.mubr.bf16.mxu0 0
  %3611 = vmatmul.mubr.bf16.gmra.mxu0 %v3471
  %v3612 = vpop.f32.mrf.mxu0
  %v3613 = vadd.f32 %v141, %v3612
  %v3614 = vpop.f32.mrf.mxu0
  %v3615 = vpop.f32.mrf.mxu0
  %v3616 = vadd.f32 %v141, %v3615
  %v3617 = vpop.f32.mrf.mxu0
  %3618 = vmatprep.mubr.bf16.mxu0 0
  %3619 = vmatmul.mubr.bf16.gmra.mxu0 %v3474
  %v3620 = vpop.f32.mrf.mxu0
  %v3621 = vadd.f32 %v141, %v3620
  %v3622 = vpop.f32.mrf.mxu0
  %v3623 = vpop.f32.mrf.mxu0
  %v3624 = vpop.f32.mrf.mxu0
  %3625 = vdwg.mxu0
  %v3626 = vsel %vm803, %v3613, -inf
  %3627 = vmax.xlane.f32.xlu0 %v3626
  %v3628 = vpop.xlane.xlu0 %3627
  %v3629 = vsel %vm803, %v3616, -inf
  %3630 = vmax.xlane.f32.xlu0 %v3629
  %v3631 = vpop.xlane.xlu0 %3630
  %v3632 = vsel %vm803, %v3621, -inf
  %3633 = vmax.xlane.f32.xlu0 %v3632
  %v3634 = vpop.xlane.xlu0 %3633
  %v3635 = vsub.f32 %v3613, %v3628
  %v3636 = vsub.f32 %v3616, %v3631
  %v3637 = vsub.f32 %v3621, %v3634
  %v3638 = vmul.f32 %v3635, 1.442695
  %v3639 = vpow.pop %v3638
  %v3640 = vmul.f32 %v3636, 1.442695
  %v3641 = vpow.pop %v3640
  %v3642 = vmul.f32 %v3637, 1.442695
  %v3643 = vpow.pop %v3642
  %v3644 = vsel %vm803, %v3639, 0.0
  %3645 = vadd.xlane.f32.xlu0 %v3644
  %v3646 = vpop.xlane.xlu0 %3645
  %v3647 = vsel %vm803, %v3641, 0.0
  %3648 = vadd.xlane.f32.xlu0 %v3647
  %v3649 = vpop.xlane.xlu0 %3648
  %v3650 = vsel %vm803, %v3643, 0.0
  %3651 = vadd.xlane.f32.xlu0 %v3650
  %v3652 = vpop.xlane.xlu0 %3651
  %v3653 = vrcp.pop %v3646
  %v3654 = vrcp.pop %v3649
  %v3655 = vrcp.pop %v3652
  %v3656 = vmul.f32 %v3639, %v3653
  %v3657 = vmul.f32 %v3641, %v3654
  %v3658 = vmul.f32 %v3643, %v3655
  %v3659 = vpack.c.bf16 %v3657, %v3656
  %v3660 = vpack.c.bf16 %v3658, %v3658
  %v3663 = vrot.slane %v2948, 4
  %v3664 = vrot.slane %v3566, 4
  %v3665 = vsel %vm1378, %v3663, %v3664
  %v3668 = vsel %vm803, %v3659, 0
  %v3671 = vsel %vm803, %v3660, 0
  %v3674 = vsel %vm945, %v3664, 0
  %3676 = vmatprep.subr.bf16.mxu0 0
  %3677 = vmatpush1.bf16.msra.mxu0 0
  %3678 = vmatprep.subr.bf16.mxu0 0
  %3679 = vmatpush1.bf16.msra.mxu0 0
  %3680 = vmatprep.subr.bf16.mxu0 0
  %3681 = vmatpush1.bf16.msra.mxu0 0
  %3682 = vmatprep.subr.bf16.mxu0 0
  %3683 = vmatpush1.bf16.msra.mxu0 0
  %3684 = vmatprep.subr.bf16.mxu0 0
  %3685 = vmatpush1.bf16.msra.mxu0 0
  %3686 = vmatprep.subr.bf16.mxu0 0
  %3687 = vmatpush1.bf16.msra.mxu0 0
  %3688 = vmatprep.subr.bf16.mxu0 0
  %3689 = vmatpush1.bf16.msra.mxu0 %v3674
  %3690 = vmatprep.subr.bf16.mxu0 0
  %3691 = vmatpush1.bf16.msra.mxu0 %v3665
  %3692 = vmatprep.subr.bf16.mxu0 0
  %3693 = vmatpush2.bf16.msra.mxu0 0
  %3694 = vmatprep.subr.bf16.mxu0 0
  %3695 = vmatpush2.bf16.msra.mxu0 0
  %3696 = vmatprep.subr.bf16.mxu0 0
  %3697 = vmatpush2.bf16.msra.mxu0 0
  %3698 = vmatprep.subr.bf16.mxu0 0
  %3699 = vmatpush2.bf16.msra.mxu0 0
  %3700 = vmatprep.subr.bf16.mxu0 0
  %3701 = vmatpush2.bf16.msra.mxu0 0
  %3702 = vmatprep.subr.bf16.mxu0 0
  %3703 = vmatpush2.bf16.msra.mxu0 0
  %3704 = vmatprep.subr.bf16.mxu0 0
  %3705 = vmatpush2.bf16.msra.mxu0 0
  %3706 = vmatprep.subr.bf16.mxu0 0
  %3707 = vmatpush2.bf16.msra.mxu0 0
  %3708 = vmatprep.mubr.bf16.mxu0 0
  %3709 = vmatmul.mubr.bf16.gmra.mxu0 %v3668
  %v3710 = vpop.f32.mrf.mxu0
  %v3711 = vadd.f32 0.0, %v3710
  %v3712 = vpop.f32.mrf.mxu0
  %v3713 = vpop.f32.mrf.mxu0
  %v3714 = vadd.f32 0.0, %v3713
  %v3715 = vpop.f32.mrf.mxu0
  %3716 = vmatprep.mubr.bf16.mxu0 0
  %3717 = vmatmul.mubr.bf16.gmra.mxu0 %v3671
  %v3718 = vpop.f32.mrf.mxu0
  %v3719 = vadd.f32 0.0, %v3718
  %v3720 = vpop.f32.mrf.mxu0
  %v3721 = vpop.f32.mrf.mxu0
  %v3722 = vpop.f32.mrf.mxu0
  %3723 = vdwg.mxu0
  %v3726 = vrot.slane %v2849, 4
  %v3727 = vrot.slane %v3459, 4
  %v3728 = vsel %vm1378, %v3726, %v3727
  %v3731 = vsel %vm803, %v3563, 0
  %v3734 = vsel %vm803, %v3564, 0
  %v3737 = vsel %vm945, %v3727, 0
  %3739 = vmatprep.subr.bf16.mxu0 0
  %3740 = vmatpush1.bf16.msra.mxu0 0
  %3741 = vmatprep.subr.bf16.mxu0 0
  %3742 = vmatpush1.bf16.msra.mxu0 0
  %3743 = vmatprep.subr.bf16.mxu0 0
  %3744 = vmatpush1.bf16.msra.mxu0 0
  %3745 = vmatprep.subr.bf16.mxu0 0
  %3746 = vmatpush1.bf16.msra.mxu0 0
  %3747 = vmatprep.subr.bf16.mxu0 0
  %3748 = vmatpush1.bf16.msra.mxu0 0
  %3749 = vmatprep.subr.bf16.mxu0 0
  %3750 = vmatpush1.bf16.msra.mxu0 0
  %3751 = vmatprep.subr.bf16.mxu0 0
  %3752 = vmatpush1.bf16.msra.mxu0 %v3737
  %3753 = vmatprep.subr.bf16.mxu0 0
  %3754 = vmatpush1.bf16.msra.mxu0 %v3728
  %3755 = vmatprep.subr.bf16.mxu0 0
  %3756 = vmatpush2.bf16.msra.mxu0 0
  %3757 = vmatprep.subr.bf16.mxu0 0
  %3758 = vmatpush2.bf16.msra.mxu0 0
  %3759 = vmatprep.subr.bf16.mxu0 0
  %3760 = vmatpush2.bf16.msra.mxu0 0
  %3761 = vmatprep.subr.bf16.mxu0 0
  %3762 = vmatpush2.bf16.msra.mxu0 0
  %3763 = vmatprep.subr.bf16.mxu0 0
  %3764 = vmatpush2.bf16.msra.mxu0 0
  %3765 = vmatprep.subr.bf16.mxu0 0
  %3766 = vmatpush2.bf16.msra.mxu0 0
  %3767 = vmatprep.subr.bf16.mxu0 0
  %3768 = vmatpush2.bf16.msra.mxu0 0
  %3769 = vmatprep.subr.bf16.mxu0 0
  %3770 = vmatpush2.bf16.msra.mxu0 0
  %3771 = vmatprep.mubr.bf16.mxu0 0
  %3772 = vmatmul.mubr.bf16.gmra.mxu0 %v3731
  %v3773 = vpop.f32.mrf.mxu0
  %v3774 = vadd.f32 %v3711, %v3773
  %v3775 = vpop.f32.mrf.mxu0
  %v3776 = vpop.f32.mrf.mxu0
  %v3777 = vadd.f32 %v3714, %v3776
  %v3778 = vpop.f32.mrf.mxu0
  %3779 = vmatprep.mubr.bf16.mxu0 0
  %3780 = vmatmul.mubr.bf16.gmra.mxu0 %v3734
  %v3781 = vpop.f32.mrf.mxu0
  %v3782 = vadd.f32 %v3719, %v3781
  %v3783 = vpop.f32.mrf.mxu0
  %v3784 = vpop.f32.mrf.mxu0
  %v3785 = vpop.f32.mrf.mxu0
  %3786 = vdwg.mxu0
  %v3787 = vmul.bf16 %v2842, %v1060
  %v3788 = vmul.bf16 %v2845, %v1060
  %v3791 = vrot.slane %v3153, 4
  %v3792 = vrot.slane %v3787, 4
  %v3793 = vsel %vm1378, %v3791, %v3792
  %v3795 = vsel %vm367, %v3793, 0
  %v3798 = vsel %vm367, %v3792, 0
  %3800 = vmatprep.subr.bf16.mxu0 0
  %3801 = vmatpush1.bf16.xpose.msra.mxu0 0
  %3802 = vmatprep.subr.bf16.mxu0 0
  %3803 = vmatpush1.bf16.xpose.msra.mxu0 0
  %3804 = vmatprep.subr.bf16.mxu0 0
  %3805 = vmatpush1.bf16.xpose.msra.mxu0 0
  %3806 = vmatprep.subr.bf16.mxu0 0
  %3807 = vmatpush1.bf16.xpose.msra.mxu0 0
  %3808 = vmatprep.subr.bf16.mxu0 0
  %3809 = vmatpush1.bf16.xpose.msra.mxu0 0
  %3810 = vmatprep.subr.bf16.mxu0 0
  %3811 = vmatpush1.bf16.xpose.msra.mxu0 0
  %3812 = vmatprep.subr.bf16.mxu0 0
  %3813 = vmatpush1.bf16.xpose.msra.mxu0 %v3798
  %3814 = vmatprep.subr.bf16.mxu0 0
  %3815 = vmatpush1.bf16.xpose.msra.mxu0 %v3795
  %3816 = vmatprep.subr.bf16.mxu0 0
  %3817 = vmatpush2.bf16.xpose.msra.mxu0 0
  %3818 = vmatprep.subr.bf16.mxu0 0
  %3819 = vmatpush2.bf16.xpose.msra.mxu0 0
  %3820 = vmatprep.subr.bf16.mxu0 0
  %3821 = vmatpush2.bf16.xpose.msra.mxu0 0
  %3822 = vmatprep.subr.bf16.mxu0 0
  %3823 = vmatpush2.bf16.xpose.msra.mxu0 0
  %3824 = vmatprep.subr.bf16.mxu0 0
  %3825 = vmatpush2.bf16.xpose.msra.mxu0 0
  %3826 = vmatprep.subr.bf16.mxu0 0
  %3827 = vmatpush2.bf16.xpose.msra.mxu0 0
  %3828 = vmatprep.subr.bf16.mxu0 0
  %3829 = vmatpush2.bf16.xpose.msra.mxu0 0
  %3830 = vmatprep.subr.bf16.mxu0 0
  %3831 = vmatpush2.bf16.xpose.msra.mxu0 0
  %3832 = vmatprep.mubr.bf16.mxu0 0
  %3833 = vmatmul.mubr.bf16.gmra.mxu0 %v3471
  %v3834 = vpop.f32.mrf.mxu0
  %v3835 = vadd.f32 %v141, %v3834
  %v3836 = vpop.f32.mrf.mxu0
  %v3837 = vpop.f32.mrf.mxu0
  %v3838 = vadd.f32 %v141, %v3837
  %v3839 = vpop.f32.mrf.mxu0
  %3840 = vmatprep.mubr.bf16.mxu0 0
  %3841 = vmatmul.mubr.bf16.gmra.mxu0 %v3474
  %v3842 = vpop.f32.mrf.mxu0
  %v3843 = vadd.f32 %v141, %v3842
  %v3844 = vpop.f32.mrf.mxu0
  %v3845 = vpop.f32.mrf.mxu0
  %v3846 = vpop.f32.mrf.mxu0
  %3847 = vdwg.mxu0
  %v3848 = vsel %vm803, %v3835, -inf
  %3849 = vmax.xlane.f32.xlu0 %v3848
  %v3850 = vpop.xlane.xlu0 %3849
  %v3851 = vsel %vm803, %v3838, -inf
  %3852 = vmax.xlane.f32.xlu0 %v3851
  %v3853 = vpop.xlane.xlu0 %3852
  %v3854 = vsel %vm803, %v3843, -inf
  %3855 = vmax.xlane.f32.xlu0 %v3854
  %v3856 = vpop.xlane.xlu0 %3855
  %v3857 = vsub.f32 %v3835, %v3850
  %v3858 = vsub.f32 %v3838, %v3853
  %v3859 = vsub.f32 %v3843, %v3856
  %v3860 = vmul.f32 %v3857, 1.442695
  %v3861 = vpow.pop %v3860
  %v3862 = vmul.f32 %v3858, 1.442695
  %v3863 = vpow.pop %v3862
  %v3864 = vmul.f32 %v3859, 1.442695
  %v3865 = vpow.pop %v3864
  %v3866 = vsel %vm803, %v3861, 0.0
  %3867 = vadd.xlane.f32.xlu0 %v3866
  %v3868 = vpop.xlane.xlu0 %3867
  %v3869 = vsel %vm803, %v3863, 0.0
  %3870 = vadd.xlane.f32.xlu0 %v3869
  %v3871 = vpop.xlane.xlu0 %3870
  %v3872 = vsel %vm803, %v3865, 0.0
  %3873 = vadd.xlane.f32.xlu0 %v3872
  %v3874 = vpop.xlane.xlu0 %3873
  %v3875 = vrcp.pop %v3868
  %v3876 = vrcp.pop %v3871
  %v3877 = vrcp.pop %v3874
  %v3878 = vmul.f32 %v3861, %v3875
  %v3879 = vmul.f32 %v3863, %v3876
  %v3880 = vmul.f32 %v3865, %v3877
  %v3881 = vpack.c.bf16 %v3879, %v3878
  %v3882 = vpack.c.bf16 %v3880, %v3880
  %v3885 = vrot.slane %v3155, 4
  %v3886 = vrot.slane %v3788, 4
  %v3887 = vsel %vm1378, %v3885, %v3886
  %v3890 = vsel %vm803, %v3881, 0
  %v3893 = vsel %vm803, %v3882, 0
  %v3896 = vsel %vm945, %v3886, 0
  %3898 = vmatprep.subr.bf16.mxu0 0
  %3899 = vmatpush1.bf16.msra.mxu0 0
  %3900 = vmatprep.subr.bf16.mxu0 0
  %3901 = vmatpush1.bf16.msra.mxu0 0
  %3902 = vmatprep.subr.bf16.mxu0 0
  %3903 = vmatpush1.bf16.msra.mxu0 0
  %3904 = vmatprep.subr.bf16.mxu0 0
  %3905 = vmatpush1.bf16.msra.mxu0 0
  %3906 = vmatprep.subr.bf16.mxu0 0
  %3907 = vmatpush1.bf16.msra.mxu0 0
  %3908 = vmatprep.subr.bf16.mxu0 0
  %3909 = vmatpush1.bf16.msra.mxu0 0
  %3910 = vmatprep.subr.bf16.mxu0 0
  %3911 = vmatpush1.bf16.msra.mxu0 %v3896
  %3912 = vmatprep.subr.bf16.mxu0 0
  %3913 = vmatpush1.bf16.msra.mxu0 %v3887
  %3914 = vmatprep.subr.bf16.mxu0 0
  %3915 = vmatpush2.bf16.msra.mxu0 0
  %3916 = vmatprep.subr.bf16.mxu0 0
  %3917 = vmatpush2.bf16.msra.mxu0 0
  %3918 = vmatprep.subr.bf16.mxu0 0
  %3919 = vmatpush2.bf16.msra.mxu0 0
  %3920 = vmatprep.subr.bf16.mxu0 0
  %3921 = vmatpush2.bf16.msra.mxu0 0
  %3922 = vmatprep.subr.bf16.mxu0 0
  %3923 = vmatpush2.bf16.msra.mxu0 0
  %3924 = vmatprep.subr.bf16.mxu0 0
  %3925 = vmatpush2.bf16.msra.mxu0 0
  %3926 = vmatprep.subr.bf16.mxu0 0
  %3927 = vmatpush2.bf16.msra.mxu0 0
  %3928 = vmatprep.subr.bf16.mxu0 0
  %3929 = vmatpush2.bf16.msra.mxu0 0
  %3930 = vmatprep.mubr.bf16.mxu0 0
  %3931 = vmatmul.mubr.bf16.gmra.mxu0 %v3890
  %v3932 = vpop.f32.mrf.mxu0
  %v3933 = vadd.f32 0.0, %v3932
  %v3934 = vpop.f32.mrf.mxu0
  %v3935 = vpop.f32.mrf.mxu0
  %v3936 = vadd.f32 0.0, %v3935
  %v3937 = vpop.f32.mrf.mxu0
  %3938 = vmatprep.mubr.bf16.mxu0 0
  %3939 = vmatmul.mubr.bf16.gmra.mxu0 %v3893
  %v3940 = vpop.f32.mrf.mxu0
  %v3941 = vadd.f32 0.0, %v3940
  %v3942 = vpop.f32.mrf.mxu0
  %v3943 = vpop.f32.mrf.mxu0
  %v3944 = vpop.f32.mrf.mxu0
  %3945 = vdwg.mxu0
  %v3946 = vadd.f32 %v3774, %v3933
  %v3947 = vadd.f32 %v3777, %v3936
  %v3948 = vadd.f32 %v3782, %v3941
  %v3949 = vmul.bf16 %v2842, %v1220
  %v3950 = vmul.bf16 %v2845, %v1220
  %v3953 = vrot.slane %v3306, 4
  %v3954 = vrot.slane %v3949, 4
  %v3955 = vsel %vm1378, %v3953, %v3954
  %v3957 = vsel %vm367, %v3955, 0
  %v3960 = vsel %vm367, %v3954, 0
  %3962 = vmatprep.subr.bf16.mxu0 0
  %3963 = vmatpush1.bf16.xpose.msra.mxu0 0
  %3964 = vmatprep.subr.bf16.mxu0 0
  %3965 = vmatpush1.bf16.xpose.msra.mxu0 0
  %3966 = vmatprep.subr.bf16.mxu0 0
  %3967 = vmatpush1.bf16.xpose.msra.mxu0 0
  %3968 = vmatprep.subr.bf16.mxu0 0
  %3969 = vmatpush1.bf16.xpose.msra.mxu0 0
  %3970 = vmatprep.subr.bf16.mxu0 0
  %3971 = vmatpush1.bf16.xpose.msra.mxu0 0
  %3972 = vmatprep.subr.bf16.mxu0 0
  %3973 = vmatpush1.bf16.xpose.msra.mxu0 0
  %3974 = vmatprep.subr.bf16.mxu0 0
  %3975 = vmatpush1.bf16.xpose.msra.mxu0 %v3960
  %3976 = vmatprep.subr.bf16.mxu0 0
  %3977 = vmatpush1.bf16.xpose.msra.mxu0 %v3957
  %3978 = vmatprep.subr.bf16.mxu0 0
  %3979 = vmatpush2.bf16.xpose.msra.mxu0 0
  %3980 = vmatprep.subr.bf16.mxu0 0
  %3981 = vmatpush2.bf16.xpose.msra.mxu0 0
  %3982 = vmatprep.subr.bf16.mxu0 0
  %3983 = vmatpush2.bf16.xpose.msra.mxu0 0
  %3984 = vmatprep.subr.bf16.mxu0 0
  %3985 = vmatpush2.bf16.xpose.msra.mxu0 0
  %3986 = vmatprep.subr.bf16.mxu0 0
  %3987 = vmatpush2.bf16.xpose.msra.mxu0 0
  %3988 = vmatprep.subr.bf16.mxu0 0
  %3989 = vmatpush2.bf16.xpose.msra.mxu0 0
  %3990 = vmatprep.subr.bf16.mxu0 0
  %3991 = vmatpush2.bf16.xpose.msra.mxu0 0
  %3992 = vmatprep.subr.bf16.mxu0 0
  %3993 = vmatpush2.bf16.xpose.msra.mxu0 0
  %3994 = vmatprep.mubr.bf16.mxu0 0
  %3995 = vmatmul.mubr.bf16.gmra.mxu0 %v3471
  %v3996 = vpop.f32.mrf.mxu0
  %v3997 = vadd.f32 %v141, %v3996
  %v3998 = vpop.f32.mrf.mxu0
  %v3999 = vpop.f32.mrf.mxu0
  %v4000 = vadd.f32 %v141, %v3999
  %v4001 = vpop.f32.mrf.mxu0
  %4002 = vmatprep.mubr.bf16.mxu0 0
  %4003 = vmatmul.mubr.bf16.gmra.mxu0 %v3474
  %v4004 = vpop.f32.mrf.mxu0
  %v4005 = vadd.f32 %v141, %v4004
  %v4006 = vpop.f32.mrf.mxu0
  %v4007 = vpop.f32.mrf.mxu0
  %v4008 = vpop.f32.mrf.mxu0
  %4009 = vdwg.mxu0
  %v4010 = vsel %vm803, %v3997, -inf
  %4011 = vmax.xlane.f32.xlu0 %v4010
  %v4012 = vpop.xlane.xlu0 %4011
  %v4013 = vsel %vm803, %v4000, -inf
  %4014 = vmax.xlane.f32.xlu0 %v4013
  %v4015 = vpop.xlane.xlu0 %4014
  %v4016 = vsel %vm803, %v4005, -inf
  %4017 = vmax.xlane.f32.xlu0 %v4016
  %v4018 = vpop.xlane.xlu0 %4017
  %v4019 = vsub.f32 %v3997, %v4012
  %v4020 = vsub.f32 %v4000, %v4015
  %v4021 = vsub.f32 %v4005, %v4018
  %v4022 = vmul.f32 %v4019, 1.442695
  %v4023 = vpow.pop %v4022
  %v4024 = vmul.f32 %v4020, 1.442695
  %v4025 = vpow.pop %v4024
  %v4026 = vmul.f32 %v4021, 1.442695
  %v4027 = vpow.pop %v4026
  %v4028 = vsel %vm803, %v4023, 0.0
  %4029 = vadd.xlane.f32.xlu0 %v4028
  %v4030 = vpop.xlane.xlu0 %4029
  %v4031 = vsel %vm803, %v4025, 0.0
  %4032 = vadd.xlane.f32.xlu0 %v4031
  %v4033 = vpop.xlane.xlu0 %4032
  %v4034 = vsel %vm803, %v4027, 0.0
  %4035 = vadd.xlane.f32.xlu0 %v4034
  %v4036 = vpop.xlane.xlu0 %4035
  %v4037 = vrcp.pop %v4030
  %v4038 = vrcp.pop %v4033
  %v4039 = vrcp.pop %v4036
  %v4040 = vmul.f32 %v4023, %v4037
  %v4041 = vmul.f32 %v4025, %v4038
  %v4042 = vmul.f32 %v4027, %v4039
  %v4043 = vpack.c.bf16 %v4041, %v4040
  %v4044 = vpack.c.bf16 %v4042, %v4042
  %v4047 = vrot.slane %v3308, 4
  %v4048 = vrot.slane %v3950, 4
  %v4049 = vsel %vm1378, %v4047, %v4048
  %v4052 = vsel %vm803, %v4043, 0
  %v4055 = vsel %vm803, %v4044, 0
  %v4058 = vsel %vm945, %v4048, 0
  %4060 = vmatprep.subr.bf16.mxu0 0
  %4061 = vmatpush1.bf16.msra.mxu0 0
  %4062 = vmatprep.subr.bf16.mxu0 0
  %4063 = vmatpush1.bf16.msra.mxu0 0
  %4064 = vmatprep.subr.bf16.mxu0 0
  %4065 = vmatpush1.bf16.msra.mxu0 0
  %4066 = vmatprep.subr.bf16.mxu0 0
  %4067 = vmatpush1.bf16.msra.mxu0 0
  %4068 = vmatprep.subr.bf16.mxu0 0
  %4069 = vmatpush1.bf16.msra.mxu0 0
  %4070 = vmatprep.subr.bf16.mxu0 0
  %4071 = vmatpush1.bf16.msra.mxu0 0
  %4072 = vmatprep.subr.bf16.mxu0 0
  %4073 = vmatpush1.bf16.msra.mxu0 %v4058
  %4074 = vmatprep.subr.bf16.mxu0 0
  %4075 = vmatpush1.bf16.msra.mxu0 %v4049
  %4076 = vmatprep.subr.bf16.mxu0 0
  %4077 = vmatpush2.bf16.msra.mxu0 0
  %4078 = vmatprep.subr.bf16.mxu0 0
  %4079 = vmatpush2.bf16.msra.mxu0 0
  %4080 = vmatprep.subr.bf16.mxu0 0
  %4081 = vmatpush2.bf16.msra.mxu0 0
  %4082 = vmatprep.subr.bf16.mxu0 0
  %4083 = vmatpush2.bf16.msra.mxu0 0
  %4084 = vmatprep.subr.bf16.mxu0 0
  %4085 = vmatpush2.bf16.msra.mxu0 0
  %4086 = vmatprep.subr.bf16.mxu0 0
  %4087 = vmatpush2.bf16.msra.mxu0 0
  %4088 = vmatprep.subr.bf16.mxu0 0
  %4089 = vmatpush2.bf16.msra.mxu0 0
  %4090 = vmatprep.subr.bf16.mxu0 0
  %4091 = vmatpush2.bf16.msra.mxu0 0
  %4092 = vmatprep.mubr.bf16.mxu0 0
  %4093 = vmatmul.mubr.bf16.gmra.mxu0 %v4052
  %v4094 = vpop.f32.mrf.mxu0
  %v4095 = vadd.f32 0.0, %v4094
  %v4096 = vpop.f32.mrf.mxu0
  %v4097 = vpop.f32.mrf.mxu0
  %v4098 = vadd.f32 0.0, %v4097
  %v4099 = vpop.f32.mrf.mxu0
  %4100 = vmatprep.mubr.bf16.mxu0 0
  %4101 = vmatmul.mubr.bf16.gmra.mxu0 %v4055
  %v4102 = vpop.f32.mrf.mxu0
  %v4103 = vadd.f32 0.0, %v4102
  %v4104 = vpop.f32.mrf.mxu0
  %v4105 = vpop.f32.mrf.mxu0
  %v4106 = vpop.f32.mrf.mxu0
  %4107 = vdwg.mxu0
  %v4108 = vadd.f32 %v3946, %v4095
  %v4109 = vadd.f32 %v3947, %v4098
  %v4110 = vadd.f32 %v3948, %v4103
  %v4111 = vpack.c.bf16 %v3456, %v3455
  %v4112 = vpack.c.bf16 %v4108, %v3457
  %v4113 = vpack.c.bf16 %v4110, %v4109
  %s4114 = scalar_lea.vmem %s33, 16
  %v4115 = vld [vmem:[%s4114] sm:$0xf]
  %v4116 = vld [vmem:[%s4114 + $0x4] sm:$0xf]
  %v4117 = vld [vmem:[%s4114 + $0x8] sm:$0xf]
  %v4118 = vld [vmem:[%s4114 + $0xc] sm:$0xf]
  %v4123 = vunpack.c.l.b16 %v4115
  %v4124 = vunpack.c.l.b16 %v4116
  %v4125 = vunpack.c.l.b16 %v4117
  %v4126 = vunpack.c.l.b16 %v4118
  %v4127 = vpack.c.b16 %v4124, %v4123
  %v4128 = vpack.c.b16 %v4126, %v4125
  %v4132 = vsel %vm367, %v4111, 0
  %v4135 = vsel %vm367, %v4112, 0
  %v4138 = vsel %vm367, %v4113, 0
  %4140 = vmatprep.subr.bf16.mxu0 0
  %4141 = vmatpush1.bf16.msra.mxu0 0
  %4142 = vmatprep.subr.bf16.mxu0 0
  %4143 = vmatpush1.bf16.msra.mxu0 0
  %4144 = vmatprep.subr.bf16.mxu0 0
  %4145 = vmatpush1.bf16.msra.mxu0 0
  %4146 = vmatprep.subr.bf16.mxu0 0
  %4147 = vmatpush1.bf16.msra.mxu0 0
  %4148 = vmatprep.subr.bf16.mxu0 0
  %4149 = vmatpush1.bf16.msra.mxu0 0
  %4150 = vmatprep.subr.bf16.mxu0 0
  %4151 = vmatpush1.bf16.msra.mxu0 0
  %4152 = vmatprep.subr.bf16.mxu0 0
  %4153 = vmatpush1.bf16.msra.mxu0 %v4128
  %4154 = vmatprep.subr.bf16.mxu0 0
  %4155 = vmatpush1.bf16.msra.mxu0 %v4127
  %4156 = vmatprep.subr.bf16.mxu0 0
  %4157 = vmatpush2.bf16.msra.mxu0 0
  %4158 = vmatprep.subr.bf16.mxu0 0
  %4159 = vmatpush2.bf16.msra.mxu0 0
  %4160 = vmatprep.subr.bf16.mxu0 0
  %4161 = vmatpush2.bf16.msra.mxu0 0
  %4162 = vmatprep.subr.bf16.mxu0 0
  %4163 = vmatpush2.bf16.msra.mxu0 0
  %4164 = vmatprep.subr.bf16.mxu0 0
  %4165 = vmatpush2.bf16.msra.mxu0 0
  %4166 = vmatprep.subr.bf16.mxu0 0
  %4167 = vmatpush2.bf16.msra.mxu0 0
  %4168 = vmatprep.subr.bf16.mxu0 0
  %4169 = vmatpush2.bf16.msra.mxu0 0
  %4170 = vmatprep.subr.bf16.mxu0 0
  %4171 = vmatpush2.bf16.msra.mxu0 0
  %4172 = vmatprep.mubr.bf16.mxu0 0
  %4173 = vmatmul.mubr.bf16.gmra.mxu0 %v4132
  %v4174 = vpop.f32.mrf.mxu0
  %v4175 = vadd.f32 0.0, %v4174
  %v4176 = vpop.f32.mrf.mxu0
  %v4177 = vpop.f32.mrf.mxu0
  %v4178 = vadd.f32 0.0, %v4177
  %v4179 = vpop.f32.mrf.mxu0
  %4180 = vmatprep.mubr.bf16.mxu0 0
  %4181 = vmatmul.mubr.bf16.gmra.mxu0 %v4135
  %v4182 = vpop.f32.mrf.mxu0
  %v4183 = vadd.f32 0.0, %v4182
  %v4184 = vpop.f32.mrf.mxu0
  %v4185 = vpop.f32.mrf.mxu0
  %v4186 = vadd.f32 0.0, %v4185
  %v4187 = vpop.f32.mrf.mxu0
  %4188 = vmatprep.mubr.bf16.mxu0 0
  %4189 = vmatmul.mubr.bf16.gmra.mxu0 %v4138
  %v4190 = vpop.f32.mrf.mxu0
  %v4191 = vadd.f32 0.0, %v4190
  %v4192 = vpop.f32.mrf.mxu0
  %v4193 = vpop.f32.mrf.mxu0
  %v4194 = vadd.f32 0.0, %v4193
  %v4195 = vpop.f32.mrf.mxu0
  %4196 = vdwg.mxu0
  %v4197 = vadd.f32 %v2467, %v4175
  %v4198 = vadd.f32 %v2468, %v4178
  %v4199 = vadd.f32 %v2469, %v4183
  %v4200 = vadd.f32 %v2470, %v4186
  %v4201 = vadd.f32 %v2471, %v4191
  %v4202 = vadd.f32 %v2472, %v4194
  %s4203 = scalar_lea.vmem %s35, 1
  %v4204 = vld [vmem:[%s4203] sm:$0x1]
  %v4206 = vlaneseq
  %v4207 = vshrl.u32 %v4206, 7
  %v4208 = vsub.s32 0, %v4207
  %v4209 = vrot.slane %v4204, %v4208
  %v4211 = vadd.f32 %v4197, %v4209
  %v4212 = vadd.f32 %v4198, %v4209
  %v4213 = vadd.f32 %v4199, %v4209
  %v4214 = vadd.f32 %v4200, %v4209
  %v4215 = vadd.f32 %v4201, %v4209
  %v4216 = vadd.f32 %v4202, %v4209
  %s4217 = scalar_lea.vmem %s37, 1
  %v4218 = vld [vmem:[%s4217] sm:$0x1]
  %s4219 = scalar_lea.vmem %s39, 1
  %v4220 = vld [vmem:[%s4219] sm:$0x1]
  %v4221 = vsel %vm367, %v4211, 0.0
  %4222 = vadd.xlane.f32.xlu0 %v4221
  %v4223 = vpop.xlane.xlu0 %4222
  %v4224 = vsel %vm367, %v4212, 0.0
  %4225 = vadd.xlane.f32.xlu0 %v4224
  %v4226 = vpop.xlane.xlu0 %4225
  %v4227 = vsel %vm367, %v4213, 0.0
  %4228 = vadd.xlane.f32.xlu0 %v4227
  %v4229 = vpop.xlane.xlu0 %4228
  %v4230 = vsel %vm367, %v4214, 0.0
  %4231 = vadd.xlane.f32.xlu0 %v4230
  %v4232 = vpop.xlane.xlu0 %4231
  %v4233 = vsel %vm367, %v4215, 0.0
  %4234 = vadd.xlane.f32.xlu0 %v4233
  %v4235 = vpop.xlane.xlu0 %4234
  %v4236 = vsel %vm367, %v4216, 0.0
  %4237 = vadd.xlane.f32.xlu0 %v4236
  %v4238 = vpop.xlane.xlu0 %4237
  %v4239 = vmul.f32 %v4223, %v386
  %v4240 = vmul.f32 %v4226, %v386
  %v4241 = vmul.f32 %v4229, %v386
  %v4242 = vmul.f32 %v4232, %v386
  %v4243 = vmul.f32 %v4235, %v386
  %v4244 = vmul.f32 %v4238, %v386
  %v4245 = vsub.f32 %v4211, %v4239
  %v4246 = vsub.f32 %v4212, %v4240
  %v4247 = vsub.f32 %v4213, %v4241
  %v4248 = vsub.f32 %v4214, %v4242
  %v4249 = vsub.f32 %v4215, %v4243
  %v4250 = vsub.f32 %v4216, %v4244
  %v4251 = vmul.f32 %v4245, %v4245
  %v4252 = vmul.f32 %v4246, %v4246
  %v4253 = vmul.f32 %v4247, %v4247
  %v4254 = vmul.f32 %v4248, %v4248
  %v4255 = vmul.f32 %v4249, %v4249
  %v4256 = vmul.f32 %v4250, %v4250
  %v4257 = vsel %vm367, %v4251, 0.0
  %4258 = vadd.xlane.f32.xlu0 %v4257
  %v4259 = vpop.xlane.xlu0 %4258
  %v4260 = vsel %vm367, %v4252, 0.0
  %4261 = vadd.xlane.f32.xlu0 %v4260
  %v4262 = vpop.xlane.xlu0 %4261
  %v4263 = vsel %vm367, %v4253, 0.0
  %4264 = vadd.xlane.f32.xlu0 %v4263
  %v4265 = vpop.xlane.xlu0 %4264
  %v4266 = vsel %vm367, %v4254, 0.0
  %4267 = vadd.xlane.f32.xlu0 %v4266
  %v4268 = vpop.xlane.xlu0 %4267
  %v4269 = vsel %vm367, %v4255, 0.0
  %4270 = vadd.xlane.f32.xlu0 %v4269
  %v4271 = vpop.xlane.xlu0 %4270
  %v4272 = vsel %vm367, %v4256, 0.0
  %4273 = vadd.xlane.f32.xlu0 %v4272
  %v4274 = vpop.xlane.xlu0 %4273
  %v4275 = vmul.f32 %v4259, %v386
  %v4276 = vmul.f32 %v4262, %v386
  %v4277 = vmul.f32 %v4265, %v386
  %v4278 = vmul.f32 %v4268, %v386
  %v4279 = vmul.f32 %v4271, %v386
  %v4280 = vmul.f32 %v4274, %v386
  %v4281 = vadd.f32 %v4275, 1e-05
  %v4282 = vadd.f32 %v4276, 1e-05
  %v4283 = vadd.f32 %v4277, 1e-05
  %v4284 = vadd.f32 %v4278, 1e-05
  %v4285 = vadd.f32 %v4279, 1e-05
  %v4286 = vadd.f32 %v4280, 1e-05
  %v4287 = vrsqrt.pop %v4281
  %v4288 = vrsqrt.pop %v4282
  %v4289 = vrsqrt.pop %v4283
  %v4290 = vrsqrt.pop %v4284
  %v4291 = vrsqrt.pop %v4285
  %v4292 = vrsqrt.pop %v4286
  %v4293 = vmul.f32 %v4245, %v4287
  %v4294 = vmul.f32 %v4246, %v4288
  %v4295 = vmul.f32 %v4247, %v4289
  %v4296 = vmul.f32 %v4248, %v4290
  %v4297 = vmul.f32 %v4249, %v4291
  %v4298 = vmul.f32 %v4250, %v4292
  %v4300 = vlaneseq
  %v4301 = vshrl.u32 %v4300, 7
  %v4302 = vsub.s32 0, %v4301
  %v4303 = vrot.slane %v4218, %v4302
  %v4305 = vmul.f32 %v4293, %v4303
  %v4306 = vmul.f32 %v4294, %v4303
  %v4307 = vmul.f32 %v4295, %v4303
  %v4308 = vmul.f32 %v4296, %v4303
  %v4309 = vmul.f32 %v4297, %v4303
  %v4310 = vmul.f32 %v4298, %v4303
  %v4312 = vlaneseq
  %v4313 = vshrl.u32 %v4312, 7
  %v4314 = vsub.s32 0, %v4313
  %v4315 = vrot.slane %v4220, %v4314
  %v4317 = vadd.f32 %v4305, %v4315
  %v4318 = vadd.f32 %v4306, %v4315
  %v4319 = vadd.f32 %v4307, %v4315
  %v4320 = vadd.f32 %v4308, %v4315
  %v4321 = vadd.f32 %v4309, %v4315
  %v4322 = vadd.f32 %v4310, %v4315
  %v4323 = vpack.c.bf16 %v4318, %v4317
  %v4324 = vpack.c.bf16 %v4320, %v4319
  %v4325 = vpack.c.bf16 %v4322, %v4321
  %s4326 = scalar_lea.vmem %s41, 16
  %v4327 = vld [vmem:[%s4326] sm:$0xf]
  %v4328 = vld [vmem:[%s4326 + $0x4] sm:$0xf]
  %v4329 = vld [vmem:[%s4326 + $0x8] sm:$0xf]
  %v4330 = vld [vmem:[%s4326 + $0xc] sm:$0xf]
  %s4331 = scalar_lea.vmem %s43, 1
  %v4332 = vld [vmem:[%s4331] sm:$0x1]
  %v4334 = vlaneseq
  %v4335 = vshrl.u32 %v4334, 7
  %v4336 = vsub.s32 0, %v4335
  %v4337 = vrot.slane %v4332, %v4336
  %v4343 = vunpack.c.l.b16 %v4327
  %v4344 = vunpack.c.l.b16 %v4328
  %v4345 = vunpack.c.l.b16 %v4329
  %v4346 = vunpack.c.l.b16 %v4330
  %v4347 = vpack.c.b16 %v4344, %v4343
  %v4348 = vpack.c.b16 %v4346, %v4345
  %v4352 = vsel %vm367, %v4323, 0
  %v4355 = vsel %vm367, %v4324, 0
  %v4358 = vsel %vm367, %v4325, 0
  %4360 = vmatprep.subr.bf16.mxu0 0
  %4361 = vmatpush1.bf16.msra.mxu0 0
  %4362 = vmatprep.subr.bf16.mxu0 0
  %4363 = vmatpush1.bf16.msra.mxu0 0
  %4364 = vmatprep.subr.bf16.mxu0 0
  %4365 = vmatpush1.bf16.msra.mxu0 0
  %4366 = vmatprep.subr.bf16.mxu0 0
  %4367 = vmatpush1.bf16.msra.mxu0 0
  %4368 = vmatprep.subr.bf16.mxu0 0
  %4369 = vmatpush1.bf16.msra.mxu0 0
  %4370 = vmatprep.subr.bf16.mxu0 0
  %4371 = vmatpush1.bf16.msra.mxu0 0
  %4372 = vmatprep.subr.bf16.mxu0 0
  %4373 = vmatpush1.bf16.msra.mxu0 %v4348
  %4374 = vmatprep.subr.bf16.mxu0 0
  %4375 = vmatpush1.bf16.msra.mxu0 %v4347
  %4376 = vmatprep.subr.bf16.mxu0 0
  %4377 = vmatpush2.bf16.msra.mxu0 0
  %4378 = vmatprep.subr.bf16.mxu0 0
  %4379 = vmatpush2.bf16.msra.mxu0 0
  %4380 = vmatprep.subr.bf16.mxu0 0
  %4381 = vmatpush2.bf16.msra.mxu0 0
  %4382 = vmatprep.subr.bf16.mxu0 0
  %4383 = vmatpush2.bf16.msra.mxu0 0
  %4384 = vmatprep.subr.bf16.mxu0 0
  %4385 = vmatpush2.bf16.msra.mxu0 0
  %4386 = vmatprep.subr.bf16.mxu0 0
  %4387 = vmatpush2.bf16.msra.mxu0 0
  %4388 = vmatprep.subr.bf16.mxu0 0
  %4389 = vmatpush2.bf16.msra.mxu0 0
  %4390 = vmatprep.subr.bf16.mxu0 0
  %4391 = vmatpush2.bf16.msra.mxu0 0
  %4392 = vmatprep.mubr.bf16.mxu0 0
  %4393 = vmatmul.mubr.bf16.gmra.mxu0 %v4352
  %v4394 = vpop.f32.mrf.mxu0
  %v4395 = vadd.f32 %v4337, %v4394
  %v4396 = vpop.f32.mrf.mxu0
  %v4397 = vpop.f32.mrf.mxu0
  %v4398 = vadd.f32 %v4337, %v4397
  %v4399 = vpop.f32.mrf.mxu0
  %4400 = vmatprep.mubr.bf16.mxu0 0
  %4401 = vmatmul.mubr.bf16.gmra.mxu0 %v4355
  %v4402 = vpop.f32.mrf.mxu0
  %v4403 = vadd.f32 %v4337, %v4402
  %v4404 = vpop.f32.mrf.mxu0
  %v4405 = vpop.f32.mrf.mxu0
  %v4406 = vadd.f32 %v4337, %v4405
  %v4407 = vpop.f32.mrf.mxu0
  %4408 = vmatprep.mubr.bf16.mxu0 0
  %4409 = vmatmul.mubr.bf16.gmra.mxu0 %v4358
  %v4410 = vpop.f32.mrf.mxu0
  %v4411 = vadd.f32 %v4337, %v4410
  %v4412 = vpop.f32.mrf.mxu0
  %v4413 = vpop.f32.mrf.mxu0
  %v4414 = vadd.f32 %v4337, %v4413
  %v4415 = vpop.f32.mrf.mxu0
  %4416 = vdwg.mxu0
  %v4417 = vmul.f32 %v4395, 0.5
  %v4418 = vmul.f32 %v4398, 0.5
  %v4419 = vmul.f32 %v4403, 0.5
  %v4420 = vmul.f32 %v4406, 0.5
  %v4421 = vmul.f32 %v4411, 0.5
  %v4422 = vmul.f32 %v4414, 0.5
  %v4423 = vmul.f32 %v4395, 0.70710677
  %v4424 = vmul.f32 %v4398, 0.70710677
  %v4425 = vmul.f32 %v4403, 0.70710677
  %v4426 = vmul.f32 %v4406, 0.70710677
  %v4427 = vmul.f32 %v4411, 0.70710677
  %v4428 = vmul.f32 %v4414, 0.70710677
  %v4429 = verf.f32.pop %v4423
  %v4430 = verf.f32.pop %v4424
  %v4431 = verf.f32.pop %v4425
  %v4432 = verf.f32.pop %v4426
  %v4433 = verf.f32.pop %v4427
  %v4434 = verf.f32.pop %v4428
  %v4435 = vadd.f32 %v4429, 1.0
  %v4436 = vadd.f32 %v4430, 1.0
  %v4437 = vadd.f32 %v4431, 1.0
  %v4438 = vadd.f32 %v4432, 1.0
  %v4439 = vadd.f32 %v4433, 1.0
  %v4440 = vadd.f32 %v4434, 1.0
  %v4441 = vmul.f32 %v4417, %v4435
  %v4442 = vmul.f32 %v4418, %v4436
  %v4443 = vmul.f32 %v4419, %v4437
  %v4444 = vmul.f32 %v4420, %v4438
  %v4445 = vmul.f32 %v4421, %v4439
  %v4446 = vmul.f32 %v4422, %v4440
  %v4447 = vpack.c.bf16 %v4442, %v4441
  %v4448 = vpack.c.bf16 %v4444, %v4443
  %v4449 = vpack.c.bf16 %v4446, %v4445
  %s4450 = scalar_lea.vmem %s45, 32
  %v4451 = vld [vmem:[%s4450] sm:$0xf]
  %v4452 = vld [vmem:[%s4450 + $0x4] sm:$0xf]
  %v4453 = vld [vmem:[%s4450 + $0x8] sm:$0xf]
  %v4454 = vld [vmem:[%s4450 + $0xc] sm:$0xf]
  %v4455 = vld [vmem:[%s4450 + $0x10] sm:$0xf]
  %v4456 = vld [vmem:[%s4450 + $0x14] sm:$0xf]
  %v4457 = vld [vmem:[%s4450 + $0x18] sm:$0xf]
  %v4458 = vld [vmem:[%s4450 + $0x1c] sm:$0xf]
  %s4459 = scalar_lea.vmem %s47, 1
  %v4460 = vld [vmem:[%s4459] sm:$0x1]
  %v4462 = vlaneseq
  %v4463 = vshrl.u32 %v4462, 7
  %v4464 = vsub.s32 0, %v4463
  %v4465 = vrot.slane %v4460, %v4464
  %v4475 = vunpack.c.l.b16 %v4451
  %v4476 = vunpack.c.l.b16 %v4452
  %v4477 = vunpack.c.l.b16 %v4453
  %v4478 = vunpack.c.l.b16 %v4454
  %v4479 = vunpack.c.l.b16 %v4455
  %v4480 = vunpack.c.l.b16 %v4456
  %v4481 = vunpack.c.l.b16 %v4457
  %v4482 = vunpack.c.l.b16 %v4458
  %v4483 = vpack.c.b16 %v4476, %v4475
  %v4484 = vpack.c.b16 %v4478, %v4477
  %v4485 = vpack.c.b16 %v4480, %v4479
  %v4486 = vpack.c.b16 %v4482, %v4481
  %v4492 = vsel %vm2400, %v4447, 0
  %v4495 = vsel %vm2400, %v4448, 0
  %v4498 = vsel %vm2400, %v4449, 0
  %4500 = vmatprep.subr.bf16.mxu0 0
  %4501 = vmatpush1.bf16.msra.mxu0 0
  %4502 = vmatprep.subr.bf16.mxu0 0
  %4503 = vmatpush1.bf16.msra.mxu0 0
  %4504 = vmatprep.subr.bf16.mxu0 0
  %4505 = vmatpush1.bf16.msra.mxu0 0
  %4506 = vmatprep.subr.bf16.mxu0 0
  %4507 = vmatpush1.bf16.msra.mxu0 0
  %4508 = vmatprep.subr.bf16.mxu0 0
  %4509 = vmatpush1.bf16.msra.mxu0 %v4486
  %4510 = vmatprep.subr.bf16.mxu0 0
  %4511 = vmatpush1.bf16.msra.mxu0 %v4485
  %4512 = vmatprep.subr.bf16.mxu0 0
  %4513 = vmatpush1.bf16.msra.mxu0 %v4484
  %4514 = vmatprep.subr.bf16.mxu0 0
  %4515 = vmatpush1.bf16.msra.mxu0 %v4483
  %4516 = vmatprep.subr.bf16.mxu0 0
  %4517 = vmatpush2.bf16.msra.mxu0 0
  %4518 = vmatprep.subr.bf16.mxu0 0
  %4519 = vmatpush2.bf16.msra.mxu0 0
  %4520 = vmatprep.subr.bf16.mxu0 0
  %4521 = vmatpush2.bf16.msra.mxu0 0
  %4522 = vmatprep.subr.bf16.mxu0 0
  %4523 = vmatpush2.bf16.msra.mxu0 0
  %4524 = vmatprep.subr.bf16.mxu0 0
  %4525 = vmatpush2.bf16.msra.mxu0 0
  %4526 = vmatprep.subr.bf16.mxu0 0
  %4527 = vmatpush2.bf16.msra.mxu0 0
  %4528 = vmatprep.subr.bf16.mxu0 0
  %4529 = vmatpush2.bf16.msra.mxu0 0
  %4530 = vmatprep.subr.bf16.mxu0 0
  %4531 = vmatpush2.bf16.msra.mxu0 0
  %4532 = vmatprep.mubr.bf16.mxu0 0
  %4533 = vmatmul.mubr.bf16.gmra.mxu0 %v4492
  %v4534 = vpop.f32.mrf.mxu0
  %v4535 = vadd.f32 %v4465, %v4534
  %v4536 = vpop.f32.mrf.mxu0
  %v4537 = vpop.f32.mrf.mxu0
  %v4538 = vadd.f32 %v4465, %v4537
  %v4539 = vpop.f32.mrf.mxu0
  %4540 = vmatprep.mubr.bf16.mxu0 0
  %4541 = vmatmul.mubr.bf16.gmra.mxu0 %v4495
  %v4542 = vpop.f32.mrf.mxu0
  %v4543 = vadd.f32 %v4465, %v4542
  %v4544 = vpop.f32.mrf.mxu0
  %v4545 = vpop.f32.mrf.mxu0
  %v4546 = vadd.f32 %v4465, %v4545
  %v4547 = vpop.f32.mrf.mxu0
  %4548 = vmatprep.mubr.bf16.mxu0 0
  %4549 = vmatmul.mubr.bf16.gmra.mxu0 %v4498
  %v4550 = vpop.f32.mrf.mxu0
  %v4551 = vadd.f32 %v4465, %v4550
  %v4552 = vpop.f32.mrf.mxu0
  %v4553 = vpop.f32.mrf.mxu0
  %v4554 = vadd.f32 %v4465, %v4553
  %v4555 = vpop.f32.mrf.mxu0
  %4556 = vdwg.mxu0
  %v4557 = vadd.f32 %v4211, %v4535
  %v4558 = vadd.f32 %v4212, %v4538
  %v4559 = vadd.f32 %v4213, %v4543
  %v4560 = vadd.f32 %v4214, %v4546
  %v4561 = vadd.f32 %v4215, %v4551
  %v4562 = vadd.f32 %v4216, %v4554
  %v4563 = vld [vmem:[%s49] sm:$0x1]
  %v4564 = vld [vmem:[%s51] sm:$0x1]
  %v4565 = vsel %vm367, %v4557, 0.0
  %4566 = vadd.xlane.f32.xlu0 %v4565
  %v4567 = vpop.xlane.xlu0 %4566
  %v4568 = vsel %vm367, %v4558, 0.0
  %4569 = vadd.xlane.f32.xlu0 %v4568
  %v4570 = vpop.xlane.xlu0 %4569
  %v4571 = vsel %vm367, %v4559, 0.0
  %4572 = vadd.xlane.f32.xlu0 %v4571
  %v4573 = vpop.xlane.xlu0 %4572
  %v4574 = vsel %vm367, %v4560, 0.0
  %4575 = vadd.xlane.f32.xlu0 %v4574
  %v4576 = vpop.xlane.xlu0 %4575
  %v4577 = vsel %vm367, %v4561, 0.0
  %4578 = vadd.xlane.f32.xlu0 %v4577
  %v4579 = vpop.xlane.xlu0 %4578
  %v4580 = vsel %vm367, %v4562, 0.0
  %4581 = vadd.xlane.f32.xlu0 %v4580
  %v4582 = vpop.xlane.xlu0 %4581
  %v4583 = vmul.f32 %v4567, %v386
  %v4584 = vmul.f32 %v4570, %v386
  %v4585 = vmul.f32 %v4573, %v386
  %v4586 = vmul.f32 %v4576, %v386
  %v4587 = vmul.f32 %v4579, %v386
  %v4588 = vmul.f32 %v4582, %v386
  %v4589 = vsub.f32 %v4557, %v4583
  %v4590 = vsub.f32 %v4558, %v4584
  %v4591 = vsub.f32 %v4559, %v4585
  %v4592 = vsub.f32 %v4560, %v4586
  %v4593 = vsub.f32 %v4561, %v4587
  %v4594 = vsub.f32 %v4562, %v4588
  %v4595 = vmul.f32 %v4589, %v4589
  %v4596 = vmul.f32 %v4590, %v4590
  %v4597 = vmul.f32 %v4591, %v4591
  %v4598 = vmul.f32 %v4592, %v4592
  %v4599 = vmul.f32 %v4593, %v4593
  %v4600 = vmul.f32 %v4594, %v4594
  %v4601 = vsel %vm367, %v4595, 0.0
  %4602 = vadd.xlane.f32.xlu0 %v4601
  %v4603 = vpop.xlane.xlu0 %4602
  %v4604 = vsel %vm367, %v4596, 0.0
  %4605 = vadd.xlane.f32.xlu0 %v4604
  %v4606 = vpop.xlane.xlu0 %4605
  %v4607 = vsel %vm367, %v4597, 0.0
  %4608 = vadd.xlane.f32.xlu0 %v4607
  %v4609 = vpop.xlane.xlu0 %4608
  %v4610 = vsel %vm367, %v4598, 0.0
  %4611 = vadd.xlane.f32.xlu0 %v4610
  %v4612 = vpop.xlane.xlu0 %4611
  %v4613 = vsel %vm367, %v4599, 0.0
  %4614 = vadd.xlane.f32.xlu0 %v4613
  %v4615 = vpop.xlane.xlu0 %4614
  %v4616 = vsel %vm367, %v4600, 0.0
  %4617 = vadd.xlane.f32.xlu0 %v4616
  %v4618 = vpop.xlane.xlu0 %4617
  %v4619 = vmul.f32 %v4603, %v386
  %v4620 = vmul.f32 %v4606, %v386
  %v4621 = vmul.f32 %v4609, %v386
  %v4622 = vmul.f32 %v4612, %v386
  %v4623 = vmul.f32 %v4615, %v386
  %v4624 = vmul.f32 %v4618, %v386
  %v4625 = vadd.f32 %v4619, 1e-05
  %v4626 = vadd.f32 %v4620, 1e-05
  %v4627 = vadd.f32 %v4621, 1e-05
  %v4628 = vadd.f32 %v4622, 1e-05
  %v4629 = vadd.f32 %v4623, 1e-05
  %v4630 = vadd.f32 %v4624, 1e-05
  %v4631 = vrsqrt.pop %v4625
  %v4632 = vrsqrt.pop %v4626
  %v4633 = vrsqrt.pop %v4627
  %v4634 = vrsqrt.pop %v4628
  %v4635 = vrsqrt.pop %v4629
  %v4636 = vrsqrt.pop %v4630
  %v4637 = vmul.f32 %v4589, %v4631
  %v4638 = vmul.f32 %v4590, %v4632
  %v4639 = vmul.f32 %v4591, %v4633
  %v4640 = vmul.f32 %v4592, %v4634
  %v4641 = vmul.f32 %v4593, %v4635
  %v4642 = vmul.f32 %v4594, %v4636
  %v4644 = vlaneseq
  %v4645 = vshrl.u32 %v4644, 7
  %v4646 = vsub.s32 0, %v4645
  %v4647 = vrot.slane %v4563, %v4646
  %v4649 = vmul.f32 %v4637, %v4647
  %v4650 = vmul.f32 %v4638, %v4647
  %v4651 = vmul.f32 %v4639, %v4647
  %v4652 = vmul.f32 %v4640, %v4647
  %v4653 = vmul.f32 %v4641, %v4647
  %v4654 = vmul.f32 %v4642, %v4647
  %v4656 = vlaneseq
  %v4657 = vshrl.u32 %v4656, 7
  %v4658 = vsub.s32 0, %v4657
  %v4659 = vrot.slane %v4564, %v4658
  %v4661 = vadd.f32 %v4649, %v4659
  %v4662 = vadd.f32 %v4650, %v4659
  %v4663 = vadd.f32 %v4651, %v4659
  %v4664 = vadd.f32 %v4652, %v4659
  %v4665 = vadd.f32 %v4653, %v4659
  %v4666 = vadd.f32 %v4654, %v4659
  %v4667 = vpack.c.bf16 %v4662, %v4661
  %v4668 = vpack.c.bf16 %v4664, %v4663
  %v4669 = vpack.c.bf16 %v4666, %v4665
  %v4670 = vld [vmem:[%s53] sm:$0xf]
  %v4671 = vld [vmem:[%s53 + $0x4] sm:$0xf]
  %v4672 = vld [vmem:[%s53 + $0x8] sm:$0xf]
  %v4673 = vld [vmem:[%s53 + $0xc] sm:$0xf]
  %v4674 = vld [vmem:[%s55] sm:$0x1]
  %v4676 = vlaneseq
  %v4677 = vshrl.u32 %v4676, 7
  %v4678 = vsub.s32 0, %v4677
  %v4679 = vrot.slane %v4674, %v4678
  %v4685 = vunpack.c.l.b16 %v4670
  %v4686 = vunpack.c.l.b16 %v4671
  %v4687 = vunpack.c.l.b16 %v4672
  %v4688 = vunpack.c.l.b16 %v4673
  %v4689 = vpack.c.b16 %v4686, %v4685
  %v4690 = vpack.c.b16 %v4688, %v4687
  %v4694 = vsel %vm367, %v4667, 0
  %v4697 = vsel %vm367, %v4668, 0
  %v4700 = vsel %vm367, %v4669, 0
  %4702 = vmatprep.subr.bf16.mxu0 0
  %4703 = vmatpush1.bf16.msra.mxu0 0
  %4704 = vmatprep.subr.bf16.mxu0 0
  %4705 = vmatpush1.bf16.msra.mxu0 0
  %4706 = vmatprep.subr.bf16.mxu0 0
  %4707 = vmatpush1.bf16.msra.mxu0 0
  %4708 = vmatprep.subr.bf16.mxu0 0
  %4709 = vmatpush1.bf16.msra.mxu0 0
  %4710 = vmatprep.subr.bf16.mxu0 0
  %4711 = vmatpush1.bf16.msra.mxu0 0
  %4712 = vmatprep.subr.bf16.mxu0 0
  %4713 = vmatpush1.bf16.msra.mxu0 0
  %4714 = vmatprep.subr.bf16.mxu0 0
  %4715 = vmatpush1.bf16.msra.mxu0 %v4690
  %4716 = vmatprep.subr.bf16.mxu0 0
  %4717 = vmatpush1.bf16.msra.mxu0 %v4689
  %4718 = vmatprep.subr.bf16.mxu0 0
  %4719 = vmatpush2.bf16.msra.mxu0 0
  %4720 = vmatprep.subr.bf16.mxu0 0
  %4721 = vmatpush2.bf16.msra.mxu0 0
  %4722 = vmatprep.subr.bf16.mxu0 0
  %4723 = vmatpush2.bf16.msra.mxu0 0
  %4724 = vmatprep.subr.bf16.mxu0 0
  %4725 = vmatpush2.bf16.msra.mxu0 0
  %4726 = vmatprep.subr.bf16.mxu0 0
  %4727 = vmatpush2.bf16.msra.mxu0 0
  %4728 = vmatprep.subr.bf16.mxu0 0
  %4729 = vmatpush2.bf16.msra.mxu0 0
  %4730 = vmatprep.subr.bf16.mxu0 0
  %4731 = vmatpush2.bf16.msra.mxu0 0
  %4732 = vmatprep.subr.bf16.mxu0 0
  %4733 = vmatpush2.bf16.msra.mxu0 0
  %4734 = vmatprep.mubr.bf16.mxu0 0
  %4735 = vmatmul.mubr.bf16.gmra.mxu0 %v4694
  %v4736 = vpop.f32.mrf.mxu0
  %v4737 = vadd.f32 %v4679, %v4736
  %v4738 = vpop.f32.mrf.mxu0
  %v4739 = vpop.f32.mrf.mxu0
  %v4740 = vadd.f32 %v4679, %v4739
  %v4741 = vpop.f32.mrf.mxu0
  %4742 = vmatprep.mubr.bf16.mxu0 0
  %4743 = vmatmul.mubr.bf16.gmra.mxu0 %v4697
  %v4744 = vpop.f32.mrf.mxu0
  %v4745 = vadd.f32 %v4679, %v4744
  %v4746 = vpop.f32.mrf.mxu0
  %v4747 = vpop.f32.mrf.mxu0
  %v4748 = vadd.f32 %v4679, %v4747
  %v4749 = vpop.f32.mrf.mxu0
  %4750 = vmatprep.mubr.bf16.mxu0 0
  %4751 = vmatmul.mubr.bf16.gmra.mxu0 %v4700
  %v4752 = vpop.f32.mrf.mxu0
  %v4753 = vadd.f32 %v4679, %v4752
  %v4754 = vpop.f32.mrf.mxu0
  %v4755 = vpop.f32.mrf.mxu0
  %v4756 = vadd.f32 %v4679, %v4755
  %v4757 = vpop.f32.mrf.mxu0
  %4758 = vdwg.mxu0
  %4759 = vst.msk [vmem:[%s65] sm:$0xff] %vm244, %v4737
  %4760 = vst.msk [vmem:[%s65 + $0x8] sm:$0xff] %vm244, %v4740
  %4761 = vst.msk [vmem:[%s65 + $0x10] sm:$0xff] %vm244, %v4745
  %4762 = vst.msk [vmem:[%s65 + $0x18] sm:$0xff] %vm244, %v4748
  %4763 = vst.msk [vmem:[%s65 + $0x20] sm:$0xff] %vm244, %v4753
  %4764 = vst.msk [vmem:[%s65 + $0x28] sm:$0xff] %vm244, %v4756
  %v4765 = vld [vmem:[%s57] sm:$0x1]
  %v4766 = vld [vmem:[%s59] sm:$0x1]
  %v4768 = vlaneseq
  %v4769 = vshrl.u32 %v4768, 7
  %v4770 = vsub.s32 0, %v4769
  %v4771 = vrot.slane %v4765, %v4770
  %v4773 = vmul.f32 %v4637, %v4771
  %v4774 = vmul.f32 %v4638, %v4771
  %v4775 = vmul.f32 %v4639, %v4771
  %v4776 = vmul.f32 %v4640, %v4771
  %v4777 = vmul.f32 %v4641, %v4771
  %v4778 = vmul.f32 %v4642, %v4771
  %v4780 = vlaneseq
  %v4781 = vshrl.u32 %v4780, 7
  %v4782 = vsub.s32 0, %v4781
  %v4783 = vrot.slane %v4766, %v4782
  %v4785 = vadd.f32 %v4773, %v4783
  %v4786 = vadd.f32 %v4774, %v4783
  %v4787 = vadd.f32 %v4775, %v4783
  %v4788 = vadd.f32 %v4776, %v4783
  %v4789 = vadd.f32 %v4777, %v4783
  %v4790 = vadd.f32 %v4778, %v4783
  %v4791 = vpack.c.bf16 %v4786, %v4785
  %v4792 = vpack.c.bf16 %v4788, %v4787
  %v4793 = vpack.c.bf16 %v4790, %v4789
  %v4794 = vld [vmem:[%s61] sm:$0xf]
  %v4795 = vld [vmem:[%s61 + $0x4] sm:$0xf]
  %v4796 = vld [vmem:[%s61 + $0x8] sm:$0xf]
  %v4797 = vld [vmem:[%s61 + $0xc] sm:$0xf]
  %v4798 = vld [vmem:[%s63] sm:$0x1]
  %v4800 = vlaneseq
  %v4801 = vshrl.u32 %v4800, 7
  %v4802 = vsub.s32 0, %v4801
  %v4803 = vrot.slane %v4798, %v4802
  %v4809 = vunpack.c.l.b16 %v4794
  %v4810 = vunpack.c.l.b16 %v4795
  %v4811 = vunpack.c.l.b16 %v4796
  %v4812 = vunpack.c.l.b16 %v4797
  %v4813 = vpack.c.b16 %v4810, %v4809
  %v4814 = vpack.c.b16 %v4812, %v4811
  %v4818 = vsel %vm367, %v4791, 0
  %v4821 = vsel %vm367, %v4792, 0
  %v4824 = vsel %vm367, %v4793, 0
  %4826 = vmatprep.subr.bf16.mxu0 0
  %4827 = vmatpush1.bf16.msra.mxu0 0
  %4828 = vmatprep.subr.bf16.mxu0 0
  %4829 = vmatpush1.bf16.msra.mxu0 0
  %4830 = vmatprep.subr.bf16.mxu0 0
  %4831 = vmatpush1.bf16.msra.mxu0 0
  %4832 = vmatprep.subr.bf16.mxu0 0
  %4833 = vmatpush1.bf16.msra.mxu0 0
  %4834 = vmatprep.subr.bf16.mxu0 0
  %4835 = vmatpush1.bf16.msra.mxu0 0
  %4836 = vmatprep.subr.bf16.mxu0 0
  %4837 = vmatpush1.bf16.msra.mxu0 0
  %4838 = vmatprep.subr.bf16.mxu0 0
  %4839 = vmatpush1.bf16.msra.mxu0 %v4814
  %4840 = vmatprep.subr.bf16.mxu0 0
  %4841 = vmatpush1.bf16.msra.mxu0 %v4813
  %4842 = vmatprep.subr.bf16.mxu0 0
  %4843 = vmatpush2.bf16.msra.mxu0 0
  %4844 = vmatprep.subr.bf16.mxu0 0
  %4845 = vmatpush2.bf16.msra.mxu0 0
  %4846 = vmatprep.subr.bf16.mxu0 0
  %4847 = vmatpush2.bf16.msra.mxu0 0
  %4848 = vmatprep.subr.bf16.mxu0 0
  %4849 = vmatpush2.bf16.msra.mxu0 0
  %4850 = vmatprep.subr.bf16.mxu0 0
  %4851 = vmatpush2.bf16.msra.mxu0 0
  %4852 = vmatprep.subr.bf16.mxu0 0
  %4853 = vmatpush2.bf16.msra.mxu0 0
  %4854 = vmatprep.subr.bf16.mxu0 0
  %4855 = vmatpush2.bf16.msra.mxu0 0
  %4856 = vmatprep.subr.bf16.mxu0 0
  %4857 = vmatpush2.bf16.msra.mxu0 0
  %4858 = vmatprep.mubr.bf16.mxu0 0
  %4859 = vmatmul.mubr.bf16.gmra.mxu0 %v4818
  %v4860 = vpop.f32.mrf.mxu0
  %v4861 = vadd.f32 %v4803, %v4860
  %v4862 = vpop.f32.mrf.mxu0
  %v4863 = vpop.f32.mrf.mxu0
  %v4864 = vadd.f32 %v4803, %v4863
  %v4865 = vpop.f32.mrf.mxu0
  %4866 = vmatprep.mubr.bf16.mxu0 0
  %4867 = vmatmul.mubr.bf16.gmra.mxu0 %v4821
  %v4868 = vpop.f32.mrf.mxu0
  %v4869 = vadd.f32 %v4803, %v4868
  %v4870 = vpop.f32.mrf.mxu0
  %v4871 = vpop.f32.mrf.mxu0
  %v4872 = vadd.f32 %v4803, %v4871
  %v4873 = vpop.f32.mrf.mxu0
  %4874 = vmatprep.mubr.bf16.mxu0 0
  %4875 = vmatmul.mubr.bf16.gmra.mxu0 %v4824
  %v4876 = vpop.f32.mrf.mxu0
  %v4877 = vadd.f32 %v4803, %v4876
  %v4878 = vpop.f32.mrf.mxu0
  %v4879 = vpop.f32.mrf.mxu0
  %v4880 = vadd.f32 %v4803, %v4879
  %v4881 = vpop.f32.mrf.mxu0
  %4882 = vdwg.mxu0
  %vm4883 = vcmask 31744
  %4884 = vst.msk [vmem:[%s67] sm:$0xff] %vm4883, %v4861
  %4885 = vst.msk [vmem:[%s67 + $0x8] sm:$0xff] %vm4883, %v4864
  %4886 = vst.msk [vmem:[%s67 + $0x10] sm:$0xff] %vm4883, %v4869
  %4887 = vst.msk [vmem:[%s67 + $0x18] sm:$0xff] %vm4883, %v4872
  %4888 = vst.msk [vmem:[%s67 + $0x20] sm:$0xff] %vm4883, %v4877
  %4889 = vst.msk [vmem:[%s67 + $0x28] sm:$0xff] %vm4883, %v4880
  // Predicated region
  $region130: #{model_forward.1} parent=0 // pred_check
    _
  $region131: #{model_forward.1} parent=0 // pred_check_branch
    %4891 = sbr.rel (0) target = $region133
  $region132: #{model_forward.1} parent=0 // pred_region
    _
  $region133: #{model_forward.1} parent=0 // pred_fallthru
    _
  // Predicated region
  $region134: #{model_forward.1} parent=0 // pred_check
    _
  $region135: #{model_forward.1} parent=0 // pred_check_branch
    %4893 = sbr.rel (0) target = $region137
  $region136: #{model_forward.1} parent=0 // pred_region
    _
  $region137: #{model_forward.1} parent=0 // pred_fallthru
    _
  // Predicated region
  $region138: #{model_forward.1} parent=0 // pred_check
    _
  $region139: #{model_forward.1} parent=0 // pred_check_branch
    %4895 = sbr.rel (0) target = $region141
  $region140: #{model_forward.1} parent=0 // pred_region
    _
  $region141: #{model_forward.1} parent=0 // pred_fallthru
    _
  // Predicated region
  $region142: #{model_forward.1} parent=0 // pred_check
    _
  $region143: #{model_forward.1} parent=0 // pred_check_branch
    %4897 = sbr.rel (0) target = $region145
  $region144: #{model_forward.1} parent=0 // pred_region
    _
  $region145: #{model_forward.1} parent=0 // pred_fallthru
    _

</llo_original>
